<compile_context>
chip_gen: v7x
topology: tpu7x:2x2x1
jax: 0.10.0
libtpu: 0.0.40
codegen_flags: <defaults>
</compile_context>

<pallas_src>
import functools

import jax
import jax.numpy as jnp
import numpy as np
from jax.experimental import pallas as pl
from jax.experimental.pallas import tpu as pltpu

_LANES = 128


def _round_up(x, m):
    return ((x + m - 1) // m) * m


def _residual_conv_kernel(H, W, Cp, xpad_ref, w0_ref, b0_ref, w1_ref, b1_ref,
                          out_ref, y0pad_ref):
    # xpad_ref : (H+2, W+2, Cp)  spatially padded, channel-padded input (one batch element)
    # w0_ref/w1_ref : (9*Cp, Cp) im2col weight matrices, row = (kh*3+kw)*Cp + cin
    # b0_ref/b1_ref : (1, Cp)
    # out_ref  : (H, W, Cp)
    # y0pad_ref: (H+2, W+2, Cp) f32 scratch staging the padded conv0 output
    f32 = jnp.float32

    def im2col(ref):
        # Gather the 9 taps as (H*W, Cp) slabs read directly from the ref and concatenate
        # along lanes -> (H*W, 9*Cp).  With Cp a multiple of 128 each piece is a full lane
        # tile, so the concat is tile-aligned.  One MXU call with K = 9*Cp per conv.
        cols = []
        for kh in range(3):
            for kw in range(3):
                tap = ref[kh:kh + H, kw:kw + W, :].astype(f32)
                cols.append(tap.reshape(H * W, Cp))
        return jnp.concatenate(cols, axis=1)

    # ---- conv0 (3x3, stride 1, pad 1) + bias + ReLU : single im2col matmul ----
    acc0 = jnp.dot(im2col(xpad_ref), w0_ref[...], preferred_element_type=f32)
    acc0 = jnp.maximum(acc0 + b0_ref[...], 0.0).reshape(H, W, Cp)

    # ---- stage conv0 output into the padded scratch ----
    # Zero ONLY the constant 1-pixel border (unconditional => safe with per-core scratch),
    # write the interior directly; conv1 taps are read as ref slices below (no full reload).
    zrow = jnp.zeros((1, W + 2, Cp), f32)
    zcol = jnp.zeros((H, 1, Cp), f32)
    y0pad_ref[0:1, :, :] = zrow
    y0pad_ref[H + 1:H + 2, :, :] = zrow
    y0pad_ref[1:H + 1, 0:1, :] = zcol
    y0pad_ref[1:H + 1, W + 1:W + 2, :] = zcol
    y0pad_ref[1:H + 1, 1:W + 1, :] = acc0

    # ---- conv1 (3x3, stride 1, pad 1) + bias (no activation) ----
    acc1 = jnp.dot(im2col(y0pad_ref), w1_ref[...], preferred_element_type=f32)
    acc1 = acc1 + b1_ref[...]

    # ---- residual add + final ReLU ----
    res = xpad_ref[1:H + 1, 1:W + 1, :].astype(f32).reshape(H * W, Cp)
    out = jnp.maximum(res + acc1, 0.0)
    out_ref[...] = out.reshape(H, W, Cp).astype(out_ref.dtype)


def _prep_weight(w, C, Cp):
    # OIHW -> (kh, kw, Cin, Cout), zero-pad channels to Cp, flatten to (9*Cp, Cp).
    wt = jnp.transpose(w, (2, 3, 1, 0))
    wt = jnp.pad(wt, ((0, 0), (0, 0), (0, Cp - C), (0, Cp - C)))
    return wt.reshape(9 * Cp, Cp)


def residual_conv2d_layer(x_nchw, w0, b0, w1, b1):
    """ResidualConv2dLayer forward (activation='relu', bn=False, k=3, stride=1, pad=1, bias=True).

    x_nchw: (N, C, H, W) float32
    w0, w1: (C, C, 3, 3) float32 (PyTorch OIHW)
    b0, b1: (C,) float32
    returns: (N, C, H, W) float32
    """
    N, C, H, W = x_nchw.shape
    Cp = _round_up(C, _LANES)

    # NCHW -> NHWC.  (Ideally the surrounding model stays NHWC so these relayouts disappear.)
    x_nhwc = jnp.transpose(x_nchw, (0, 2, 3, 1))
    # Single pad op: spatial halo (+1 each side) AND lane-dense channel packing in one HBM pass.
    x_pad = jnp.pad(x_nhwc, ((0, 0), (1, 1), (1, 1), (0, Cp - C)))

    w0m = _prep_weight(w0, C, Cp)
    w1m = _prep_weight(w1, C, Cp)
    b0r = jnp.pad(b0, (0, Cp - C)).reshape(1, Cp)
    b1r = jnp.pad(b1, (0, Cp - C)).reshape(1, Cp)

    kernel = functools.partial(_residual_conv_kernel, H, W, Cp)

    out_nhwc = pl.pallas_call(
        kernel,
        out_shape=jax.ShapeDtypeStruct((N, H, W, Cp), x_nchw.dtype),
        grid_spec=pltpu.PrefetchScalarGridSpec(
            num_scalar_prefetch=0,
            grid=(N,),
            in_specs=[
                pl.BlockSpec((None, H + 2, W + 2, Cp), lambda n: (n, 0, 0, 0)),
                pl.BlockSpec((9 * Cp, Cp), lambda n: (0, 0)),
                pl.BlockSpec((1, Cp), lambda n: (0, 0)),
                pl.BlockSpec((9 * Cp, Cp), lambda n: (0, 0)),
                pl.BlockSpec((1, Cp), lambda n: (0, 0)),
            ],
            out_specs=pl.BlockSpec((None, H, W, Cp), lambda n: (n, 0, 0, 0)),
            scratch_shapes=[pltpu.VMEM((H + 2, W + 2, Cp), jnp.float32)],
        ),
        compiler_params=pltpu.CompilerParams(
            dimension_semantics=("parallel",),
            vmem_limit_bytes=64 * 1024 * 1024,
        ),
    )(x_pad, w0m, b0r, w1m, b1r)

    out_nhwc = out_nhwc[..., :C]                     # drop zero-padded channels (exactly zero)
    return jnp.transpose(out_nhwc, (0, 3, 1, 2))     # back to NCHW


def _reference(x_nchw, w0, b0, w1, b1):
    # Pure-JAX reference (NCHW / OIHW, same cross-correlation conv as PyTorch).
    dn = jax.lax.conv_dimension_numbers(x_nchw.shape, w0.shape, ('NCHW', 'OIHW', 'NCHW'))
    y = jax.lax.conv_general_dilated(x_nchw, w0, (1, 1), [(1, 1), (1, 1)], dimension_numbers=dn)
    y = jnp.maximum(y + b0[None, :, None, None], 0.0)
    z = jax.lax.conv_general_dilated(y, w1, (1, 1), [(1, 1), (1, 1)], dimension_numbers=dn)
    z = z + b1[None, :, None, None]
    return jnp.maximum(x_nchw + z, 0.0)


if __name__ == "__main__":
    N, C, H, W = 2, 4, 16, 16
    key = jax.random.PRNGKey(0)
    kx, kw0, kb0, kw1, kb1 = jax.random.split(key, 5)

    x = jax.random.normal(kx, (N, C, H, W), dtype=jnp.float32)
    # Deterministic synthetic parameters (shapes from nn.Conv2d(C, C, (3,3)) x2)
    w0 = jax.random.normal(kw0, (C, C, 3, 3), dtype=jnp.float32) * 0.1
    b0 = jax.random.normal(kb0, (C,), dtype=jnp.float32) * 0.1
    w1 = jax.random.normal(kw1, (C, C, 3, 3), dtype=jnp.float32) * 0.1
    b1 = jax.random.normal(kb1, (C,), dtype=jnp.float32) * 0.1

    out = jax.block_until_ready(residual_conv2d_layer(x, w0, b0, w1, b1))
    ref = jax.block_until_ready(_reference(x, w0, b0, w1, b1))
    np.testing.assert_allclose(np.asarray(out), np.asarray(ref), rtol=1e-5, atol=5e-5)

    print("KERNEL_OK")
</pallas_src>

<mosaic_0001>
module attributes {stable_mosaic.version = 11 : i64} {
  func.func @_residual_conv_kernel(%arg0: i32, %arg1: memref<1x18x18x128xf32, #tpu.memory_space<vmem>>, %arg2: memref<1152x128xf32, #tpu.memory_space<vmem>>, %arg3: memref<1x128xf32, #tpu.memory_space<vmem>>, %arg4: memref<1152x128xf32, #tpu.memory_space<vmem>>, %arg5: memref<1x128xf32, #tpu.memory_space<vmem>>, %arg6: memref<1x16x16x128xf32, #tpu.memory_space<vmem>>, %arg7: memref<18x18x128xf32, #tpu.memory_space<vmem>>) attributes {dimension_semantics = [#tpu.dimension_semantics<parallel>], iteration_bounds = array<i64: 2>, scalar_prefetch = 0 : i64, scratch_operands = 1 : i64, tpu.core_type = #tpu.core_type<tc>, window_params = [{transform_indices = @transform_0, window_bounds = array<i64: 1, 18, 18, 128>}, {pipeline_mode = #tpu.pipeline_mode<synchronous>, transform_indices = @transform_1, window_bounds = array<i64: 1152, 128>}, {pipeline_mode = #tpu.pipeline_mode<synchronous>, transform_indices = @transform_2, window_bounds = array<i64: 1, 128>}, {pipeline_mode = #tpu.pipeline_mode<synchronous>, transform_indices = @transform_3, window_bounds = array<i64: 1152, 128>}, {pipeline_mode = #tpu.pipeline_mode<synchronous>, transform_indices = @transform_4, window_bounds = array<i64: 1, 128>}, {transform_indices = @transform_5, window_bounds = array<i64: 1, 16, 16, 128>}]} {
    %c0 = arith.constant 0 : index
    %c0_0 = arith.constant 0 : index
    %c0_1 = arith.constant 0 : index
    %c0_2 = arith.constant 0 : index
    %0 = vector.load %arg1[%c0, %c0_0, %c0_1, %c0_2] : memref<1x18x18x128xf32, #tpu.memory_space<vmem>>, vector<1x16x16x128xf32>
    %1 = vector.shape_cast %0 : vector<1x16x16x128xf32> to vector<16x16x128xf32>
    %2 = vector.shape_cast %1 : vector<16x16x128xf32> to vector<256x128xf32>
    %c0_3 = arith.constant 0 : index
    %c0_4 = arith.constant 0 : index
    %c1 = arith.constant 1 : index
    %c0_5 = arith.constant 0 : index
    %3 = vector.load %arg1[%c0_3, %c0_4, %c1, %c0_5] : memref<1x18x18x128xf32, #tpu.memory_space<vmem>>, vector<1x16x16x128xf32>
    %4 = vector.shape_cast %3 : vector<1x16x16x128xf32> to vector<16x16x128xf32>
    %5 = vector.shape_cast %4 : vector<16x16x128xf32> to vector<256x128xf32>
    %c0_6 = arith.constant 0 : index
    %c0_7 = arith.constant 0 : index
    %c2 = arith.constant 2 : index
    %c0_8 = arith.constant 0 : index
    %6 = vector.load %arg1[%c0_6, %c0_7, %c2, %c0_8] : memref<1x18x18x128xf32, #tpu.memory_space<vmem>>, vector<1x16x16x128xf32>
    %7 = vector.shape_cast %6 : vector<1x16x16x128xf32> to vector<16x16x128xf32>
    %8 = vector.shape_cast %7 : vector<16x16x128xf32> to vector<256x128xf32>
    %c0_9 = arith.constant 0 : index
    %c1_10 = arith.constant 1 : index
    %c0_11 = arith.constant 0 : index
    %c0_12 = arith.constant 0 : index
    %9 = vector.load %arg1[%c0_9, %c1_10, %c0_11, %c0_12] : memref<1x18x18x128xf32, #tpu.memory_space<vmem>>, vector<1x16x16x128xf32>
    %10 = vector.shape_cast %9 : vector<1x16x16x128xf32> to vector<16x16x128xf32>
    %11 = vector.shape_cast %10 : vector<16x16x128xf32> to vector<256x128xf32>
    %c0_13 = arith.constant 0 : index
    %c1_14 = arith.constant 1 : index
    %c1_15 = arith.constant 1 : index
    %c0_16 = arith.constant 0 : index
    %12 = vector.load %arg1[%c0_13, %c1_14, %c1_15, %c0_16] : memref<1x18x18x128xf32, #tpu.memory_space<vmem>>, vector<1x16x16x128xf32>
    %13 = vector.shape_cast %12 : vector<1x16x16x128xf32> to vector<16x16x128xf32>
    %14 = vector.shape_cast %13 : vector<16x16x128xf32> to vector<256x128xf32>
    %c0_17 = arith.constant 0 : index
    %c1_18 = arith.constant 1 : index
    %c2_19 = arith.constant 2 : index
    %c0_20 = arith.constant 0 : index
    %15 = vector.load %arg1[%c0_17, %c1_18, %c2_19, %c0_20] : memref<1x18x18x128xf32, #tpu.memory_space<vmem>>, vector<1x16x16x128xf32>
    %16 = vector.shape_cast %15 : vector<1x16x16x128xf32> to vector<16x16x128xf32>
    %17 = vector.shape_cast %16 : vector<16x16x128xf32> to vector<256x128xf32>
    %c0_21 = arith.constant 0 : index
    %c2_22 = arith.constant 2 : index
    %c0_23 = arith.constant 0 : index
    %c0_24 = arith.constant 0 : index
    %18 = vector.load %arg1[%c0_21, %c2_22, %c0_23, %c0_24] : memref<1x18x18x128xf32, #tpu.memory_space<vmem>>, vector<1x16x16x128xf32>
    %19 = vector.shape_cast %18 : vector<1x16x16x128xf32> to vector<16x16x128xf32>
    %20 = vector.shape_cast %19 : vector<16x16x128xf32> to vector<256x128xf32>
    %c0_25 = arith.constant 0 : index
    %c2_26 = arith.constant 2 : index
    %c1_27 = arith.constant 1 : index
    %c0_28 = arith.constant 0 : index
    %21 = vector.load %arg1[%c0_25, %c2_26, %c1_27, %c0_28] : memref<1x18x18x128xf32, #tpu.memory_space<vmem>>, vector<1x16x16x128xf32>
    %22 = vector.shape_cast %21 : vector<1x16x16x128xf32> to vector<16x16x128xf32>
    %23 = vector.shape_cast %22 : vector<16x16x128xf32> to vector<256x128xf32>
    %c0_29 = arith.constant 0 : index
    %c2_30 = arith.constant 2 : index
    %c2_31 = arith.constant 2 : index
    %c0_32 = arith.constant 0 : index
    %24 = vector.load %arg1[%c0_29, %c2_30, %c2_31, %c0_32] : memref<1x18x18x128xf32, #tpu.memory_space<vmem>>, vector<1x16x16x128xf32>
    %25 = vector.shape_cast %24 : vector<1x16x16x128xf32> to vector<16x16x128xf32>
    %26 = vector.shape_cast %25 : vector<16x16x128xf32> to vector<256x128xf32>
    %27 = tpu.concatenate %2, %5, %8, %11, %14, %17, %20, %23, %26 in 1 : vector<256x128xf32>, vector<256x128xf32>, vector<256x128xf32>, vector<256x128xf32>, vector<256x128xf32>, vector<256x128xf32>, vector<256x128xf32>, vector<256x128xf32>, vector<256x128xf32> -> vector<256x1152xf32>
    %c0_33 = arith.constant 0 : index
    %c0_34 = arith.constant 0 : index
    %28 = vector.load %arg2[%c0_33, %c0_34] : memref<1152x128xf32, #tpu.memory_space<vmem>>, vector<1152x128xf32>
    %cst = arith.constant dense<0.000000e+00> : vector<256x128xf32>
    %29 = tpu.matmul %27, %28, %cst {dimension_numbers = #tpu.dot_dimension_numbers<[1], [0], [0], [1], [0, 0, 1, 1], [], []>} : vector<256x1152xf32>, vector<1152x128xf32>, vector<256x128xf32> -> vector<256x128xf32>
    %c0_35 = arith.constant 0 : index
    %c0_36 = arith.constant 0 : index
    %30 = vector.load %arg3[%c0_35, %c0_36] : memref<1x128xf32, #tpu.memory_space<vmem>>, vector<1x128xf32>
    %31 = vector.broadcast %30 : vector<1x128xf32> to vector<256x128xf32>
    %32 = arith.addf %29, %31 : vector<256x128xf32>
    %cst_37 = arith.constant 0.000000e+00 : f32
    %33 = vector.broadcast %cst_37 : f32 to vector<256x128xf32>
    %34 = arith.maximumf %32, %33 : vector<256x128xf32>
    %35 = vector.shape_cast %34 : vector<256x128xf32> to vector<16x16x128xf32>
    %cst_38 = arith.constant 0.000000e+00 : f32
    %36 = vector.broadcast %cst_38 : f32 to vector<1x18x128xf32>
    %cst_39 = arith.constant 0.000000e+00 : f32
    %37 = vector.broadcast %cst_39 : f32 to vector<16x1x128xf32>
    %c0_40 = arith.constant 0 : index
    %c0_41 = arith.constant 0 : index
    %c0_42 = arith.constant 0 : index
    %38 = vector.load %arg7[%c0_40, %c0_41, %c0_42] : memref<18x18x128xf32, #tpu.memory_space<vmem>>, vector<1x18x128xf32>
    tpu.vector_store %arg7[%c0_40, %c0_41, %c0_42], %36 {strides = array<i32>} : memref<18x18x128xf32, #tpu.memory_space<vmem>>, vector<1x18x128xf32>,
    %c17 = arith.constant 17 : index
    %c0_43 = arith.constant 0 : index
    %c0_44 = arith.constant 0 : index
    %39 = vector.load %arg7[%c17, %c0_43, %c0_44] : memref<18x18x128xf32, #tpu.memory_space<vmem>>, vector<1x18x128xf32>
    tpu.vector_store %arg7[%c17, %c0_43, %c0_44], %36 {strides = array<i32>} : memref<18x18x128xf32, #tpu.memory_space<vmem>>, vector<1x18x128xf32>,
    %c1_45 = arith.constant 1 : index
    %c0_46 = arith.constant 0 : index
    %c0_47 = arith.constant 0 : index
    %40 = vector.load %arg7[%c1_45, %c0_46, %c0_47] : memref<18x18x128xf32, #tpu.memory_space<vmem>>, vector<16x1x128xf32>
    tpu.vector_store %arg7[%c1_45, %c0_46, %c0_47], %37 {strides = array<i32>} : memref<18x18x128xf32, #tpu.memory_space<vmem>>, vector<16x1x128xf32>,
    %c1_48 = arith.constant 1 : index
    %c17_49 = arith.constant 17 : index
    %c0_50 = arith.constant 0 : index
    %41 = vector.load %arg7[%c1_48, %c17_49, %c0_50] : memref<18x18x128xf32, #tpu.memory_space<vmem>>, vector<16x1x128xf32>
    tpu.vector_store %arg7[%c1_48, %c17_49, %c0_50], %37 {strides = array<i32>} : memref<18x18x128xf32, #tpu.memory_space<vmem>>, vector<16x1x128xf32>,
    %c1_51 = arith.constant 1 : index
    %c1_52 = arith.constant 1 : index
    %c0_53 = arith.constant 0 : index
    %42 = vector.load %arg7[%c1_51, %c1_52, %c0_53] : memref<18x18x128xf32, #tpu.memory_space<vmem>>, vector<16x16x128xf32>
    tpu.vector_store %arg7[%c1_51, %c1_52, %c0_53], %35 {strides = array<i32>} : memref<18x18x128xf32, #tpu.memory_space<vmem>>, vector<16x16x128xf32>,
    %c0_54 = arith.constant 0 : index
    %c0_55 = arith.constant 0 : index
    %c0_56 = arith.constant 0 : index
    %43 = vector.load %arg7[%c0_54, %c0_55, %c0_56] : memref<18x18x128xf32, #tpu.memory_space<vmem>>, vector<16x16x128xf32>
    %44 = vector.shape_cast %43 : vector<16x16x128xf32> to vector<256x128xf32>
    %c0_57 = arith.constant 0 : index
    %c1_58 = arith.constant 1 : index
    %c0_59 = arith.constant 0 : index
    %45 = vector.load %arg7[%c0_57, %c1_58, %c0_59] : memref<18x18x128xf32, #tpu.memory_space<vmem>>, vector<16x16x128xf32>
    %46 = vector.shape_cast %45 : vector<16x16x128xf32> to vector<256x128xf32>
    %c0_60 = arith.constant 0 : index
    %c2_61 = arith.constant 2 : index
    %c0_62 = arith.constant 0 : index
    %47 = vector.load %arg7[%c0_60, %c2_61, %c0_62] : memref<18x18x128xf32, #tpu.memory_space<vmem>>, vector<16x16x128xf32>
    %48 = vector.shape_cast %47 : vector<16x16x128xf32> to vector<256x128xf32>
    %c1_63 = arith.constant 1 : index
    %c0_64 = arith.constant 0 : index
    %c0_65 = arith.constant 0 : index
    %49 = vector.load %arg7[%c1_63, %c0_64, %c0_65] : memref<18x18x128xf32, #tpu.memory_space<vmem>>, vector<16x16x128xf32>
    %50 = vector.shape_cast %49 : vector<16x16x128xf32> to vector<256x128xf32>
    %c1_66 = arith.constant 1 : index
    %c1_67 = arith.constant 1 : index
    %c0_68 = arith.constant 0 : index
    %51 = vector.load %arg7[%c1_66, %c1_67, %c0_68] : memref<18x18x128xf32, #tpu.memory_space<vmem>>, vector<16x16x128xf32>
    %52 = vector.shape_cast %51 : vector<16x16x128xf32> to vector<256x128xf32>
    %c1_69 = arith.constant 1 : index
    %c2_70 = arith.constant 2 : index
    %c0_71 = arith.constant 0 : index
    %53 = vector.load %arg7[%c1_69, %c2_70, %c0_71] : memref<18x18x128xf32, #tpu.memory_space<vmem>>, vector<16x16x128xf32>
    %54 = vector.shape_cast %53 : vector<16x16x128xf32> to vector<256x128xf32>
    %c2_72 = arith.constant 2 : index
    %c0_73 = arith.constant 0 : index
    %c0_74 = arith.constant 0 : index
    %55 = vector.load %arg7[%c2_72, %c0_73, %c0_74] : memref<18x18x128xf32, #tpu.memory_space<vmem>>, vector<16x16x128xf32>
    %56 = vector.shape_cast %55 : vector<16x16x128xf32> to vector<256x128xf32>
    %c2_75 = arith.constant 2 : index
    %c1_76 = arith.constant 1 : index
    %c0_77 = arith.constant 0 : index
    %57 = vector.load %arg7[%c2_75, %c1_76, %c0_77] : memref<18x18x128xf32, #tpu.memory_space<vmem>>, vector<16x16x128xf32>
    %58 = vector.shape_cast %57 : vector<16x16x128xf32> to vector<256x128xf32>
    %c2_78 = arith.constant 2 : index
    %c2_79 = arith.constant 2 : index
    %c0_80 = arith.constant 0 : index
    %59 = vector.load %arg7[%c2_78, %c2_79, %c0_80] : memref<18x18x128xf32, #tpu.memory_space<vmem>>, vector<16x16x128xf32>
    %60 = vector.shape_cast %59 : vector<16x16x128xf32> to vector<256x128xf32>
    %61 = tpu.concatenate %44, %46, %48, %50, %52, %54, %56, %58, %60 in 1 : vector<256x128xf32>, vector<256x128xf32>, vector<256x128xf32>, vector<256x128xf32>, vector<256x128xf32>, vector<256x128xf32>, vector<256x128xf32>, vector<256x128xf32>, vector<256x128xf32> -> vector<256x1152xf32>
    %c0_81 = arith.constant 0 : index
    %c0_82 = arith.constant 0 : index
    %62 = vector.load %arg4[%c0_81, %c0_82] : memref<1152x128xf32, #tpu.memory_space<vmem>>, vector<1152x128xf32>
    %cst_83 = arith.constant dense<0.000000e+00> : vector<256x128xf32>
    %63 = tpu.matmul %61, %62, %cst_83 {dimension_numbers = #tpu.dot_dimension_numbers<[1], [0], [0], [1], [0, 0, 1, 1], [], []>} : vector<256x1152xf32>, vector<1152x128xf32>, vector<256x128xf32> -> vector<256x128xf32>
    %c0_84 = arith.constant 0 : index
    %c0_85 = arith.constant 0 : index
    %64 = vector.load %arg5[%c0_84, %c0_85] : memref<1x128xf32, #tpu.memory_space<vmem>>, vector<1x128xf32>
    %65 = vector.broadcast %64 : vector<1x128xf32> to vector<256x128xf32>
    %66 = arith.addf %63, %65 : vector<256x128xf32>
    %c0_86 = arith.constant 0 : index
    %c1_87 = arith.constant 1 : index
    %c1_88 = arith.constant 1 : index
    %c0_89 = arith.constant 0 : index
    %67 = vector.load %arg1[%c0_86, %c1_87, %c1_88, %c0_89] : memref<1x18x18x128xf32, #tpu.memory_space<vmem>>, vector<1x16x16x128xf32>
    %68 = vector.shape_cast %67 : vector<1x16x16x128xf32> to vector<16x16x128xf32>
    %69 = vector.shape_cast %68 : vector<16x16x128xf32> to vector<256x128xf32>
    %70 = arith.addf %69, %66 : vector<256x128xf32>
    %cst_90 = arith.constant 0.000000e+00 : f32
    %71 = vector.broadcast %cst_90 : f32 to vector<256x128xf32>
    %72 = arith.maximumf %70, %71 : vector<256x128xf32>
    %73 = vector.shape_cast %72 : vector<256x128xf32> to vector<16x16x128xf32>
    %c0_91 = arith.constant 0 : index
    %c0_92 = arith.constant 0 : index
    %c0_93 = arith.constant 0 : index
    %c0_94 = arith.constant 0 : index
    %74 = vector.load %arg6[%c0_91, %c0_92, %c0_93, %c0_94] : memref<1x16x16x128xf32, #tpu.memory_space<vmem>>, vector<1x16x16x128xf32>
    %75 = vector.shape_cast %74 : vector<1x16x16x128xf32> to vector<16x16x128xf32>
    %76 = vector.shape_cast %73 : vector<16x16x128xf32> to vector<1x16x16x128xf32>
    tpu.vector_store %arg6[%c0_91, %c0_92, %c0_93, %c0_94], %76 {strides = array<i32>} : memref<1x16x16x128xf32, #tpu.memory_space<vmem>>, vector<1x16x16x128xf32>,
    return
  }
  func.func @transform_0(%arg0: i32) -> (i32, i32, i32, i32) {
    %c0_i32 = arith.constant 0 : i32
    %c0_i32_0 = arith.constant 0 : i32
    %c0_i32_1 = arith.constant 0 : i32
    %c0_i32_2 = arith.constant 0 : i32
    return %arg0, %c0_i32, %c0_i32_0, %c0_i32_1 : i32, i32, i32, i32
  }
  func.func @transform_1(%arg0: i32) -> (i32, i32) {
    %c0_i32 = arith.constant 0 : i32
    %c0_i32_0 = arith.constant 0 : i32
    %c0_i32_1 = arith.constant 0 : i32
    return %c0_i32, %c0_i32_0 : i32, i32
  }
  func.func @transform_2(%arg0: i32) -> (i32, i32) {
    %c0_i32 = arith.constant 0 : i32
    %c0_i32_0 = arith.constant 0 : i32
    %c0_i32_1 = arith.constant 0 : i32
    return %c0_i32, %c0_i32_0 : i32, i32
  }
  func.func @transform_3(%arg0: i32) -> (i32, i32) {
    %c0_i32 = arith.constant 0 : i32
    %c0_i32_0 = arith.constant 0 : i32
    %c0_i32_1 = arith.constant 0 : i32
    return %c0_i32, %c0_i32_0 : i32, i32
  }
  func.func @transform_4(%arg0: i32) -> (i32, i32) {
    %c0_i32 = arith.constant 0 : i32
    %c0_i32_0 = arith.constant 0 : i32
    %c0_i32_1 = arith.constant 0 : i32
    return %c0_i32, %c0_i32_0 : i32, i32
  }
  func.func @transform_5(%arg0: i32) -> (i32, i32, i32, i32) {
    %c0_i32 = arith.constant 0 : i32
    %c0_i32_0 = arith.constant 0 : i32
    %c0_i32_1 = arith.constant 0 : i32
    %c0_i32_2 = arith.constant 0 : i32
    return %arg0, %c0_i32, %c0_i32_0, %c0_i32_1 : i32, i32, i32, i32
  }
}

</mosaic_0001>

<llo_original>
// kernel: tpu_custom_call.1
$region0: #{tpu_custom_call.1}
  #allocation0 [shape = 'u32[]', space=smem, size = 0x4, offset = 0x4, fixed_abs, tag = 'smem constant byte address 0x4 - core index']
  #allocation1 [shape = 'u32[144,128]{1,0:T(1,128)}', space=vmem, size = 0x12000, scoped, tag = 'internal scratch']
  #allocation2 [shape = 'f32[18,18,128]{2,1,0:T(8,128)}', space=vmem, size = 0x36000, scoped, tag = 'scratch operand']
  %s0 = inlined_call_operand.hbm [shape: f32[2,18,18,128], index: 0, kind: input, shape index: {}]
  %s1 = inlined_call_operand.hbm [shape: f32[1152,128], index: 1, kind: input, shape index: {}]
  %s2 = inlined_call_operand.hbm [shape: f32[1,128], index: 2, kind: input, shape index: {}]
  %s3 = inlined_call_operand.hbm [shape: f32[1152,128], index: 3, kind: input, shape index: {}]
  %s4 = inlined_call_operand.hbm [shape: f32[1,128], index: 4, kind: input, shape index: {}]
  %s5 = inlined_call_operand.hbm [shape: f32[2,16,16,128], index: 5, kind: output, shape index: {}]
  %s6 = sld [smem:[#allocation0]]
  $region73: #{tpu_custom_call.1} parent=0
    _
  %s8 = ssub.s32 1, %s6
  %s9 = scalar_select 0, %s8, %s6
  $region1: #{tpu_custom_call.1} parent=0
    #allocation3 [shape = 'u8[442368]{0}', space=vmem, size = 0x6c000, scoped, tag = 'input window, operand 0']
    #allocation4 [shape = 's32[2]{0}', space=sflag, size = 0x8, scoped, tag = 'scoped memory for tpu_custom_call.1']
    #allocation5 [shape = 's32[2]{0}', space=sflag, size = 0x8, scoped, tag = 'scoped memory for tpu_custom_call.1']
    #allocation6 [shape = 'u8[589824]{0}', space=vmem, size = 0x90000, scoped, tag = 'input window, operand 1, single buffered']
    #allocation7 [shape = 's32[1]{0}', space=sflag, size = 0x4, scoped, tag = 'scoped memory for tpu_custom_call.1']
    #allocation8 [shape = 'u8[512]{0}', space=vmem, size = 0x400, scoped, tag = 'input window, operand 2, single buffered']
    #allocation9 [shape = 'u8[589824]{0}', space=vmem, size = 0x90000, scoped, tag = 'input window, operand 3, single buffered']
    #allocation10 [shape = 's32[1]{0}', space=sflag, size = 0x4, scoped, tag = 'scoped memory for tpu_custom_call.1']
    #allocation11 [shape = 'u8[512]{0}', space=vmem, size = 0x400, scoped, tag = 'input window, operand 4, single buffered']
    #allocation12 [shape = 'u8[262144]{0}', space=vmem, size = 0x40000, scoped, tag = 'output window, operand 0']
    %10 = vsyncpa [#allocation4], 0
    %s11 = scalar_lea.sflag [#allocation4], 1
    %12 = vsyncpa %s11, 0
    %13 = vsyncpa [#allocation7], 0
    %14 = vsyncpa [#allocation10], 0
    %15 = vsyncpa [#allocation5], 0
    %s16 = scalar_lea.sflag [#allocation5], 1
    %17 = vsyncpa %s16, 0
    loop: start=0, step=1, limit=4
    $region2: #{tpu_custom_call.1} parent=1 // loop_pre_header
      _
    $region3: #{tpu_custom_call.1} parent=1 // loop_header
      %s19 = sphi 0, %s23
      %p20 = scmp.ge.s32.totalorder %s19, 4
      %s29 = sphi 0, %s31
      %s32 = sphi 0, %s29
      %s33 = sphi 0, %s32
      %s49 = sphi 0, %s33
      %s53 = sphi 0, %s53
      %s55 = sphi 0, %s53
      %s56 = sphi 0, %s55
      %s70 = sphi 0, %s56
      %s74 = sphi 0, %s74
      %s76 = sphi 0, %s74
      %s77 = sphi 0, %s76
      %s91 = sphi 0, %s77
      %s95 = sphi 0, %s95
      %s97 = sphi 0, %s95
      %s98 = sphi 0, %s97
      %s112 = sphi 0, %s98
      %s116 = sphi 0, %s116
      %s118 = sphi 0, %s116
      %s119 = sphi 0, %s118
      %s133 = sphi 0, %s119
      %s139 = sphi 0, %s141
      %s142 = sphi 0, %s139
      %s143 = sphi 0, %s142
      %s159 = sphi 0, %s143
    $region4: #{tpu_custom_call.1} parent=1 // loop_header_branch
      %22 = sbr.rel (%p20) target = $region8
    $region5: #{tpu_custom_call.1} parent=1 // loop_body
      %s24 = ssub.s32 %s19, 1
      %s25 = ssub.s32 %s19, 2
      %s26 = sadd.s32 %s19, 1
      %s27 = ssub.s32 %s19, %s26
      %p28 = scmp.eq.s32.totalorder %s27, 0
      %s30 = sadd.s32 %s29, 1
      %s31 = scalar_select %p28, %s29, %s30
      %p34 = pneg %p28
      %p35 = scmp.eq.s32.totalorder %s19, 1
      %p36 = por %p34, %p35
      %p37 = scmp.ne.s32.totalorder %s29, %s32
      %p38 = scmp.eq.s32.totalorder %s19, 0
      %p39 = por %p37, %p38
      %p40 = scmp.ne.s32.totalorder %s29, %s32
      %p41 = scmp.eq.s32.totalorder %s24, 1
      %p42 = por %p40, %p41
      %p43 = scmp.ne.s32.totalorder %s32, %s33
      %p44 = scmp.eq.s32.totalorder %s24, 0
      %p45 = por %p43, %p44
      %p46 = scmp.ne.s32.totalorder %s32, %s33
      %p47 = scmp.eq.s32.totalorder %s25, 1
      %p48 = por %p46, %p47
      %p50 = scmp.ne.s32.totalorder %s33, %s49
      %p51 = scmp.eq.s32.totalorder %s25, 0
      %p52 = por %p50, %p51
      %s54 = sadd.s32 %s53, 1
      %p57 = scmp.eq.s32.totalorder %s19, 1
      %p58 = scmp.ne.s32.totalorder %s53, %s55
      %p59 = scmp.eq.s32.totalorder %s19, 0
      %p60 = por %p58, %p59
      %p61 = scmp.ne.s32.totalorder %s53, %s55
      %p62 = scmp.eq.s32.totalorder %s24, 1
      %p63 = por %p61, %p62
      %p64 = scmp.ne.s32.totalorder %s55, %s56
      %p65 = scmp.eq.s32.totalorder %s24, 0
      %p66 = por %p64, %p65
      %p67 = scmp.ne.s32.totalorder %s55, %s56
      %p68 = scmp.eq.s32.totalorder %s25, 1
      %p69 = por %p67, %p68
      %p71 = scmp.ne.s32.totalorder %s56, %s70
      %p72 = scmp.eq.s32.totalorder %s25, 0
      %p73 = por %p71, %p72
      %s75 = sadd.s32 %s74, 1
      %p78 = scmp.eq.s32.totalorder %s19, 1
      %p79 = scmp.ne.s32.totalorder %s74, %s76
      %p80 = scmp.eq.s32.totalorder %s19, 0
      %p81 = por %p79, %p80
      %p82 = scmp.ne.s32.totalorder %s74, %s76
      %p83 = scmp.eq.s32.totalorder %s24, 1
      %p84 = por %p82, %p83
      %p85 = scmp.ne.s32.totalorder %s76, %s77
      %p86 = scmp.eq.s32.totalorder %s24, 0
      %p87 = por %p85, %p86
      %p88 = scmp.ne.s32.totalorder %s76, %s77
      %p89 = scmp.eq.s32.totalorder %s25, 1
      %p90 = por %p88, %p89
      %p92 = scmp.ne.s32.totalorder %s77, %s91
      %p93 = scmp.eq.s32.totalorder %s25, 0
      %p94 = por %p92, %p93
      %s96 = sadd.s32 %s95, 1
      %p99 = scmp.eq.s32.totalorder %s19, 1
      %p100 = scmp.ne.s32.totalorder %s95, %s97
      %p101 = scmp.eq.s32.totalorder %s19, 0
      %p102 = por %p100, %p101
      %p103 = scmp.ne.s32.totalorder %s95, %s97
      %p104 = scmp.eq.s32.totalorder %s24, 1
      %p105 = por %p103, %p104
      %p106 = scmp.ne.s32.totalorder %s97, %s98
      %p107 = scmp.eq.s32.totalorder %s24, 0
      %p108 = por %p106, %p107
      %p109 = scmp.ne.s32.totalorder %s97, %s98
      %p110 = scmp.eq.s32.totalorder %s25, 1
      %p111 = por %p109, %p110
      %p113 = scmp.ne.s32.totalorder %s98, %s112
      %p114 = scmp.eq.s32.totalorder %s25, 0
      %p115 = por %p113, %p114
      %s117 = sadd.s32 %s116, 1
      %p120 = scmp.eq.s32.totalorder %s19, 1
      %p121 = scmp.ne.s32.totalorder %s116, %s118
      %p122 = scmp.eq.s32.totalorder %s19, 0
      %p123 = por %p121, %p122
      %p124 = scmp.ne.s32.totalorder %s116, %s118
      %p125 = scmp.eq.s32.totalorder %s24, 1
      %p126 = por %p124, %p125
      %p127 = scmp.ne.s32.totalorder %s118, %s119
      %p128 = scmp.eq.s32.totalorder %s24, 0
      %p129 = por %p127, %p128
      %p130 = scmp.ne.s32.totalorder %s118, %s119
      %p131 = scmp.eq.s32.totalorder %s25, 1
      %p132 = por %p130, %p131
      %p134 = scmp.ne.s32.totalorder %s119, %s133
      %p135 = scmp.eq.s32.totalorder %s25, 0
      %p136 = por %p134, %p135
      %s137 = ssub.s32 %s19, %s26
      %p138 = scmp.eq.s32.totalorder %s137, 0
      %s140 = sadd.s32 %s139, 1
      %s141 = scalar_select %p138, %s139, %s140
      %p144 = pneg %p138
      %p145 = scmp.eq.s32.totalorder %s19, 1
      %p146 = por %p144, %p145
      %p147 = scmp.ne.s32.totalorder %s139, %s142
      %p148 = scmp.eq.s32.totalorder %s19, 0
      %p149 = por %p147, %p148
      %p150 = scmp.ne.s32.totalorder %s139, %s142
      %p151 = scmp.eq.s32.totalorder %s24, 1
      %p152 = por %p150, %p151
      %p153 = scmp.ne.s32.totalorder %s142, %s143
      %p154 = scmp.eq.s32.totalorder %s24, 0
      %p155 = por %p153, %p154
      %p156 = scmp.ne.s32.totalorder %s142, %s143
      %p157 = scmp.eq.s32.totalorder %s25, 1
      %p158 = por %p156, %p157
      %p160 = scmp.ne.s32.totalorder %s143, %s159
      %p161 = scmp.eq.s32.totalorder %s25, 0
      %p162 = por %p160, %p161
      %p163 = scmp.le.s32.totalorder 1, %s19
      %p164 = scmp.lt.s32.totalorder %s19, 3
      %p165 = pnand %p163, %p164
      %p166 = pneg %p165
      // Predicated region
      $region9: #{tpu_custom_call.1} parent=5 // pred_check
        _
      $region10: #{tpu_custom_call.1} parent=5 // pred_check_branch
        %168 = sbr.rel (%p165) target = $region12
      $region11: #{tpu_custom_call.1} parent=5 // pred_region
        %s169 = ssub.s32 %s19, 1
        // Predicated region
        $region13: #{tpu_custom_call.1} parent=11 // pred_check
          %p170 = pneg %p66
        $region14: #{tpu_custom_call.1} parent=11 // pred_check_branch
          %172 = sbr.rel (%p170) target = $region16
        $region15: #{tpu_custom_call.1} parent=11 // pred_region
          %s174 = ssub.s32 18432, 18432
          %175 = vsyncadd [#allocation7], %s174
          %s176 = sshll.u32 [#allocation6], 4
          %s177 = int_to_ptr.vmem [resolvable:$true] %s176
          %182 = dma.hbm_to_vmem [thread:$0]  %s1, 18432, %s177, [#allocation7], 128, 128, 8
        $region16: #{tpu_custom_call.1} parent=11 // pred_fallthru
          _
        // Predicated region
        $region17: #{tpu_custom_call.1} parent=11 // pred_check
          %p183 = pneg %p87
        $region18: #{tpu_custom_call.1} parent=11 // pred_check_branch
          %185 = sbr.rel (%p183) target = $region20
        $region19: #{tpu_custom_call.1} parent=11 // pred_region
          %s187 = ssub.s32 16, 16
          %188 = vsyncadd [#allocation7], %s187
          %s190 = sshll.u32 [#allocation8], 4
          %s191 = int_to_ptr.vmem [resolvable:$true] %s190
          %193 = dma.hbm_to_vmem [thread:$0]  %s2, 16, %s191, [#allocation7]
        $region20: #{tpu_custom_call.1} parent=11 // pred_fallthru
          _
        // Predicated region
        $region21: #{tpu_custom_call.1} parent=11 // pred_check
          %p194 = pneg %p108
        $region22: #{tpu_custom_call.1} parent=11 // pred_check_branch
          %196 = sbr.rel (%p194) target = $region24
        $region23: #{tpu_custom_call.1} parent=11 // pred_region
          %s198 = ssub.s32 18432, 18432
          %199 = vsyncadd [#allocation10], %s198
          %s200 = sshll.u32 [#allocation9], 4
          %s201 = int_to_ptr.vmem [resolvable:$true] %s200
          %206 = dma.hbm_to_vmem [thread:$0]  %s3, 18432, %s201, [#allocation10], 128, 128, 8
        $region24: #{tpu_custom_call.1} parent=11 // pred_fallthru
          _
        // Predicated region
        $region25: #{tpu_custom_call.1} parent=11 // pred_check
          %p207 = pneg %p129
        $region26: #{tpu_custom_call.1} parent=11 // pred_check_branch
          %209 = sbr.rel (%p207) target = $region28
        $region27: #{tpu_custom_call.1} parent=11 // pred_region
          %s211 = ssub.s32 16, 16
          %212 = vsyncadd [#allocation10], %s211
          %s214 = sshll.u32 [#allocation11], 4
          %s215 = int_to_ptr.vmem [resolvable:$true] %s214
          %217 = dma.hbm_to_vmem [thread:$0]  %s4, 16, %s215, [#allocation10]
        $region28: #{tpu_custom_call.1} parent=11 // pred_fallthru
          _
      $region12: #{tpu_custom_call.1} parent=5 // pred_fallthru
        _
      %p218 = scmp.lt.s32.totalorder %s19, 2
      // Predicated region
      $region29: #{tpu_custom_call.1} parent=5 // pred_check
        %p219 = pneg %p218
      $region30: #{tpu_custom_call.1} parent=5 // pred_check_branch
        %221 = sbr.rel (%p219) target = $region32
      $region31: #{tpu_custom_call.1} parent=5 // pred_region
        // Predicated region
        $region33: #{tpu_custom_call.1} parent=31 // pred_check
          %p222 = pneg %p39
        $region34: #{tpu_custom_call.1} parent=31 // pred_check_branch
          %224 = sbr.rel (%p222) target = $region36
        $region35: #{tpu_custom_call.1} parent=31 // pred_region
          %s225 = sand.u32 %s29, 1
          %s226 = scalar_lea.sflag [#allocation4], %s225
          %s227 = sand.u32 %s29, 1
          %s228 = smul.addr %s227, 432
          %s229 = scalar_lea.vmem [#allocation3], %s228
          %s231 = ssub.s32 6912, 6912
          %232 = vsyncadd %s226, %s231
          %s233 = smul.addr %s19, 54
          %s234 = smul.addr %s233, 128
          %s235 = scalar_lea.hbm %s0, %s234
          %s236 = sshll.u32 %s229, 4
          %s237 = int_to_ptr.vmem [resolvable:$true] %s236
          %242 = dma.hbm_to_vmem [thread:$0]  %s235, 6912, %s237, %s226, 128, 128, 8
        $region36: #{tpu_custom_call.1} parent=31 // pred_fallthru
          _
      $region32: #{tpu_custom_call.1} parent=5 // pred_fallthru
        _
      %p243 = scmp.le.s32.totalorder 1, %s19
      %p244 = scmp.lt.s32.totalorder %s19, 3
      %p245 = pnand %p243, %p244
      %p246 = pneg %p245
      // Predicated region
      $region37: #{tpu_custom_call.1} parent=5 // pred_check
        _
      $region38: #{tpu_custom_call.1} parent=5 // pred_check_branch
        %248 = sbr.rel (%p245) target = $region40
      $region39: #{tpu_custom_call.1} parent=5 // pred_region
        %s249 = ssub.s32 %s19, 1
        %s250 = sand.u32 %s32, 1
        %s251 = scalar_lea.sflag [#allocation4], %s250
        %s252 = sand.u32 %s32, 1
        %s253 = smul.addr %s252, 432
        %s254 = scalar_lea.vmem [#allocation3], %s253
        // Predicated region
        $region41: #{tpu_custom_call.1} parent=39 // pred_check
          %p255 = pneg %p45
        $region42: #{tpu_custom_call.1} parent=39 // pred_check_branch
          %257 = sbr.rel (%p255) target = $region44
        $region43: #{tpu_custom_call.1} parent=39 // pred_region
          %258 = dma.done %s251, 6912
        $region44: #{tpu_custom_call.1} parent=39 // pred_fallthru
          _
        // Predicated region
        $region45: #{tpu_custom_call.1} parent=39 // pred_check
          %p259 = pneg %p66
        $region46: #{tpu_custom_call.1} parent=39 // pred_check_branch
          %261 = sbr.rel (%p259) target = $region48
        $region47: #{tpu_custom_call.1} parent=39 // pred_region
          %262 = dma.done [#allocation7], 18432
        $region48: #{tpu_custom_call.1} parent=39 // pred_fallthru
          _
        // Predicated region
        $region49: #{tpu_custom_call.1} parent=39 // pred_check
          %p263 = pneg %p87
        $region50: #{tpu_custom_call.1} parent=39 // pred_check_branch
          %265 = sbr.rel (%p263) target = $region52
        $region51: #{tpu_custom_call.1} parent=39 // pred_region
          %266 = dma.done [#allocation7], 16
        $region52: #{tpu_custom_call.1} parent=39 // pred_fallthru
          _
        // Predicated region
        $region53: #{tpu_custom_call.1} parent=39 // pred_check
          %p267 = pneg %p108
        $region54: #{tpu_custom_call.1} parent=39 // pred_check_branch
          %269 = sbr.rel (%p267) target = $region56
        $region55: #{tpu_custom_call.1} parent=39 // pred_region
          %270 = dma.done [#allocation10], 18432
        $region56: #{tpu_custom_call.1} parent=39 // pred_fallthru
          _
        // Predicated region
        $region57: #{tpu_custom_call.1} parent=39 // pred_check
          %p271 = pneg %p129
        $region58: #{tpu_custom_call.1} parent=39 // pred_check_branch
          %273 = sbr.rel (%p271) target = $region60
        $region59: #{tpu_custom_call.1} parent=39 // pred_region
          %274 = dma.done [#allocation10], 16
        $region60: #{tpu_custom_call.1} parent=39 // pred_fallthru
          _
        %s275 = sand.u32 %s32, 1
        %s276 = scalar_lea.sflag [#allocation4], %s275
        %s277 = sand.u32 %s32, 1
        %s278 = smul.addr %s277, 432
        %s279 = scalar_lea.vmem [#allocation3], %s278
        %p280 = pneg %p45
        %p281 = pneg %p42
        %p282 = pneg %p66
        %p283 = pneg %p63
        %p284 = pneg %p87
        %p285 = pneg %p84
        %p286 = pneg %p108
        %p287 = pneg %p105
        %p288 = pneg %p129
        %p289 = pneg %p126
        %p290 = pneg %p155
        %p291 = pneg %p152
        %s292 = sand.u32 %s142, 1
        %s293 = scalar_lea.sflag [#allocation5], %s292
        %s294 = sand.u32 %s142, 1
        %s295 = smul.addr %s294, 256
        %s296 = scalar_lea.vmem [#allocation12], %s295
        %v297 = vld [vmem:[%s254] sm:$0xff]
        %v298 = vld [vmem:[%s254 + $0x8] sm:$0xff]
        %v299 = vld [vmem:[%s254 + $0x18] sm:$0xff]
        %v300 = vld [vmem:[%s254 + $0x20] sm:$0xff]
        %v301 = vld [vmem:[%s254 + $0x30] sm:$0xff]
        %v302 = vld [vmem:[%s254 + $0x38] sm:$0xff]
        %v303 = vld [vmem:[%s254 + $0x48] sm:$0xff]
        %v304 = vld [vmem:[%s254 + $0x50] sm:$0xff]
        %v305 = vld [vmem:[%s254 + $0x60] sm:$0xff]
        %v306 = vld [vmem:[%s254 + $0x68] sm:$0xff]
        %v307 = vld [vmem:[%s254 + $0x78] sm:$0xff]
        %v308 = vld [vmem:[%s254 + $0x80] sm:$0xff]
        %v309 = vld [vmem:[%s254 + $0x90] sm:$0xff]
        %v310 = vld [vmem:[%s254 + $0x98] sm:$0xff]
        %v311 = vld [vmem:[%s254 + $0xa8] sm:$0xff]
        %v312 = vld [vmem:[%s254 + $0xb0] sm:$0xff]
        %v313 = vld [vmem:[%s254 + $0xc0] sm:$0xff]
        %v314 = vld [vmem:[%s254 + $0xc8] sm:$0xff]
        %v315 = vld [vmem:[%s254 + $0xd8] sm:$0xff]
        %v316 = vld [vmem:[%s254 + $0xe0] sm:$0xff]
        %v317 = vld [vmem:[%s254 + $0xf0] sm:$0xff]
        %v318 = vld [vmem:[%s254 + $0xf8] sm:$0xff]
        %v319 = vld [vmem:[%s254 + $0x108] sm:$0xff]
        %v320 = vld [vmem:[%s254 + $0x110] sm:$0xff]
        %v321 = vld [vmem:[%s254 + $0x120] sm:$0xff]
        %v322 = vld [vmem:[%s254 + $0x128] sm:$0xff]
        %v323 = vld [vmem:[%s254 + $0x138] sm:$0xff]
        %v324 = vld [vmem:[%s254 + $0x140] sm:$0xff]
        %v325 = vld [vmem:[%s254 + $0x150] sm:$0xff]
        %v326 = vld [vmem:[%s254 + $0x158] sm:$0xff]
        %v327 = vld [vmem:[%s254 + $0x168] sm:$0xff]
        %v328 = vld [vmem:[%s254 + $0x170] sm:$0xff]
        %v329 = vld [vmem:[%s254 + $0x1] sm:$0xff]
        %v330 = vld [vmem:[%s254 + $0x9] sm:$0xff]
        %v331 = vld [vmem:[%s254 + $0x19] sm:$0xff]
        %v332 = vld [vmem:[%s254 + $0x21] sm:$0xff]
        %v333 = vld [vmem:[%s254 + $0x31] sm:$0xff]
        %v334 = vld [vmem:[%s254 + $0x39] sm:$0xff]
        %v335 = vld [vmem:[%s254 + $0x49] sm:$0xff]
        %v336 = vld [vmem:[%s254 + $0x51] sm:$0xff]
        %v337 = vld [vmem:[%s254 + $0x61] sm:$0xff]
        %v338 = vld [vmem:[%s254 + $0x69] sm:$0xff]
        %v339 = vld [vmem:[%s254 + $0x79] sm:$0xff]
        %v340 = vld [vmem:[%s254 + $0x81] sm:$0xff]
        %v341 = vld [vmem:[%s254 + $0x91] sm:$0xff]
        %v342 = vld [vmem:[%s254 + $0x99] sm:$0xff]
        %v343 = vld [vmem:[%s254 + $0xa9] sm:$0xff]
        %v344 = vld [vmem:[%s254 + $0xb1] sm:$0xff]
        %v345 = vld [vmem:[%s254 + $0xc1] sm:$0xff]
        %v346 = vld [vmem:[%s254 + $0xc9] sm:$0xff]
        %v347 = vld [vmem:[%s254 + $0xd9] sm:$0xff]
        %v348 = vld [vmem:[%s254 + $0xe1] sm:$0xff]
        %v349 = vld [vmem:[%s254 + $0xf1] sm:$0xff]
        %v350 = vld [vmem:[%s254 + $0xf9] sm:$0xff]
        %v351 = vld [vmem:[%s254 + $0x109] sm:$0xff]
        %v352 = vld [vmem:[%s254 + $0x111] sm:$0xff]
        %v353 = vld [vmem:[%s254 + $0x121] sm:$0xff]
        %v354 = vld [vmem:[%s254 + $0x129] sm:$0xff]
        %v355 = vld [vmem:[%s254 + $0x139] sm:$0xff]
        %v356 = vld [vmem:[%s254 + $0x141] sm:$0xff]
        %v357 = vld [vmem:[%s254 + $0x151] sm:$0xff]
        %v358 = vld [vmem:[%s254 + $0x159] sm:$0xff]
        %v359 = vld [vmem:[%s254 + $0x169] sm:$0xff]
        %v360 = vld [vmem:[%s254 + $0x171] sm:$0xff]
        %v361 = vld [vmem:[%s254 + $0x2] sm:$0xff]
        %v362 = vld [vmem:[%s254 + $0xa] sm:$0xff]
        %v363 = vld [vmem:[%s254 + $0x1a] sm:$0xff]
        %v364 = vld [vmem:[%s254 + $0x22] sm:$0xff]
        %v365 = vld [vmem:[%s254 + $0x32] sm:$0xff]
        %v366 = vld [vmem:[%s254 + $0x3a] sm:$0xff]
        %v367 = vld [vmem:[%s254 + $0x4a] sm:$0xff]
        %v368 = vld [vmem:[%s254 + $0x52] sm:$0xff]
        %v369 = vld [vmem:[%s254 + $0x62] sm:$0xff]
        %v370 = vld [vmem:[%s254 + $0x6a] sm:$0xff]
        %v371 = vld [vmem:[%s254 + $0x7a] sm:$0xff]
        %v372 = vld [vmem:[%s254 + $0x82] sm:$0xff]
        %v373 = vld [vmem:[%s254 + $0x92] sm:$0xff]
        %v374 = vld [vmem:[%s254 + $0x9a] sm:$0xff]
        %v375 = vld [vmem:[%s254 + $0xaa] sm:$0xff]
        %v376 = vld [vmem:[%s254 + $0xb2] sm:$0xff]
        %v377 = vld [vmem:[%s254 + $0xc2] sm:$0xff]
        %v378 = vld [vmem:[%s254 + $0xca] sm:$0xff]
        %v379 = vld [vmem:[%s254 + $0xda] sm:$0xff]
        %v380 = vld [vmem:[%s254 + $0xe2] sm:$0xff]
        %v381 = vld [vmem:[%s254 + $0xf2] sm:$0xff]
        %v382 = vld [vmem:[%s254 + $0xfa] sm:$0xff]
        %v383 = vld [vmem:[%s254 + $0x10a] sm:$0xff]
        %v384 = vld [vmem:[%s254 + $0x112] sm:$0xff]
        %v385 = vld [vmem:[%s254 + $0x122] sm:$0xff]
        %v386 = vld [vmem:[%s254 + $0x12a] sm:$0xff]
        %v387 = vld [vmem:[%s254 + $0x13a] sm:$0xff]
        %v388 = vld [vmem:[%s254 + $0x142] sm:$0xff]
        %v389 = vld [vmem:[%s254 + $0x152] sm:$0xff]
        %v390 = vld [vmem:[%s254 + $0x15a] sm:$0xff]
        %v391 = vld [vmem:[%s254 + $0x16a] sm:$0xff]
        %v392 = vld [vmem:[%s254 + $0x172] sm:$0xff]
        %s393 = scalar_lea.vmem %s254, 24 [#allocation3]
        %v394 = vld [vmem:[%s393] sm:$0xff]
        %v395 = vld [vmem:[%s393 + $0x8] sm:$0xff]
        %v396 = vld [vmem:[%s393 + $0x18] sm:$0xff]
        %v397 = vld [vmem:[%s393 + $0x20] sm:$0xff]
        %v398 = vld [vmem:[%s393 + $0x30] sm:$0xff]
        %v399 = vld [vmem:[%s393 + $0x38] sm:$0xff]
        %v400 = vld [vmem:[%s393 + $0x48] sm:$0xff]
        %v401 = vld [vmem:[%s393 + $0x50] sm:$0xff]
        %v402 = vld [vmem:[%s393 + $0x60] sm:$0xff]
        %v403 = vld [vmem:[%s393 + $0x68] sm:$0xff]
        %v404 = vld [vmem:[%s393 + $0x78] sm:$0xff]
        %v405 = vld [vmem:[%s393 + $0x80] sm:$0xff]
        %v406 = vld [vmem:[%s393 + $0x90] sm:$0xff]
        %v407 = vld [vmem:[%s393 + $0x98] sm:$0xff]
        %v408 = vld [vmem:[%s393 + $0xa8] sm:$0xff]
        %v409 = vld [vmem:[%s393 + $0xb0] sm:$0xff]
        %v410 = vld [vmem:[%s393 + $0xc0] sm:$0xff]
        %v411 = vld [vmem:[%s393 + $0xc8] sm:$0xff]
        %v412 = vld [vmem:[%s393 + $0xd8] sm:$0xff]
        %v413 = vld [vmem:[%s393 + $0xe0] sm:$0xff]
        %v414 = vld [vmem:[%s393 + $0xf0] sm:$0xff]
        %v415 = vld [vmem:[%s393 + $0xf8] sm:$0xff]
        %v416 = vld [vmem:[%s393 + $0x108] sm:$0xff]
        %v417 = vld [vmem:[%s393 + $0x110] sm:$0xff]
        %v418 = vld [vmem:[%s393 + $0x120] sm:$0xff]
        %v419 = vld [vmem:[%s393 + $0x128] sm:$0xff]
        %v420 = vld [vmem:[%s393 + $0x138] sm:$0xff]
        %v421 = vld [vmem:[%s393 + $0x140] sm:$0xff]
        %v422 = vld [vmem:[%s393 + $0x150] sm:$0xff]
        %v423 = vld [vmem:[%s393 + $0x158] sm:$0xff]
        %v424 = vld [vmem:[%s393 + $0x168] sm:$0xff]
        %v425 = vld [vmem:[%s393 + $0x170] sm:$0xff]
        %v426 = vld [vmem:[%s393 + $0x1] sm:$0xff]
        %v427 = vld [vmem:[%s393 + $0x9] sm:$0xff]
        %v428 = vld [vmem:[%s393 + $0x19] sm:$0xff]
        %v429 = vld [vmem:[%s393 + $0x21] sm:$0xff]
        %v430 = vld [vmem:[%s393 + $0x31] sm:$0xff]
        %v431 = vld [vmem:[%s393 + $0x39] sm:$0xff]
        %v432 = vld [vmem:[%s393 + $0x49] sm:$0xff]
        %v433 = vld [vmem:[%s393 + $0x51] sm:$0xff]
        %v434 = vld [vmem:[%s393 + $0x61] sm:$0xff]
        %v435 = vld [vmem:[%s393 + $0x69] sm:$0xff]
        %v436 = vld [vmem:[%s393 + $0x79] sm:$0xff]
        %v437 = vld [vmem:[%s393 + $0x81] sm:$0xff]
        %v438 = vld [vmem:[%s393 + $0x91] sm:$0xff]
        %v439 = vld [vmem:[%s393 + $0x99] sm:$0xff]
        %v440 = vld [vmem:[%s393 + $0xa9] sm:$0xff]
        %v441 = vld [vmem:[%s393 + $0xb1] sm:$0xff]
        %v442 = vld [vmem:[%s393 + $0xc1] sm:$0xff]
        %v443 = vld [vmem:[%s393 + $0xc9] sm:$0xff]
        %v444 = vld [vmem:[%s393 + $0xd9] sm:$0xff]
        %v445 = vld [vmem:[%s393 + $0xe1] sm:$0xff]
        %v446 = vld [vmem:[%s393 + $0xf1] sm:$0xff]
        %v447 = vld [vmem:[%s393 + $0xf9] sm:$0xff]
        %v448 = vld [vmem:[%s393 + $0x109] sm:$0xff]
        %v449 = vld [vmem:[%s393 + $0x111] sm:$0xff]
        %v450 = vld [vmem:[%s393 + $0x121] sm:$0xff]
        %v451 = vld [vmem:[%s393 + $0x129] sm:$0xff]
        %v452 = vld [vmem:[%s393 + $0x139] sm:$0xff]
        %v453 = vld [vmem:[%s393 + $0x141] sm:$0xff]
        %v454 = vld [vmem:[%s393 + $0x151] sm:$0xff]
        %v455 = vld [vmem:[%s393 + $0x159] sm:$0xff]
        %v456 = vld [vmem:[%s393 + $0x169] sm:$0xff]
        %v457 = vld [vmem:[%s393 + $0x171] sm:$0xff]
        %v458 = vld [vmem:[%s393 + $0x2] sm:$0xff]
        %v459 = vld [vmem:[%s393 + $0xa] sm:$0xff]
        %v460 = vld [vmem:[%s393 + $0x1a] sm:$0xff]
        %v461 = vld [vmem:[%s393 + $0x22] sm:$0xff]
        %v462 = vld [vmem:[%s393 + $0x32] sm:$0xff]
        %v463 = vld [vmem:[%s393 + $0x3a] sm:$0xff]
        %v464 = vld [vmem:[%s393 + $0x4a] sm:$0xff]
        %v465 = vld [vmem:[%s393 + $0x52] sm:$0xff]
        %v466 = vld [vmem:[%s393 + $0x62] sm:$0xff]
        %v467 = vld [vmem:[%s393 + $0x6a] sm:$0xff]
        %v468 = vld [vmem:[%s393 + $0x7a] sm:$0xff]
        %v469 = vld [vmem:[%s393 + $0x82] sm:$0xff]
        %v470 = vld [vmem:[%s393 + $0x92] sm:$0xff]
        %v471 = vld [vmem:[%s393 + $0x9a] sm:$0xff]
        %v472 = vld [vmem:[%s393 + $0xaa] sm:$0xff]
        %v473 = vld [vmem:[%s393 + $0xb2] sm:$0xff]
        %v474 = vld [vmem:[%s393 + $0xc2] sm:$0xff]
        %v475 = vld [vmem:[%s393 + $0xca] sm:$0xff]
        %v476 = vld [vmem:[%s393 + $0xda] sm:$0xff]
        %v477 = vld [vmem:[%s393 + $0xe2] sm:$0xff]
        %v478 = vld [vmem:[%s393 + $0xf2] sm:$0xff]
        %v479 = vld [vmem:[%s393 + $0xfa] sm:$0xff]
        %v480 = vld [vmem:[%s393 + $0x10a] sm:$0xff]
        %v481 = vld [vmem:[%s393 + $0x112] sm:$0xff]
        %v482 = vld [vmem:[%s393 + $0x122] sm:$0xff]
        %v483 = vld [vmem:[%s393 + $0x12a] sm:$0xff]
        %v484 = vld [vmem:[%s393 + $0x13a] sm:$0xff]
        %v485 = vld [vmem:[%s393 + $0x142] sm:$0xff]
        %v486 = vld [vmem:[%s393 + $0x152] sm:$0xff]
        %v487 = vld [vmem:[%s393 + $0x15a] sm:$0xff]
        %v488 = vld [vmem:[%s393 + $0x16a] sm:$0xff]
        %v489 = vld [vmem:[%s393 + $0x172] sm:$0xff]
        %s490 = scalar_lea.vmem %s254, 48 [#allocation3]
        %v491 = vld [vmem:[%s490] sm:$0xff]
        %v492 = vld [vmem:[%s490 + $0x8] sm:$0xff]
        %v493 = vld [vmem:[%s490 + $0x18] sm:$0xff]
        %v494 = vld [vmem:[%s490 + $0x20] sm:$0xff]
        %v495 = vld [vmem:[%s490 + $0x30] sm:$0xff]
        %v496 = vld [vmem:[%s490 + $0x38] sm:$0xff]
        %v497 = vld [vmem:[%s490 + $0x48] sm:$0xff]
        %v498 = vld [vmem:[%s490 + $0x50] sm:$0xff]
        %v499 = vld [vmem:[%s490 + $0x60] sm:$0xff]
        %v500 = vld [vmem:[%s490 + $0x68] sm:$0xff]
        %v501 = vld [vmem:[%s490 + $0x78] sm:$0xff]
        %v502 = vld [vmem:[%s490 + $0x80] sm:$0xff]
        %v503 = vld [vmem:[%s490 + $0x90] sm:$0xff]
        %v504 = vld [vmem:[%s490 + $0x98] sm:$0xff]
        %v505 = vld [vmem:[%s490 + $0xa8] sm:$0xff]
        %v506 = vld [vmem:[%s490 + $0xb0] sm:$0xff]
        %v507 = vld [vmem:[%s490 + $0xc0] sm:$0xff]
        %v508 = vld [vmem:[%s490 + $0xc8] sm:$0xff]
        %v509 = vld [vmem:[%s490 + $0xd8] sm:$0xff]
        %v510 = vld [vmem:[%s490 + $0xe0] sm:$0xff]
        %v511 = vld [vmem:[%s490 + $0xf0] sm:$0xff]
        %v512 = vld [vmem:[%s490 + $0xf8] sm:$0xff]
        %v513 = vld [vmem:[%s490 + $0x108] sm:$0xff]
        %v514 = vld [vmem:[%s490 + $0x110] sm:$0xff]
        %v515 = vld [vmem:[%s490 + $0x120] sm:$0xff]
        %v516 = vld [vmem:[%s490 + $0x128] sm:$0xff]
        %v517 = vld [vmem:[%s490 + $0x138] sm:$0xff]
        %v518 = vld [vmem:[%s490 + $0x140] sm:$0xff]
        %v519 = vld [vmem:[%s490 + $0x150] sm:$0xff]
        %v520 = vld [vmem:[%s490 + $0x158] sm:$0xff]
        %v521 = vld [vmem:[%s490 + $0x168] sm:$0xff]
        %v522 = vld [vmem:[%s490 + $0x170] sm:$0xff]
        %v523 = vld [vmem:[%s490 + $0x1] sm:$0xff]
        %v524 = vld [vmem:[%s490 + $0x9] sm:$0xff]
        %v525 = vld [vmem:[%s490 + $0x19] sm:$0xff]
        %v526 = vld [vmem:[%s490 + $0x21] sm:$0xff]
        %v527 = vld [vmem:[%s490 + $0x31] sm:$0xff]
        %v528 = vld [vmem:[%s490 + $0x39] sm:$0xff]
        %v529 = vld [vmem:[%s490 + $0x49] sm:$0xff]
        %v530 = vld [vmem:[%s490 + $0x51] sm:$0xff]
        %v531 = vld [vmem:[%s490 + $0x61] sm:$0xff]
        %v532 = vld [vmem:[%s490 + $0x69] sm:$0xff]
        %v533 = vld [vmem:[%s490 + $0x79] sm:$0xff]
        %v534 = vld [vmem:[%s490 + $0x81] sm:$0xff]
        %v535 = vld [vmem:[%s490 + $0x91] sm:$0xff]
        %v536 = vld [vmem:[%s490 + $0x99] sm:$0xff]
        %v537 = vld [vmem:[%s490 + $0xa9] sm:$0xff]
        %v538 = vld [vmem:[%s490 + $0xb1] sm:$0xff]
        %v539 = vld [vmem:[%s490 + $0xc1] sm:$0xff]
        %v540 = vld [vmem:[%s490 + $0xc9] sm:$0xff]
        %v541 = vld [vmem:[%s490 + $0xd9] sm:$0xff]
        %v542 = vld [vmem:[%s490 + $0xe1] sm:$0xff]
        %v543 = vld [vmem:[%s490 + $0xf1] sm:$0xff]
        %v544 = vld [vmem:[%s490 + $0xf9] sm:$0xff]
        %v545 = vld [vmem:[%s490 + $0x109] sm:$0xff]
        %v546 = vld [vmem:[%s490 + $0x111] sm:$0xff]
        %v547 = vld [vmem:[%s490 + $0x121] sm:$0xff]
        %v548 = vld [vmem:[%s490 + $0x129] sm:$0xff]
        %v549 = vld [vmem:[%s490 + $0x139] sm:$0xff]
        %v550 = vld [vmem:[%s490 + $0x141] sm:$0xff]
        %v551 = vld [vmem:[%s490 + $0x151] sm:$0xff]
        %v552 = vld [vmem:[%s490 + $0x159] sm:$0xff]
        %v553 = vld [vmem:[%s490 + $0x169] sm:$0xff]
        %v554 = vld [vmem:[%s490 + $0x171] sm:$0xff]
        %v555 = vld [vmem:[%s490 + $0x2] sm:$0xff]
        %v556 = vld [vmem:[%s490 + $0xa] sm:$0xff]
        %v557 = vld [vmem:[%s490 + $0x1a] sm:$0xff]
        %v558 = vld [vmem:[%s490 + $0x22] sm:$0xff]
        %v559 = vld [vmem:[%s490 + $0x32] sm:$0xff]
        %v560 = vld [vmem:[%s490 + $0x3a] sm:$0xff]
        %v561 = vld [vmem:[%s490 + $0x4a] sm:$0xff]
        %v562 = vld [vmem:[%s490 + $0x52] sm:$0xff]
        %v563 = vld [vmem:[%s490 + $0x62] sm:$0xff]
        %v564 = vld [vmem:[%s490 + $0x6a] sm:$0xff]
        %v565 = vld [vmem:[%s490 + $0x7a] sm:$0xff]
        %v566 = vld [vmem:[%s490 + $0x82] sm:$0xff]
        %v567 = vld [vmem:[%s490 + $0x92] sm:$0xff]
        %v568 = vld [vmem:[%s490 + $0x9a] sm:$0xff]
        %v569 = vld [vmem:[%s490 + $0xaa] sm:$0xff]
        %v570 = vld [vmem:[%s490 + $0xb2] sm:$0xff]
        %v571 = vld [vmem:[%s490 + $0xc2] sm:$0xff]
        %v572 = vld [vmem:[%s490 + $0xca] sm:$0xff]
        %v573 = vld [vmem:[%s490 + $0xda] sm:$0xff]
        %v574 = vld [vmem:[%s490 + $0xe2] sm:$0xff]
        %v575 = vld [vmem:[%s490 + $0xf2] sm:$0xff]
        %v576 = vld [vmem:[%s490 + $0xfa] sm:$0xff]
        %v577 = vld [vmem:[%s490 + $0x10a] sm:$0xff]
        %v578 = vld [vmem:[%s490 + $0x112] sm:$0xff]
        %v579 = vld [vmem:[%s490 + $0x122] sm:$0xff]
        %v580 = vld [vmem:[%s490 + $0x12a] sm:$0xff]
        %v581 = vld [vmem:[%s490 + $0x13a] sm:$0xff]
        %v582 = vld [vmem:[%s490 + $0x142] sm:$0xff]
        %v583 = vld [vmem:[%s490 + $0x152] sm:$0xff]
        %v584 = vld [vmem:[%s490 + $0x15a] sm:$0xff]
        %v585 = vld [vmem:[%s490 + $0x16a] sm:$0xff]
        %v586 = vld [vmem:[%s490 + $0x172] sm:$0xff]
        %v587 = vld [vmem:[#allocation6] sm:$0xff]
        %v588 = vld [vmem:[#allocation6 + $0x8] sm:$0xff]
        %v589 = vld [vmem:[#allocation6 + $0x10] sm:$0xff]
        %v590 = vld [vmem:[#allocation6 + $0x18] sm:$0xff]
        %v591 = vld [vmem:[#allocation6 + $0x20] sm:$0xff]
        %v592 = vld [vmem:[#allocation6 + $0x28] sm:$0xff]
        %v593 = vld [vmem:[#allocation6 + $0x30] sm:$0xff]
        %v594 = vld [vmem:[#allocation6 + $0x38] sm:$0xff]
        %v595 = vld [vmem:[#allocation6 + $0x40] sm:$0xff]
        %v596 = vld [vmem:[#allocation6 + $0x48] sm:$0xff]
        %v597 = vld [vmem:[#allocation6 + $0x50] sm:$0xff]
        %v598 = vld [vmem:[#allocation6 + $0x58] sm:$0xff]
        %v599 = vld [vmem:[#allocation6 + $0x60] sm:$0xff]
        %v600 = vld [vmem:[#allocation6 + $0x68] sm:$0xff]
        %v601 = vld [vmem:[#allocation6 + $0x70] sm:$0xff]
        %v602 = vld [vmem:[#allocation6 + $0x78] sm:$0xff]
        %v603 = vld [vmem:[#allocation6 + $0x80] sm:$0xff]
        %v604 = vld [vmem:[#allocation6 + $0x88] sm:$0xff]
        %v605 = vld [vmem:[#allocation6 + $0x90] sm:$0xff]
        %v606 = vld [vmem:[#allocation6 + $0x98] sm:$0xff]
        %v607 = vld [vmem:[#allocation6 + $0xa0] sm:$0xff]
        %v608 = vld [vmem:[#allocation6 + $0xa8] sm:$0xff]
        %v609 = vld [vmem:[#allocation6 + $0xb0] sm:$0xff]
        %v610 = vld [vmem:[#allocation6 + $0xb8] sm:$0xff]
        %v611 = vld [vmem:[#allocation6 + $0xc0] sm:$0xff]
        %v612 = vld [vmem:[#allocation6 + $0xc8] sm:$0xff]
        %v613 = vld [vmem:[#allocation6 + $0xd0] sm:$0xff]
        %v614 = vld [vmem:[#allocation6 + $0xd8] sm:$0xff]
        %v615 = vld [vmem:[#allocation6 + $0xe0] sm:$0xff]
        %v616 = vld [vmem:[#allocation6 + $0xe8] sm:$0xff]
        %v617 = vld [vmem:[#allocation6 + $0xf0] sm:$0xff]
        %v618 = vld [vmem:[#allocation6 + $0xf8] sm:$0xff]
        %v619 = vld [vmem:[#allocation6 + $0x100] sm:$0xff]
        %v620 = vld [vmem:[#allocation6 + $0x108] sm:$0xff]
        %v621 = vld [vmem:[#allocation6 + $0x110] sm:$0xff]
        %v622 = vld [vmem:[#allocation6 + $0x118] sm:$0xff]
        %v623 = vld [vmem:[#allocation6 + $0x120] sm:$0xff]
        %v624 = vld [vmem:[#allocation6 + $0x128] sm:$0xff]
        %v625 = vld [vmem:[#allocation6 + $0x130] sm:$0xff]
        %v626 = vld [vmem:[#allocation6 + $0x138] sm:$0xff]
        %v627 = vld [vmem:[#allocation6 + $0x140] sm:$0xff]
        %v628 = vld [vmem:[#allocation6 + $0x148] sm:$0xff]
        %v629 = vld [vmem:[#allocation6 + $0x150] sm:$0xff]
        %v630 = vld [vmem:[#allocation6 + $0x158] sm:$0xff]
        %v631 = vld [vmem:[#allocation6 + $0x160] sm:$0xff]
        %v632 = vld [vmem:[#allocation6 + $0x168] sm:$0xff]
        %v633 = vld [vmem:[#allocation6 + $0x170] sm:$0xff]
        %v634 = vld [vmem:[#allocation6 + $0x178] sm:$0xff]
        %v635 = vld [vmem:[#allocation6 + $0x180] sm:$0xff]
        %v636 = vld [vmem:[#allocation6 + $0x188] sm:$0xff]
        %v637 = vld [vmem:[#allocation6 + $0x190] sm:$0xff]
        %v638 = vld [vmem:[#allocation6 + $0x198] sm:$0xff]
        %v639 = vld [vmem:[#allocation6 + $0x1a0] sm:$0xff]
        %v640 = vld [vmem:[#allocation6 + $0x1a8] sm:$0xff]
        %v641 = vld [vmem:[#allocation6 + $0x1b0] sm:$0xff]
        %v642 = vld [vmem:[#allocation6 + $0x1b8] sm:$0xff]
        %v643 = vld [vmem:[#allocation6 + $0x1c0] sm:$0xff]
        %v644 = vld [vmem:[#allocation6 + $0x1c8] sm:$0xff]
        %v645 = vld [vmem:[#allocation6 + $0x1d0] sm:$0xff]
        %v646 = vld [vmem:[#allocation6 + $0x1d8] sm:$0xff]
        %v647 = vld [vmem:[#allocation6 + $0x1e0] sm:$0xff]
        %v648 = vld [vmem:[#allocation6 + $0x1e8] sm:$0xff]
        %v649 = vld [vmem:[#allocation6 + $0x1f0] sm:$0xff]
        %v650 = vld [vmem:[#allocation6 + $0x1f8] sm:$0xff]
        %v651 = vld [vmem:[#allocation6 + $0x200] sm:$0xff]
        %v652 = vld [vmem:[#allocation6 + $0x208] sm:$0xff]
        %v653 = vld [vmem:[#allocation6 + $0x210] sm:$0xff]
        %v654 = vld [vmem:[#allocation6 + $0x218] sm:$0xff]
        %v655 = vld [vmem:[#allocation6 + $0x220] sm:$0xff]
        %v656 = vld [vmem:[#allocation6 + $0x228] sm:$0xff]
        %v657 = vld [vmem:[#allocation6 + $0x230] sm:$0xff]
        %v658 = vld [vmem:[#allocation6 + $0x238] sm:$0xff]
        %v659 = vld [vmem:[#allocation6 + $0x240] sm:$0xff]
        %v660 = vld [vmem:[#allocation6 + $0x248] sm:$0xff]
        %v661 = vld [vmem:[#allocation6 + $0x250] sm:$0xff]
        %v662 = vld [vmem:[#allocation6 + $0x258] sm:$0xff]
        %v663 = vld [vmem:[#allocation6 + $0x260] sm:$0xff]
        %v664 = vld [vmem:[#allocation6 + $0x268] sm:$0xff]
        %v665 = vld [vmem:[#allocation6 + $0x270] sm:$0xff]
        %v666 = vld [vmem:[#allocation6 + $0x278] sm:$0xff]
        %v667 = vld [vmem:[#allocation6 + $0x280] sm:$0xff]
        %v668 = vld [vmem:[#allocation6 + $0x288] sm:$0xff]
        %v669 = vld [vmem:[#allocation6 + $0x290] sm:$0xff]
        %v670 = vld [vmem:[#allocation6 + $0x298] sm:$0xff]
        %v671 = vld [vmem:[#allocation6 + $0x2a0] sm:$0xff]
        %v672 = vld [vmem:[#allocation6 + $0x2a8] sm:$0xff]
        %v673 = vld [vmem:[#allocation6 + $0x2b0] sm:$0xff]
        %v674 = vld [vmem:[#allocation6 + $0x2b8] sm:$0xff]
        %v675 = vld [vmem:[#allocation6 + $0x2c0] sm:$0xff]
        %v676 = vld [vmem:[#allocation6 + $0x2c8] sm:$0xff]
        %v677 = vld [vmem:[#allocation6 + $0x2d0] sm:$0xff]
        %v678 = vld [vmem:[#allocation6 + $0x2d8] sm:$0xff]
        %v679 = vld [vmem:[#allocation6 + $0x2e0] sm:$0xff]
        %v680 = vld [vmem:[#allocation6 + $0x2e8] sm:$0xff]
        %v681 = vld [vmem:[#allocation6 + $0x2f0] sm:$0xff]
        %v682 = vld [vmem:[#allocation6 + $0x2f8] sm:$0xff]
        %v683 = vld [vmem:[#allocation6 + $0x300] sm:$0xff]
        %v684 = vld [vmem:[#allocation6 + $0x308] sm:$0xff]
        %v685 = vld [vmem:[#allocation6 + $0x310] sm:$0xff]
        %v686 = vld [vmem:[#allocation6 + $0x318] sm:$0xff]
        %v687 = vld [vmem:[#allocation6 + $0x320] sm:$0xff]
        %v688 = vld [vmem:[#allocation6 + $0x328] sm:$0xff]
        %v689 = vld [vmem:[#allocation6 + $0x330] sm:$0xff]
        %v690 = vld [vmem:[#allocation6 + $0x338] sm:$0xff]
        %v691 = vld [vmem:[#allocation6 + $0x340] sm:$0xff]
        %v692 = vld [vmem:[#allocation6 + $0x348] sm:$0xff]
        %v693 = vld [vmem:[#allocation6 + $0x350] sm:$0xff]
        %v694 = vld [vmem:[#allocation6 + $0x358] sm:$0xff]
        %v695 = vld [vmem:[#allocation6 + $0x360] sm:$0xff]
        %v696 = vld [vmem:[#allocation6 + $0x368] sm:$0xff]
        %v697 = vld [vmem:[#allocation6 + $0x370] sm:$0xff]
        %v698 = vld [vmem:[#allocation6 + $0x378] sm:$0xff]
        %v699 = vld [vmem:[#allocation6 + $0x380] sm:$0xff]
        %v700 = vld [vmem:[#allocation6 + $0x388] sm:$0xff]
        %v701 = vld [vmem:[#allocation6 + $0x390] sm:$0xff]
        %v702 = vld [vmem:[#allocation6 + $0x398] sm:$0xff]
        %v703 = vld [vmem:[#allocation6 + $0x3a0] sm:$0xff]
        %v704 = vld [vmem:[#allocation6 + $0x3a8] sm:$0xff]
        %v705 = vld [vmem:[#allocation6 + $0x3b0] sm:$0xff]
        %v706 = vld [vmem:[#allocation6 + $0x3b8] sm:$0xff]
        %v707 = vld [vmem:[#allocation6 + $0x3c0] sm:$0xff]
        %v708 = vld [vmem:[#allocation6 + $0x3c8] sm:$0xff]
        %v709 = vld [vmem:[#allocation6 + $0x3d0] sm:$0xff]
        %v710 = vld [vmem:[#allocation6 + $0x3d8] sm:$0xff]
        %v711 = vld [vmem:[#allocation6 + $0x3e0] sm:$0xff]
        %v712 = vld [vmem:[#allocation6 + $0x3e8] sm:$0xff]
        %v713 = vld [vmem:[#allocation6 + $0x3f0] sm:$0xff]
        %v714 = vld [vmem:[#allocation6 + $0x3f8] sm:$0xff]
        %v715 = vld [vmem:[#allocation6 + $0x400] sm:$0xff]
        %v716 = vld [vmem:[#allocation6 + $0x408] sm:$0xff]
        %v717 = vld [vmem:[#allocation6 + $0x410] sm:$0xff]
        %v718 = vld [vmem:[#allocation6 + $0x418] sm:$0xff]
        %v719 = vld [vmem:[#allocation6 + $0x420] sm:$0xff]
        %v720 = vld [vmem:[#allocation6 + $0x428] sm:$0xff]
        %v721 = vld [vmem:[#allocation6 + $0x430] sm:$0xff]
        %v722 = vld [vmem:[#allocation6 + $0x438] sm:$0xff]
        %v723 = vld [vmem:[#allocation6 + $0x440] sm:$0xff]
        %v724 = vld [vmem:[#allocation6 + $0x448] sm:$0xff]
        %v725 = vld [vmem:[#allocation6 + $0x450] sm:$0xff]
        %v726 = vld [vmem:[#allocation6 + $0x458] sm:$0xff]
        %v727 = vld [vmem:[#allocation6 + $0x460] sm:$0xff]
        %v728 = vld [vmem:[#allocation6 + $0x468] sm:$0xff]
        %v729 = vld [vmem:[#allocation6 + $0x470] sm:$0xff]
        %v730 = vld [vmem:[#allocation6 + $0x478] sm:$0xff]
        %v731 = vld [vmem:[#allocation8] sm:$0x1]
        %v733 = vlaneseq
        %v734 = vshrl.u32 %v733, 7
        %v735 = vsub.s32 0, %v734
        %v736 = vrot.slane %v731, %v735
        %738 = vmatprep.subr.mxu0 0.0
        %739 = vmatpush1.msra.mxu0 %v587
        %740 = vmatprep.subr.mxu0 0.0
        %741 = vmatpush1.msra.mxu0 %v588
        %742 = vmatprep.subr.mxu0 0.0
        %743 = vmatpush1.msra.mxu0 %v589
        %744 = vmatprep.subr.mxu0 0.0
        %745 = vmatpush1.msra.mxu0 %v590
        %746 = vmatprep.subr.mxu0 0.0
        %747 = vmatpush1.msra.mxu0 %v591
        %748 = vmatprep.subr.mxu0 0.0
        %749 = vmatpush1.msra.mxu0 %v592
        %750 = vmatprep.subr.mxu0 0.0
        %751 = vmatpush1.msra.mxu0 %v593
        %752 = vmatprep.subr.mxu0 0.0
        %753 = vmatpush1.msra.mxu0 %v594
        %754 = vmatprep.subr.mxu0 0.0
        %755 = vmatpush1.msra.mxu0 %v595
        %756 = vmatprep.subr.mxu0 0.0
        %757 = vmatpush1.msra.mxu0 %v596
        %758 = vmatprep.subr.mxu0 0.0
        %759 = vmatpush1.msra.mxu0 %v597
        %760 = vmatprep.subr.mxu0 0.0
        %761 = vmatpush1.msra.mxu0 %v598
        %762 = vmatprep.subr.mxu0 0.0
        %763 = vmatpush1.msra.mxu0 %v599
        %764 = vmatprep.subr.mxu0 0.0
        %765 = vmatpush1.msra.mxu0 %v600
        %766 = vmatprep.subr.mxu0 0.0
        %767 = vmatpush1.msra.mxu0 %v601
        %768 = vmatprep.subr.mxu0 0.0
        %769 = vmatpush1.msra.mxu0 %v602
        %770 = vmatprep.subr.mxu0 0.0
        %771 = vmatpush1.msra.mxu0 %v603
        %772 = vmatprep.subr.mxu0 0.0
        %773 = vmatpush1.msra.mxu0 %v604
        %774 = vmatprep.subr.mxu0 0.0
        %775 = vmatpush1.msra.mxu0 %v605
        %776 = vmatprep.subr.mxu0 0.0
        %777 = vmatpush1.msra.mxu0 %v606
        %778 = vmatprep.subr.mxu0 0.0
        %779 = vmatpush1.msra.mxu0 %v607
        %780 = vmatprep.subr.mxu0 0.0
        %781 = vmatpush1.msra.mxu0 %v608
        %782 = vmatprep.subr.mxu0 0.0
        %783 = vmatpush1.msra.mxu0 %v609
        %784 = vmatprep.subr.mxu0 0.0
        %785 = vmatpush1.msra.mxu0 %v610
        %786 = vmatprep.subr.mxu0 0.0
        %787 = vmatpush1.msra.mxu0 %v611
        %788 = vmatprep.subr.mxu0 0.0
        %789 = vmatpush1.msra.mxu0 %v612
        %790 = vmatprep.subr.mxu0 0.0
        %791 = vmatpush1.msra.mxu0 %v613
        %792 = vmatprep.subr.mxu0 0.0
        %793 = vmatpush1.msra.mxu0 %v614
        %794 = vmatprep.subr.mxu0 0.0
        %795 = vmatpush1.msra.mxu0 %v615
        %796 = vmatprep.subr.mxu0 0.0
        %797 = vmatpush1.msra.mxu0 %v616
        %798 = vmatprep.subr.mxu0 0.0
        %799 = vmatpush1.msra.mxu0 %v617
        %800 = vmatprep.subr.mxu0 0.0
        %801 = vmatpush1.msra.mxu0 %v618
        %802 = vmatprep.mubr.f32.mxu0 %v329
        %803 = vmatmul.mubr.f32.gmra.mrb[0].mxu0 %v297
        %v804 = vpop.f32.mrb[0].mxu0
        %v805 = vadd.f32 %v736, %v804
        %v806 = vpop.f32.mrb[0].mxu0
        %807 = vmatprep.mubr.f32.mxu0 %v330
        %808 = vmatmul.mubr.f32.gmra.mrb[0].mxu0 %v298
        %v809 = vpop.f32.mrb[0].mxu0
        %v810 = vadd.f32 %v736, %v809
        %v811 = vpop.f32.mrb[0].mxu0
        %812 = vmatprep.mubr.f32.mxu0 %v331
        %813 = vmatmul.mubr.f32.gmra.mrb[0].mxu0 %v299
        %v814 = vpop.f32.mrb[0].mxu0
        %v815 = vadd.f32 %v736, %v814
        %v816 = vpop.f32.mrb[0].mxu0
        %817 = vmatprep.mubr.f32.mxu0 %v332
        %818 = vmatmul.mubr.f32.gmra.mrb[0].mxu0 %v300
        %v819 = vpop.f32.mrb[0].mxu0
        %v820 = vadd.f32 %v736, %v819
        %v821 = vpop.f32.mrb[0].mxu0
        %822 = vmatprep.mubr.f32.mxu0 %v333
        %823 = vmatmul.mubr.f32.gmra.mrb[0].mxu0 %v301
        %v824 = vpop.f32.mrb[0].mxu0
        %v825 = vadd.f32 %v736, %v824
        %v826 = vpop.f32.mrb[0].mxu0
        %827 = vmatprep.mubr.f32.mxu0 %v334
        %828 = vmatmul.mubr.f32.gmra.mrb[0].mxu0 %v302
        %v829 = vpop.f32.mrb[0].mxu0
        %v830 = vadd.f32 %v736, %v829
        %v831 = vpop.f32.mrb[0].mxu0
        %832 = vmatprep.mubr.f32.mxu0 %v335
        %833 = vmatmul.mubr.f32.gmra.mrb[0].mxu0 %v303
        %v834 = vpop.f32.mrb[0].mxu0
        %v835 = vadd.f32 %v736, %v834
        %v836 = vpop.f32.mrb[0].mxu0
        %837 = vmatprep.mubr.f32.mxu0 %v336
        %838 = vmatmul.mubr.f32.gmra.mrb[0].mxu0 %v304
        %v839 = vpop.f32.mrb[0].mxu0
        %v840 = vadd.f32 %v736, %v839
        %v841 = vpop.f32.mrb[0].mxu0
        %842 = vmatprep.mubr.f32.mxu0 %v337
        %843 = vmatmul.mubr.f32.gmra.mrb[0].mxu0 %v305
        %v844 = vpop.f32.mrb[0].mxu0
        %v845 = vadd.f32 %v736, %v844
        %v846 = vpop.f32.mrb[0].mxu0
        %847 = vmatprep.mubr.f32.mxu0 %v338
        %848 = vmatmul.mubr.f32.gmra.mrb[0].mxu0 %v306
        %v849 = vpop.f32.mrb[0].mxu0
        %v850 = vadd.f32 %v736, %v849
        %v851 = vpop.f32.mrb[0].mxu0
        %852 = vmatprep.mubr.f32.mxu0 %v339
        %853 = vmatmul.mubr.f32.gmra.mrb[0].mxu0 %v307
        %v854 = vpop.f32.mrb[0].mxu0
        %v855 = vadd.f32 %v736, %v854
        %v856 = vpop.f32.mrb[0].mxu0
        %857 = vmatprep.mubr.f32.mxu0 %v340
        %858 = vmatmul.mubr.f32.gmra.mrb[0].mxu0 %v308
        %v859 = vpop.f32.mrb[0].mxu0
        %v860 = vadd.f32 %v736, %v859
        %v861 = vpop.f32.mrb[0].mxu0
        %862 = vmatprep.mubr.f32.mxu0 %v341
        %863 = vmatmul.mubr.f32.gmra.mrb[0].mxu0 %v309
        %v864 = vpop.f32.mrb[0].mxu0
        %v865 = vadd.f32 %v736, %v864
        %v866 = vpop.f32.mrb[0].mxu0
        %867 = vmatprep.mubr.f32.mxu0 %v342
        %868 = vmatmul.mubr.f32.gmra.mrb[0].mxu0 %v310
        %v869 = vpop.f32.mrb[0].mxu0
        %v870 = vadd.f32 %v736, %v869
        %v871 = vpop.f32.mrb[0].mxu0
        %872 = vmatprep.mubr.f32.mxu0 %v343
        %873 = vmatmul.mubr.f32.gmra.mrb[0].mxu0 %v311
        %v874 = vpop.f32.mrb[0].mxu0
        %v875 = vadd.f32 %v736, %v874
        %v876 = vpop.f32.mrb[0].mxu0
        %877 = vmatprep.mubr.f32.mxu0 %v344
        %878 = vmatmul.mubr.f32.gmra.mrb[0].mxu0 %v312
        %v879 = vpop.f32.mrb[0].mxu0
        %v880 = vadd.f32 %v736, %v879
        %v881 = vpop.f32.mrb[0].mxu0
        %882 = vmatprep.mubr.f32.mxu0 %v345
        %883 = vmatmul.mubr.f32.gmra.mrb[0].mxu0 %v313
        %v884 = vpop.f32.mrb[0].mxu0
        %v885 = vadd.f32 %v736, %v884
        %v886 = vpop.f32.mrb[0].mxu0
        %887 = vmatprep.mubr.f32.mxu0 %v346
        %888 = vmatmul.mubr.f32.gmra.mrb[0].mxu0 %v314
        %v889 = vpop.f32.mrb[0].mxu0
        %v890 = vadd.f32 %v736, %v889
        %v891 = vpop.f32.mrb[0].mxu0
        %892 = vmatprep.mubr.f32.mxu0 %v347
        %893 = vmatmul.mubr.f32.gmra.mrb[0].mxu0 %v315
        %v894 = vpop.f32.mrb[0].mxu0
        %v895 = vadd.f32 %v736, %v894
        %v896 = vpop.f32.mrb[0].mxu0
        %897 = vmatprep.mubr.f32.mxu0 %v348
        %898 = vmatmul.mubr.f32.gmra.mrb[0].mxu0 %v316
        %v899 = vpop.f32.mrb[0].mxu0
        %v900 = vadd.f32 %v736, %v899
        %v901 = vpop.f32.mrb[0].mxu0
        %902 = vmatprep.mubr.f32.mxu0 %v349
        %903 = vmatmul.mubr.f32.gmra.mrb[0].mxu0 %v317
        %v904 = vpop.f32.mrb[0].mxu0
        %v905 = vadd.f32 %v736, %v904
        %v906 = vpop.f32.mrb[0].mxu0
        %907 = vmatprep.mubr.f32.mxu0 %v350
        %908 = vmatmul.mubr.f32.gmra.mrb[0].mxu0 %v318
        %v909 = vpop.f32.mrb[0].mxu0
        %v910 = vadd.f32 %v736, %v909
        %v911 = vpop.f32.mrb[0].mxu0
        %912 = vmatprep.mubr.f32.mxu0 %v351
        %913 = vmatmul.mubr.f32.gmra.mrb[0].mxu0 %v319
        %v914 = vpop.f32.mrb[0].mxu0
        %v915 = vadd.f32 %v736, %v914
        %v916 = vpop.f32.mrb[0].mxu0
        %917 = vmatprep.mubr.f32.mxu0 %v352
        %918 = vmatmul.mubr.f32.gmra.mrb[0].mxu0 %v320
        %v919 = vpop.f32.mrb[0].mxu0
        %v920 = vadd.f32 %v736, %v919
        %v921 = vpop.f32.mrb[0].mxu0
        %922 = vmatprep.mubr.f32.mxu0 %v353
        %923 = vmatmul.mubr.f32.gmra.mrb[0].mxu0 %v321
        %v924 = vpop.f32.mrb[0].mxu0
        %v925 = vadd.f32 %v736, %v924
        %v926 = vpop.f32.mrb[0].mxu0
        %927 = vmatprep.mubr.f32.mxu0 %v354
        %928 = vmatmul.mubr.f32.gmra.mrb[0].mxu0 %v322
        %v929 = vpop.f32.mrb[0].mxu0
        %v930 = vadd.f32 %v736, %v929
        %v931 = vpop.f32.mrb[0].mxu0
        %932 = vmatprep.mubr.f32.mxu0 %v355
        %933 = vmatmul.mubr.f32.gmra.mrb[0].mxu0 %v323
        %v934 = vpop.f32.mrb[0].mxu0
        %v935 = vadd.f32 %v736, %v934
        %v936 = vpop.f32.mrb[0].mxu0
        %937 = vmatprep.mubr.f32.mxu0 %v356
        %938 = vmatmul.mubr.f32.gmra.mrb[0].mxu0 %v324
        %v939 = vpop.f32.mrb[0].mxu0
        %v940 = vadd.f32 %v736, %v939
        %v941 = vpop.f32.mrb[0].mxu0
        %942 = vmatprep.mubr.f32.mxu0 %v357
        %943 = vmatmul.mubr.f32.gmra.mrb[0].mxu0 %v325
        %v944 = vpop.f32.mrb[0].mxu0
        %v945 = vadd.f32 %v736, %v944
        %v946 = vpop.f32.mrb[0].mxu0
        %947 = vmatprep.mubr.f32.mxu0 %v358
        %948 = vmatmul.mubr.f32.gmra.mrb[0].mxu0 %v326
        %v949 = vpop.f32.mrb[0].mxu0
        %v950 = vadd.f32 %v736, %v949
        %v951 = vpop.f32.mrb[0].mxu0
        %952 = vmatprep.mubr.f32.mxu0 %v359
        %953 = vmatmul.mubr.f32.gmra.mrb[0].mxu0 %v327
        %v954 = vpop.f32.mrb[0].mxu0
        %v955 = vadd.f32 %v736, %v954
        %v956 = vpop.f32.mrb[0].mxu0
        %957 = vmatprep.mubr.f32.mxu0 %v360
        %958 = vmatmul.mubr.f32.gmra.mrb[0].mxu0 %v328
        %v959 = vpop.f32.mrb[0].mxu0
        %v960 = vadd.f32 %v736, %v959
        %v961 = vpop.f32.mrb[0].mxu0
        %962 = vdwg.mxu0
        %963 = vmatprep.subr.mxu0 0.0
        %964 = vmatpush1.msra.mxu0 %v619
        %965 = vmatprep.subr.mxu0 0.0
        %966 = vmatpush1.msra.mxu0 %v620
        %967 = vmatprep.subr.mxu0 0.0
        %968 = vmatpush1.msra.mxu0 %v621
        %969 = vmatprep.subr.mxu0 0.0
        %970 = vmatpush1.msra.mxu0 %v622
        %971 = vmatprep.subr.mxu0 0.0
        %972 = vmatpush1.msra.mxu0 %v623
        %973 = vmatprep.subr.mxu0 0.0
        %974 = vmatpush1.msra.mxu0 %v624
        %975 = vmatprep.subr.mxu0 0.0
        %976 = vmatpush1.msra.mxu0 %v625
        %977 = vmatprep.subr.mxu0 0.0
        %978 = vmatpush1.msra.mxu0 %v626
        %979 = vmatprep.subr.mxu0 0.0
        %980 = vmatpush1.msra.mxu0 %v627
        %981 = vmatprep.subr.mxu0 0.0
        %982 = vmatpush1.msra.mxu0 %v628
        %983 = vmatprep.subr.mxu0 0.0
        %984 = vmatpush1.msra.mxu0 %v629
        %985 = vmatprep.subr.mxu0 0.0
        %986 = vmatpush1.msra.mxu0 %v630
        %987 = vmatprep.subr.mxu0 0.0
        %988 = vmatpush1.msra.mxu0 %v631
        %989 = vmatprep.subr.mxu0 0.0
        %990 = vmatpush1.msra.mxu0 %v632
        %991 = vmatprep.subr.mxu0 0.0
        %992 = vmatpush1.msra.mxu0 %v633
        %993 = vmatprep.subr.mxu0 0.0
        %994 = vmatpush1.msra.mxu0 %v634
        %995 = vmatprep.subr.mxu0 0.0
        %996 = vmatpush1.msra.mxu0 %v635
        %997 = vmatprep.subr.mxu0 0.0
        %998 = vmatpush1.msra.mxu0 %v636
        %999 = vmatprep.subr.mxu0 0.0
        %1000 = vmatpush1.msra.mxu0 %v637
        %1001 = vmatprep.subr.mxu0 0.0
        %1002 = vmatpush1.msra.mxu0 %v638
        %1003 = vmatprep.subr.mxu0 0.0
        %1004 = vmatpush1.msra.mxu0 %v639
        %1005 = vmatprep.subr.mxu0 0.0
        %1006 = vmatpush1.msra.mxu0 %v640
        %1007 = vmatprep.subr.mxu0 0.0
        %1008 = vmatpush1.msra.mxu0 %v641
        %1009 = vmatprep.subr.mxu0 0.0
        %1010 = vmatpush1.msra.mxu0 %v642
        %1011 = vmatprep.subr.mxu0 0.0
        %1012 = vmatpush1.msra.mxu0 %v643
        %1013 = vmatprep.subr.mxu0 0.0
        %1014 = vmatpush1.msra.mxu0 %v644
        %1015 = vmatprep.subr.mxu0 0.0
        %1016 = vmatpush1.msra.mxu0 %v645
        %1017 = vmatprep.subr.mxu0 0.0
        %1018 = vmatpush1.msra.mxu0 %v646
        %1019 = vmatprep.subr.mxu0 0.0
        %1020 = vmatpush1.msra.mxu0 %v647
        %1021 = vmatprep.subr.mxu0 0.0
        %1022 = vmatpush1.msra.mxu0 %v648
        %1023 = vmatprep.subr.mxu0 0.0
        %1024 = vmatpush1.msra.mxu0 %v649
        %1025 = vmatprep.subr.mxu0 0.0
        %1026 = vmatpush1.msra.mxu0 %v650
        %1027 = vmatprep.mubr.f32.mxu0 %v394
        %1028 = vmatmul.mubr.f32.gmra.mrb[0].mxu0 %v361
        %v1029 = vpop.f32.mrb[0].mxu0
        %v1030 = vadd.f32 %v805, %v1029
        %v1031 = vpop.f32.mrb[0].mxu0
        %1032 = vmatprep.mubr.f32.mxu0 %v395
        %1033 = vmatmul.mubr.f32.gmra.mrb[0].mxu0 %v362
        %v1034 = vpop.f32.mrb[0].mxu0
        %v1035 = vadd.f32 %v810, %v1034
        %v1036 = vpop.f32.mrb[0].mxu0
        %1037 = vmatprep.mubr.f32.mxu0 %v396
        %1038 = vmatmul.mubr.f32.gmra.mrb[0].mxu0 %v363
        %v1039 = vpop.f32.mrb[0].mxu0
        %v1040 = vadd.f32 %v815, %v1039
        %v1041 = vpop.f32.mrb[0].mxu0
        %1042 = vmatprep.mubr.f32.mxu0 %v397
        %1043 = vmatmul.mubr.f32.gmra.mrb[0].mxu0 %v364
        %v1044 = vpop.f32.mrb[0].mxu0
        %v1045 = vadd.f32 %v820, %v1044
        %v1046 = vpop.f32.mrb[0].mxu0
        %1047 = vmatprep.mubr.f32.mxu0 %v398
        %1048 = vmatmul.mubr.f32.gmra.mrb[0].mxu0 %v365
        %v1049 = vpop.f32.mrb[0].mxu0
        %v1050 = vadd.f32 %v825, %v1049
        %v1051 = vpop.f32.mrb[0].mxu0
        %1052 = vmatprep.mubr.f32.mxu0 %v399
        %1053 = vmatmul.mubr.f32.gmra.mrb[0].mxu0 %v366
        %v1054 = vpop.f32.mrb[0].mxu0
        %v1055 = vadd.f32 %v830, %v1054
        %v1056 = vpop.f32.mrb[0].mxu0
        %1057 = vmatprep.mubr.f32.mxu0 %v400
        %1058 = vmatmul.mubr.f32.gmra.mrb[0].mxu0 %v367
        %v1059 = vpop.f32.mrb[0].mxu0
        %v1060 = vadd.f32 %v835, %v1059
        %v1061 = vpop.f32.mrb[0].mxu0
        %1062 = vmatprep.mubr.f32.mxu0 %v401
        %1063 = vmatmul.mubr.f32.gmra.mrb[0].mxu0 %v368
        %v1064 = vpop.f32.mrb[0].mxu0
        %v1065 = vadd.f32 %v840, %v1064
        %v1066 = vpop.f32.mrb[0].mxu0
        %1067 = vmatprep.mubr.f32.mxu0 %v402
        %1068 = vmatmul.mubr.f32.gmra.mrb[0].mxu0 %v369
        %v1069 = vpop.f32.mrb[0].mxu0
        %v1070 = vadd.f32 %v845, %v1069
        %v1071 = vpop.f32.mrb[0].mxu0
        %1072 = vmatprep.mubr.f32.mxu0 %v403
        %1073 = vmatmul.mubr.f32.gmra.mrb[0].mxu0 %v370
        %v1074 = vpop.f32.mrb[0].mxu0
        %v1075 = vadd.f32 %v850, %v1074
        %v1076 = vpop.f32.mrb[0].mxu0
        %1077 = vmatprep.mubr.f32.mxu0 %v404
        %1078 = vmatmul.mubr.f32.gmra.mrb[0].mxu0 %v371
        %v1079 = vpop.f32.mrb[0].mxu0
        %v1080 = vadd.f32 %v855, %v1079
        %v1081 = vpop.f32.mrb[0].mxu0
        %1082 = vmatprep.mubr.f32.mxu0 %v405
        %1083 = vmatmul.mubr.f32.gmra.mrb[0].mxu0 %v372
        %v1084 = vpop.f32.mrb[0].mxu0
        %v1085 = vadd.f32 %v860, %v1084
        %v1086 = vpop.f32.mrb[0].mxu0
        %1087 = vmatprep.mubr.f32.mxu0 %v406
        %1088 = vmatmul.mubr.f32.gmra.mrb[0].mxu0 %v373
        %v1089 = vpop.f32.mrb[0].mxu0
        %v1090 = vadd.f32 %v865, %v1089
        %v1091 = vpop.f32.mrb[0].mxu0
        %1092 = vmatprep.mubr.f32.mxu0 %v407
        %1093 = vmatmul.mubr.f32.gmra.mrb[0].mxu0 %v374
        %v1094 = vpop.f32.mrb[0].mxu0
        %v1095 = vadd.f32 %v870, %v1094
        %v1096 = vpop.f32.mrb[0].mxu0
        %1097 = vmatprep.mubr.f32.mxu0 %v408
        %1098 = vmatmul.mubr.f32.gmra.mrb[0].mxu0 %v375
        %v1099 = vpop.f32.mrb[0].mxu0
        %v1100 = vadd.f32 %v875, %v1099
        %v1101 = vpop.f32.mrb[0].mxu0
        %1102 = vmatprep.mubr.f32.mxu0 %v409
        %1103 = vmatmul.mubr.f32.gmra.mrb[0].mxu0 %v376
        %v1104 = vpop.f32.mrb[0].mxu0
        %v1105 = vadd.f32 %v880, %v1104
        %v1106 = vpop.f32.mrb[0].mxu0
        %1107 = vmatprep.mubr.f32.mxu0 %v410
        %1108 = vmatmul.mubr.f32.gmra.mrb[0].mxu0 %v377
        %v1109 = vpop.f32.mrb[0].mxu0
        %v1110 = vadd.f32 %v885, %v1109
        %v1111 = vpop.f32.mrb[0].mxu0
        %1112 = vmatprep.mubr.f32.mxu0 %v411
        %1113 = vmatmul.mubr.f32.gmra.mrb[0].mxu0 %v378
        %v1114 = vpop.f32.mrb[0].mxu0
        %v1115 = vadd.f32 %v890, %v1114
        %v1116 = vpop.f32.mrb[0].mxu0
        %1117 = vmatprep.mubr.f32.mxu0 %v412
        %1118 = vmatmul.mubr.f32.gmra.mrb[0].mxu0 %v379
        %v1119 = vpop.f32.mrb[0].mxu0
        %v1120 = vadd.f32 %v895, %v1119
        %v1121 = vpop.f32.mrb[0].mxu0
        %1122 = vmatprep.mubr.f32.mxu0 %v413
        %1123 = vmatmul.mubr.f32.gmra.mrb[0].mxu0 %v380
        %v1124 = vpop.f32.mrb[0].mxu0
        %v1125 = vadd.f32 %v900, %v1124
        %v1126 = vpop.f32.mrb[0].mxu0
        %1127 = vmatprep.mubr.f32.mxu0 %v414
        %1128 = vmatmul.mubr.f32.gmra.mrb[0].mxu0 %v381
        %v1129 = vpop.f32.mrb[0].mxu0
        %v1130 = vadd.f32 %v905, %v1129
        %v1131 = vpop.f32.mrb[0].mxu0
        %1132 = vmatprep.mubr.f32.mxu0 %v415
        %1133 = vmatmul.mubr.f32.gmra.mrb[0].mxu0 %v382
        %v1134 = vpop.f32.mrb[0].mxu0
        %v1135 = vadd.f32 %v910, %v1134
        %v1136 = vpop.f32.mrb[0].mxu0
        %1137 = vmatprep.mubr.f32.mxu0 %v416
        %1138 = vmatmul.mubr.f32.gmra.mrb[0].mxu0 %v383
        %v1139 = vpop.f32.mrb[0].mxu0
        %v1140 = vadd.f32 %v915, %v1139
        %v1141 = vpop.f32.mrb[0].mxu0
        %1142 = vmatprep.mubr.f32.mxu0 %v417
        %1143 = vmatmul.mubr.f32.gmra.mrb[0].mxu0 %v384
        %v1144 = vpop.f32.mrb[0].mxu0
        %v1145 = vadd.f32 %v920, %v1144
        %v1146 = vpop.f32.mrb[0].mxu0
        %1147 = vmatprep.mubr.f32.mxu0 %v418
        %1148 = vmatmul.mubr.f32.gmra.mrb[0].mxu0 %v385
        %v1149 = vpop.f32.mrb[0].mxu0
        %v1150 = vadd.f32 %v925, %v1149
        %v1151 = vpop.f32.mrb[0].mxu0
        %1152 = vmatprep.mubr.f32.mxu0 %v419
        %1153 = vmatmul.mubr.f32.gmra.mrb[0].mxu0 %v386
        %v1154 = vpop.f32.mrb[0].mxu0
        %v1155 = vadd.f32 %v930, %v1154
        %v1156 = vpop.f32.mrb[0].mxu0
        %1157 = vmatprep.mubr.f32.mxu0 %v420
        %1158 = vmatmul.mubr.f32.gmra.mrb[0].mxu0 %v387
        %v1159 = vpop.f32.mrb[0].mxu0
        %v1160 = vadd.f32 %v935, %v1159
        %v1161 = vpop.f32.mrb[0].mxu0
        %1162 = vmatprep.mubr.f32.mxu0 %v421
        %1163 = vmatmul.mubr.f32.gmra.mrb[0].mxu0 %v388
        %v1164 = vpop.f32.mrb[0].mxu0
        %v1165 = vadd.f32 %v940, %v1164
        %v1166 = vpop.f32.mrb[0].mxu0
        %1167 = vmatprep.mubr.f32.mxu0 %v422
        %1168 = vmatmul.mubr.f32.gmra.mrb[0].mxu0 %v389
        %v1169 = vpop.f32.mrb[0].mxu0
        %v1170 = vadd.f32 %v945, %v1169
        %v1171 = vpop.f32.mrb[0].mxu0
        %1172 = vmatprep.mubr.f32.mxu0 %v423
        %1173 = vmatmul.mubr.f32.gmra.mrb[0].mxu0 %v390
        %v1174 = vpop.f32.mrb[0].mxu0
        %v1175 = vadd.f32 %v950, %v1174
        %v1176 = vpop.f32.mrb[0].mxu0
        %1177 = vmatprep.mubr.f32.mxu0 %v424
        %1178 = vmatmul.mubr.f32.gmra.mrb[0].mxu0 %v391
        %v1179 = vpop.f32.mrb[0].mxu0
        %v1180 = vadd.f32 %v955, %v1179
        %v1181 = vpop.f32.mrb[0].mxu0
        %1182 = vmatprep.mubr.f32.mxu0 %v425
        %1183 = vmatmul.mubr.f32.gmra.mrb[0].mxu0 %v392
        %v1184 = vpop.f32.mrb[0].mxu0
        %v1185 = vadd.f32 %v960, %v1184
        %v1186 = vpop.f32.mrb[0].mxu0
        %1187 = vdwg.mxu0
        %1188 = vmatprep.subr.mxu0 0.0
        %1189 = vmatpush1.msra.mxu0 %v651
        %1190 = vmatprep.subr.mxu0 0.0
        %1191 = vmatpush1.msra.mxu0 %v652
        %1192 = vmatprep.subr.mxu0 0.0
        %1193 = vmatpush1.msra.mxu0 %v653
        %1194 = vmatprep.subr.mxu0 0.0
        %1195 = vmatpush1.msra.mxu0 %v654
        %1196 = vmatprep.subr.mxu0 0.0
        %1197 = vmatpush1.msra.mxu0 %v655
        %1198 = vmatprep.subr.mxu0 0.0
        %1199 = vmatpush1.msra.mxu0 %v656
        %1200 = vmatprep.subr.mxu0 0.0
        %1201 = vmatpush1.msra.mxu0 %v657
        %1202 = vmatprep.subr.mxu0 0.0
        %1203 = vmatpush1.msra.mxu0 %v658
        %1204 = vmatprep.subr.mxu0 0.0
        %1205 = vmatpush1.msra.mxu0 %v659
        %1206 = vmatprep.subr.mxu0 0.0
        %1207 = vmatpush1.msra.mxu0 %v660
        %1208 = vmatprep.subr.mxu0 0.0
        %1209 = vmatpush1.msra.mxu0 %v661
        %1210 = vmatprep.subr.mxu0 0.0
        %1211 = vmatpush1.msra.mxu0 %v662
        %1212 = vmatprep.subr.mxu0 0.0
        %1213 = vmatpush1.msra.mxu0 %v663
        %1214 = vmatprep.subr.mxu0 0.0
        %1215 = vmatpush1.msra.mxu0 %v664
        %1216 = vmatprep.subr.mxu0 0.0
        %1217 = vmatpush1.msra.mxu0 %v665
        %1218 = vmatprep.subr.mxu0 0.0
        %1219 = vmatpush1.msra.mxu0 %v666
        %1220 = vmatprep.subr.mxu0 0.0
        %1221 = vmatpush1.msra.mxu0 %v667
        %1222 = vmatprep.subr.mxu0 0.0
        %1223 = vmatpush1.msra.mxu0 %v668
        %1224 = vmatprep.subr.mxu0 0.0
        %1225 = vmatpush1.msra.mxu0 %v669
        %1226 = vmatprep.subr.mxu0 0.0
        %1227 = vmatpush1.msra.mxu0 %v670
        %1228 = vmatprep.subr.mxu0 0.0
        %1229 = vmatpush1.msra.mxu0 %v671
        %1230 = vmatprep.subr.mxu0 0.0
        %1231 = vmatpush1.msra.mxu0 %v672
        %1232 = vmatprep.subr.mxu0 0.0
        %1233 = vmatpush1.msra.mxu0 %v673
        %1234 = vmatprep.subr.mxu0 0.0
        %1235 = vmatpush1.msra.mxu0 %v674
        %1236 = vmatprep.subr.mxu0 0.0
        %1237 = vmatpush1.msra.mxu0 %v675
        %1238 = vmatprep.subr.mxu0 0.0
        %1239 = vmatpush1.msra.mxu0 %v676
        %1240 = vmatprep.subr.mxu0 0.0
        %1241 = vmatpush1.msra.mxu0 %v677
        %1242 = vmatprep.subr.mxu0 0.0
        %1243 = vmatpush1.msra.mxu0 %v678
        %1244 = vmatprep.subr.mxu0 0.0
        %1245 = vmatpush1.msra.mxu0 %v679
        %1246 = vmatprep.subr.mxu0 0.0
        %1247 = vmatpush1.msra.mxu0 %v680
        %1248 = vmatprep.subr.mxu0 0.0
        %1249 = vmatpush1.msra.mxu0 %v681
        %1250 = vmatprep.subr.mxu0 0.0
        %1251 = vmatpush1.msra.mxu0 %v682
        %1252 = vmatprep.mubr.f32.mxu0 %v458
        %1253 = vmatmul.mubr.f32.gmra.mrb[0].mxu0 %v426
        %v1254 = vpop.f32.mrb[0].mxu0
        %v1255 = vadd.f32 %v1030, %v1254
        %v1256 = vpop.f32.mrb[0].mxu0
        %1257 = vmatprep.mubr.f32.mxu0 %v459
        %1258 = vmatmul.mubr.f32.gmra.mrb[0].mxu0 %v427
        %v1259 = vpop.f32.mrb[0].mxu0
        %v1260 = vadd.f32 %v1035, %v1259
        %v1261 = vpop.f32.mrb[0].mxu0
        %1262 = vmatprep.mubr.f32.mxu0 %v460
        %1263 = vmatmul.mubr.f32.gmra.mrb[0].mxu0 %v428
        %v1264 = vpop.f32.mrb[0].mxu0
        %v1265 = vadd.f32 %v1040, %v1264
        %v1266 = vpop.f32.mrb[0].mxu0
        %1267 = vmatprep.mubr.f32.mxu0 %v461
        %1268 = vmatmul.mubr.f32.gmra.mrb[0].mxu0 %v429
        %v1269 = vpop.f32.mrb[0].mxu0
        %v1270 = vadd.f32 %v1045, %v1269
        %v1271 = vpop.f32.mrb[0].mxu0
        %1272 = vmatprep.mubr.f32.mxu0 %v462
        %1273 = vmatmul.mubr.f32.gmra.mrb[0].mxu0 %v430
        %v1274 = vpop.f32.mrb[0].mxu0
        %v1275 = vadd.f32 %v1050, %v1274
        %v1276 = vpop.f32.mrb[0].mxu0
        %1277 = vmatprep.mubr.f32.mxu0 %v463
        %1278 = vmatmul.mubr.f32.gmra.mrb[0].mxu0 %v431
        %v1279 = vpop.f32.mrb[0].mxu0
        %v1280 = vadd.f32 %v1055, %v1279
        %v1281 = vpop.f32.mrb[0].mxu0
        %1282 = vmatprep.mubr.f32.mxu0 %v464
        %1283 = vmatmul.mubr.f32.gmra.mrb[0].mxu0 %v432
        %v1284 = vpop.f32.mrb[0].mxu0
        %v1285 = vadd.f32 %v1060, %v1284
        %v1286 = vpop.f32.mrb[0].mxu0
        %1287 = vmatprep.mubr.f32.mxu0 %v465
        %1288 = vmatmul.mubr.f32.gmra.mrb[0].mxu0 %v433
        %v1289 = vpop.f32.mrb[0].mxu0
        %v1290 = vadd.f32 %v1065, %v1289
        %v1291 = vpop.f32.mrb[0].mxu0
        %1292 = vmatprep.mubr.f32.mxu0 %v466
        %1293 = vmatmul.mubr.f32.gmra.mrb[0].mxu0 %v434
        %v1294 = vpop.f32.mrb[0].mxu0
        %v1295 = vadd.f32 %v1070, %v1294
        %v1296 = vpop.f32.mrb[0].mxu0
        %1297 = vmatprep.mubr.f32.mxu0 %v467
        %1298 = vmatmul.mubr.f32.gmra.mrb[0].mxu0 %v435
        %v1299 = vpop.f32.mrb[0].mxu0
        %v1300 = vadd.f32 %v1075, %v1299
        %v1301 = vpop.f32.mrb[0].mxu0
        %1302 = vmatprep.mubr.f32.mxu0 %v468
        %1303 = vmatmul.mubr.f32.gmra.mrb[0].mxu0 %v436
        %v1304 = vpop.f32.mrb[0].mxu0
        %v1305 = vadd.f32 %v1080, %v1304
        %v1306 = vpop.f32.mrb[0].mxu0
        %1307 = vmatprep.mubr.f32.mxu0 %v469
        %1308 = vmatmul.mubr.f32.gmra.mrb[0].mxu0 %v437
        %v1309 = vpop.f32.mrb[0].mxu0
        %v1310 = vadd.f32 %v1085, %v1309
        %v1311 = vpop.f32.mrb[0].mxu0
        %1312 = vmatprep.mubr.f32.mxu0 %v470
        %1313 = vmatmul.mubr.f32.gmra.mrb[0].mxu0 %v438
        %v1314 = vpop.f32.mrb[0].mxu0
        %v1315 = vadd.f32 %v1090, %v1314
        %v1316 = vpop.f32.mrb[0].mxu0
        %1317 = vmatprep.mubr.f32.mxu0 %v471
        %1318 = vmatmul.mubr.f32.gmra.mrb[0].mxu0 %v439
        %v1319 = vpop.f32.mrb[0].mxu0
        %v1320 = vadd.f32 %v1095, %v1319
        %v1321 = vpop.f32.mrb[0].mxu0
        %1322 = vmatprep.mubr.f32.mxu0 %v472
        %1323 = vmatmul.mubr.f32.gmra.mrb[0].mxu0 %v440
        %v1324 = vpop.f32.mrb[0].mxu0
        %v1325 = vadd.f32 %v1100, %v1324
        %v1326 = vpop.f32.mrb[0].mxu0
        %1327 = vmatprep.mubr.f32.mxu0 %v473
        %1328 = vmatmul.mubr.f32.gmra.mrb[0].mxu0 %v441
        %v1329 = vpop.f32.mrb[0].mxu0
        %v1330 = vadd.f32 %v1105, %v1329
        %v1331 = vpop.f32.mrb[0].mxu0
        %1332 = vmatprep.mubr.f32.mxu0 %v474
        %1333 = vmatmul.mubr.f32.gmra.mrb[0].mxu0 %v442
        %v1334 = vpop.f32.mrb[0].mxu0
        %v1335 = vadd.f32 %v1110, %v1334
        %v1336 = vpop.f32.mrb[0].mxu0
        %1337 = vmatprep.mubr.f32.mxu0 %v475
        %1338 = vmatmul.mubr.f32.gmra.mrb[0].mxu0 %v443
        %v1339 = vpop.f32.mrb[0].mxu0
        %v1340 = vadd.f32 %v1115, %v1339
        %v1341 = vpop.f32.mrb[0].mxu0
        %1342 = vmatprep.mubr.f32.mxu0 %v476
        %1343 = vmatmul.mubr.f32.gmra.mrb[0].mxu0 %v444
        %v1344 = vpop.f32.mrb[0].mxu0
        %v1345 = vadd.f32 %v1120, %v1344
        %v1346 = vpop.f32.mrb[0].mxu0
        %1347 = vmatprep.mubr.f32.mxu0 %v477
        %1348 = vmatmul.mubr.f32.gmra.mrb[0].mxu0 %v445
        %v1349 = vpop.f32.mrb[0].mxu0
        %v1350 = vadd.f32 %v1125, %v1349
        %v1351 = vpop.f32.mrb[0].mxu0
        %1352 = vmatprep.mubr.f32.mxu0 %v478
        %1353 = vmatmul.mubr.f32.gmra.mrb[0].mxu0 %v446
        %v1354 = vpop.f32.mrb[0].mxu0
        %v1355 = vadd.f32 %v1130, %v1354
        %v1356 = vpop.f32.mrb[0].mxu0
        %1357 = vmatprep.mubr.f32.mxu0 %v479
        %1358 = vmatmul.mubr.f32.gmra.mrb[0].mxu0 %v447
        %v1359 = vpop.f32.mrb[0].mxu0
        %v1360 = vadd.f32 %v1135, %v1359
        %v1361 = vpop.f32.mrb[0].mxu0
        %1362 = vmatprep.mubr.f32.mxu0 %v480
        %1363 = vmatmul.mubr.f32.gmra.mrb[0].mxu0 %v448
        %v1364 = vpop.f32.mrb[0].mxu0
        %v1365 = vadd.f32 %v1140, %v1364
        %v1366 = vpop.f32.mrb[0].mxu0
        %1367 = vmatprep.mubr.f32.mxu0 %v481
        %1368 = vmatmul.mubr.f32.gmra.mrb[0].mxu0 %v449
        %v1369 = vpop.f32.mrb[0].mxu0
        %v1370 = vadd.f32 %v1145, %v1369
        %v1371 = vpop.f32.mrb[0].mxu0
        %1372 = vmatprep.mubr.f32.mxu0 %v482
        %1373 = vmatmul.mubr.f32.gmra.mrb[0].mxu0 %v450
        %v1374 = vpop.f32.mrb[0].mxu0
        %v1375 = vadd.f32 %v1150, %v1374
        %v1376 = vpop.f32.mrb[0].mxu0
        %1377 = vmatprep.mubr.f32.mxu0 %v483
        %1378 = vmatmul.mubr.f32.gmra.mrb[0].mxu0 %v451
        %v1379 = vpop.f32.mrb[0].mxu0
        %v1380 = vadd.f32 %v1155, %v1379
        %v1381 = vpop.f32.mrb[0].mxu0
        %1382 = vmatprep.mubr.f32.mxu0 %v484
        %1383 = vmatmul.mubr.f32.gmra.mrb[0].mxu0 %v452
        %v1384 = vpop.f32.mrb[0].mxu0
        %v1385 = vadd.f32 %v1160, %v1384
        %v1386 = vpop.f32.mrb[0].mxu0
        %1387 = vmatprep.mubr.f32.mxu0 %v485
        %1388 = vmatmul.mubr.f32.gmra.mrb[0].mxu0 %v453
        %v1389 = vpop.f32.mrb[0].mxu0
        %v1390 = vadd.f32 %v1165, %v1389
        %v1391 = vpop.f32.mrb[0].mxu0
        %1392 = vmatprep.mubr.f32.mxu0 %v486
        %1393 = vmatmul.mubr.f32.gmra.mrb[0].mxu0 %v454
        %v1394 = vpop.f32.mrb[0].mxu0
        %v1395 = vadd.f32 %v1170, %v1394
        %v1396 = vpop.f32.mrb[0].mxu0
        %1397 = vmatprep.mubr.f32.mxu0 %v487
        %1398 = vmatmul.mubr.f32.gmra.mrb[0].mxu0 %v455
        %v1399 = vpop.f32.mrb[0].mxu0
        %v1400 = vadd.f32 %v1175, %v1399
        %v1401 = vpop.f32.mrb[0].mxu0
        %1402 = vmatprep.mubr.f32.mxu0 %v488
        %1403 = vmatmul.mubr.f32.gmra.mrb[0].mxu0 %v456
        %v1404 = vpop.f32.mrb[0].mxu0
        %v1405 = vadd.f32 %v1180, %v1404
        %v1406 = vpop.f32.mrb[0].mxu0
        %1407 = vmatprep.mubr.f32.mxu0 %v489
        %1408 = vmatmul.mubr.f32.gmra.mrb[0].mxu0 %v457
        %v1409 = vpop.f32.mrb[0].mxu0
        %v1410 = vadd.f32 %v1185, %v1409
        %v1411 = vpop.f32.mrb[0].mxu0
        %1412 = vdwg.mxu0
        %1413 = vmatprep.subr.mxu0 0.0
        %1414 = vmatpush1.msra.mxu0 %v683
        %1415 = vmatprep.subr.mxu0 0.0
        %1416 = vmatpush1.msra.mxu0 %v684
        %1417 = vmatprep.subr.mxu0 0.0
        %1418 = vmatpush1.msra.mxu0 %v685
        %1419 = vmatprep.subr.mxu0 0.0
        %1420 = vmatpush1.msra.mxu0 %v686
        %1421 = vmatprep.subr.mxu0 0.0
        %1422 = vmatpush1.msra.mxu0 %v687
        %1423 = vmatprep.subr.mxu0 0.0
        %1424 = vmatpush1.msra.mxu0 %v688
        %1425 = vmatprep.subr.mxu0 0.0
        %1426 = vmatpush1.msra.mxu0 %v689
        %1427 = vmatprep.subr.mxu0 0.0
        %1428 = vmatpush1.msra.mxu0 %v690
        %1429 = vmatprep.subr.mxu0 0.0
        %1430 = vmatpush1.msra.mxu0 %v691
        %1431 = vmatprep.subr.mxu0 0.0
        %1432 = vmatpush1.msra.mxu0 %v692
        %1433 = vmatprep.subr.mxu0 0.0
        %1434 = vmatpush1.msra.mxu0 %v693
        %1435 = vmatprep.subr.mxu0 0.0
        %1436 = vmatpush1.msra.mxu0 %v694
        %1437 = vmatprep.subr.mxu0 0.0
        %1438 = vmatpush1.msra.mxu0 %v695
        %1439 = vmatprep.subr.mxu0 0.0
        %1440 = vmatpush1.msra.mxu0 %v696
        %1441 = vmatprep.subr.mxu0 0.0
        %1442 = vmatpush1.msra.mxu0 %v697
        %1443 = vmatprep.subr.mxu0 0.0
        %1444 = vmatpush1.msra.mxu0 %v698
        %1445 = vmatprep.subr.mxu0 0.0
        %1446 = vmatpush1.msra.mxu0 %v699
        %1447 = vmatprep.subr.mxu0 0.0
        %1448 = vmatpush1.msra.mxu0 %v700
        %1449 = vmatprep.subr.mxu0 0.0
        %1450 = vmatpush1.msra.mxu0 %v701
        %1451 = vmatprep.subr.mxu0 0.0
        %1452 = vmatpush1.msra.mxu0 %v702
        %1453 = vmatprep.subr.mxu0 0.0
        %1454 = vmatpush1.msra.mxu0 %v703
        %1455 = vmatprep.subr.mxu0 0.0
        %1456 = vmatpush1.msra.mxu0 %v704
        %1457 = vmatprep.subr.mxu0 0.0
        %1458 = vmatpush1.msra.mxu0 %v705
        %1459 = vmatprep.subr.mxu0 0.0
        %1460 = vmatpush1.msra.mxu0 %v706
        %1461 = vmatprep.subr.mxu0 0.0
        %1462 = vmatpush1.msra.mxu0 %v707
        %1463 = vmatprep.subr.mxu0 0.0
        %1464 = vmatpush1.msra.mxu0 %v708
        %1465 = vmatprep.subr.mxu0 0.0
        %1466 = vmatpush1.msra.mxu0 %v709
        %1467 = vmatprep.subr.mxu0 0.0
        %1468 = vmatpush1.msra.mxu0 %v710
        %1469 = vmatprep.subr.mxu0 0.0
        %1470 = vmatpush1.msra.mxu0 %v711
        %1471 = vmatprep.subr.mxu0 0.0
        %1472 = vmatpush1.msra.mxu0 %v712
        %1473 = vmatprep.subr.mxu0 0.0
        %1474 = vmatpush1.msra.mxu0 %v713
        %1475 = vmatprep.subr.mxu0 0.0
        %1476 = vmatpush1.msra.mxu0 %v714
        %1477 = vmatprep.mubr.f32.mxu0 %v523
        %1478 = vmatmul.mubr.f32.gmra.mrb[0].mxu0 %v491
        %v1479 = vpop.f32.mrb[0].mxu0
        %v1480 = vadd.f32 %v1255, %v1479
        %v1481 = vpop.f32.mrb[0].mxu0
        %1482 = vmatprep.mubr.f32.mxu0 %v524
        %1483 = vmatmul.mubr.f32.gmra.mrb[0].mxu0 %v492
        %v1484 = vpop.f32.mrb[0].mxu0
        %v1485 = vadd.f32 %v1260, %v1484
        %v1486 = vpop.f32.mrb[0].mxu0
        %1487 = vmatprep.mubr.f32.mxu0 %v525
        %1488 = vmatmul.mubr.f32.gmra.mrb[0].mxu0 %v493
        %v1489 = vpop.f32.mrb[0].mxu0
        %v1490 = vadd.f32 %v1265, %v1489
        %v1491 = vpop.f32.mrb[0].mxu0
        %1492 = vmatprep.mubr.f32.mxu0 %v526
        %1493 = vmatmul.mubr.f32.gmra.mrb[0].mxu0 %v494
        %v1494 = vpop.f32.mrb[0].mxu0
        %v1495 = vadd.f32 %v1270, %v1494
        %v1496 = vpop.f32.mrb[0].mxu0
        %1497 = vmatprep.mubr.f32.mxu0 %v527
        %1498 = vmatmul.mubr.f32.gmra.mrb[0].mxu0 %v495
        %v1499 = vpop.f32.mrb[0].mxu0
        %v1500 = vadd.f32 %v1275, %v1499
        %v1501 = vpop.f32.mrb[0].mxu0
        %1502 = vmatprep.mubr.f32.mxu0 %v528
        %1503 = vmatmul.mubr.f32.gmra.mrb[0].mxu0 %v496
        %v1504 = vpop.f32.mrb[0].mxu0
        %v1505 = vadd.f32 %v1280, %v1504
        %v1506 = vpop.f32.mrb[0].mxu0
        %1507 = vmatprep.mubr.f32.mxu0 %v529
        %1508 = vmatmul.mubr.f32.gmra.mrb[0].mxu0 %v497
        %v1509 = vpop.f32.mrb[0].mxu0
        %v1510 = vadd.f32 %v1285, %v1509
        %v1511 = vpop.f32.mrb[0].mxu0
        %1512 = vmatprep.mubr.f32.mxu0 %v530
        %1513 = vmatmul.mubr.f32.gmra.mrb[0].mxu0 %v498
        %v1514 = vpop.f32.mrb[0].mxu0
        %v1515 = vadd.f32 %v1290, %v1514
        %v1516 = vpop.f32.mrb[0].mxu0
        %1517 = vmatprep.mubr.f32.mxu0 %v531
        %1518 = vmatmul.mubr.f32.gmra.mrb[0].mxu0 %v499
        %v1519 = vpop.f32.mrb[0].mxu0
        %v1520 = vadd.f32 %v1295, %v1519
        %v1521 = vpop.f32.mrb[0].mxu0
        %1522 = vmatprep.mubr.f32.mxu0 %v532
        %1523 = vmatmul.mubr.f32.gmra.mrb[0].mxu0 %v500
        %v1524 = vpop.f32.mrb[0].mxu0
        %v1525 = vadd.f32 %v1300, %v1524
        %v1526 = vpop.f32.mrb[0].mxu0
        %1527 = vmatprep.mubr.f32.mxu0 %v533
        %1528 = vmatmul.mubr.f32.gmra.mrb[0].mxu0 %v501
        %v1529 = vpop.f32.mrb[0].mxu0
        %v1530 = vadd.f32 %v1305, %v1529
        %v1531 = vpop.f32.mrb[0].mxu0
        %1532 = vmatprep.mubr.f32.mxu0 %v534
        %1533 = vmatmul.mubr.f32.gmra.mrb[0].mxu0 %v502
        %v1534 = vpop.f32.mrb[0].mxu0
        %v1535 = vadd.f32 %v1310, %v1534
        %v1536 = vpop.f32.mrb[0].mxu0
        %1537 = vmatprep.mubr.f32.mxu0 %v535
        %1538 = vmatmul.mubr.f32.gmra.mrb[0].mxu0 %v503
        %v1539 = vpop.f32.mrb[0].mxu0
        %v1540 = vadd.f32 %v1315, %v1539
        %v1541 = vpop.f32.mrb[0].mxu0
        %1542 = vmatprep.mubr.f32.mxu0 %v536
        %1543 = vmatmul.mubr.f32.gmra.mrb[0].mxu0 %v504
        %v1544 = vpop.f32.mrb[0].mxu0
        %v1545 = vadd.f32 %v1320, %v1544
        %v1546 = vpop.f32.mrb[0].mxu0
        %1547 = vmatprep.mubr.f32.mxu0 %v537
        %1548 = vmatmul.mubr.f32.gmra.mrb[0].mxu0 %v505
        %v1549 = vpop.f32.mrb[0].mxu0
        %v1550 = vadd.f32 %v1325, %v1549
        %v1551 = vpop.f32.mrb[0].mxu0
        %1552 = vmatprep.mubr.f32.mxu0 %v538
        %1553 = vmatmul.mubr.f32.gmra.mrb[0].mxu0 %v506
        %v1554 = vpop.f32.mrb[0].mxu0
        %v1555 = vadd.f32 %v1330, %v1554
        %v1556 = vpop.f32.mrb[0].mxu0
        %1557 = vmatprep.mubr.f32.mxu0 %v539
        %1558 = vmatmul.mubr.f32.gmra.mrb[0].mxu0 %v507
        %v1559 = vpop.f32.mrb[0].mxu0
        %v1560 = vadd.f32 %v1335, %v1559
        %v1561 = vpop.f32.mrb[0].mxu0
        %1562 = vmatprep.mubr.f32.mxu0 %v540
        %1563 = vmatmul.mubr.f32.gmra.mrb[0].mxu0 %v508
        %v1564 = vpop.f32.mrb[0].mxu0
        %v1565 = vadd.f32 %v1340, %v1564
        %v1566 = vpop.f32.mrb[0].mxu0
        %1567 = vmatprep.mubr.f32.mxu0 %v541
        %1568 = vmatmul.mubr.f32.gmra.mrb[0].mxu0 %v509
        %v1569 = vpop.f32.mrb[0].mxu0
        %v1570 = vadd.f32 %v1345, %v1569
        %v1571 = vpop.f32.mrb[0].mxu0
        %1572 = vmatprep.mubr.f32.mxu0 %v542
        %1573 = vmatmul.mubr.f32.gmra.mrb[0].mxu0 %v510
        %v1574 = vpop.f32.mrb[0].mxu0
        %v1575 = vadd.f32 %v1350, %v1574
        %v1576 = vpop.f32.mrb[0].mxu0
        %1577 = vmatprep.mubr.f32.mxu0 %v543
        %1578 = vmatmul.mubr.f32.gmra.mrb[0].mxu0 %v511
        %v1579 = vpop.f32.mrb[0].mxu0
        %v1580 = vadd.f32 %v1355, %v1579
        %v1581 = vpop.f32.mrb[0].mxu0
        %1582 = vmatprep.mubr.f32.mxu0 %v544
        %1583 = vmatmul.mubr.f32.gmra.mrb[0].mxu0 %v512
        %v1584 = vpop.f32.mrb[0].mxu0
        %v1585 = vadd.f32 %v1360, %v1584
        %v1586 = vpop.f32.mrb[0].mxu0
        %1587 = vmatprep.mubr.f32.mxu0 %v545
        %1588 = vmatmul.mubr.f32.gmra.mrb[0].mxu0 %v513
        %v1589 = vpop.f32.mrb[0].mxu0
        %v1590 = vadd.f32 %v1365, %v1589
        %v1591 = vpop.f32.mrb[0].mxu0
        %1592 = vmatprep.mubr.f32.mxu0 %v546
        %1593 = vmatmul.mubr.f32.gmra.mrb[0].mxu0 %v514
        %v1594 = vpop.f32.mrb[0].mxu0
        %v1595 = vadd.f32 %v1370, %v1594
        %v1596 = vpop.f32.mrb[0].mxu0
        %1597 = vmatprep.mubr.f32.mxu0 %v547
        %1598 = vmatmul.mubr.f32.gmra.mrb[0].mxu0 %v515
        %v1599 = vpop.f32.mrb[0].mxu0
        %v1600 = vadd.f32 %v1375, %v1599
        %v1601 = vpop.f32.mrb[0].mxu0
        %1602 = vmatprep.mubr.f32.mxu0 %v548
        %1603 = vmatmul.mubr.f32.gmra.mrb[0].mxu0 %v516
        %v1604 = vpop.f32.mrb[0].mxu0
        %v1605 = vadd.f32 %v1380, %v1604
        %v1606 = vpop.f32.mrb[0].mxu0
        %1607 = vmatprep.mubr.f32.mxu0 %v549
        %1608 = vmatmul.mubr.f32.gmra.mrb[0].mxu0 %v517
        %v1609 = vpop.f32.mrb[0].mxu0
        %v1610 = vadd.f32 %v1385, %v1609
        %v1611 = vpop.f32.mrb[0].mxu0
        %1612 = vmatprep.mubr.f32.mxu0 %v550
        %1613 = vmatmul.mubr.f32.gmra.mrb[0].mxu0 %v518
        %v1614 = vpop.f32.mrb[0].mxu0
        %v1615 = vadd.f32 %v1390, %v1614
        %v1616 = vpop.f32.mrb[0].mxu0
        %1617 = vmatprep.mubr.f32.mxu0 %v551
        %1618 = vmatmul.mubr.f32.gmra.mrb[0].mxu0 %v519
        %v1619 = vpop.f32.mrb[0].mxu0
        %v1620 = vadd.f32 %v1395, %v1619
        %v1621 = vpop.f32.mrb[0].mxu0
        %1622 = vmatprep.mubr.f32.mxu0 %v552
        %1623 = vmatmul.mubr.f32.gmra.mrb[0].mxu0 %v520
        %v1624 = vpop.f32.mrb[0].mxu0
        %v1625 = vadd.f32 %v1400, %v1624
        %v1626 = vpop.f32.mrb[0].mxu0
        %1627 = vmatprep.mubr.f32.mxu0 %v553
        %1628 = vmatmul.mubr.f32.gmra.mrb[0].mxu0 %v521
        %v1629 = vpop.f32.mrb[0].mxu0
        %v1630 = vadd.f32 %v1405, %v1629
        %v1631 = vpop.f32.mrb[0].mxu0
        %1632 = vmatprep.mubr.f32.mxu0 %v554
        %1633 = vmatmul.mubr.f32.gmra.mrb[0].mxu0 %v522
        %v1634 = vpop.f32.mrb[0].mxu0
        %v1635 = vadd.f32 %v1410, %v1634
        %v1636 = vpop.f32.mrb[0].mxu0
        %1637 = vdwg.mxu0
        %1638 = vmatprep.subr.mxu0 0.0
        %1639 = vmatpush1.msra.mxu0 %v715
        %1640 = vmatprep.subr.mxu0 0.0
        %1641 = vmatpush1.msra.mxu0 %v716
        %1642 = vmatprep.subr.mxu0 0.0
        %1643 = vmatpush1.msra.mxu0 %v717
        %1644 = vmatprep.subr.mxu0 0.0
        %1645 = vmatpush1.msra.mxu0 %v718
        %1646 = vmatprep.subr.mxu0 0.0
        %1647 = vmatpush1.msra.mxu0 %v719
        %1648 = vmatprep.subr.mxu0 0.0
        %1649 = vmatpush1.msra.mxu0 %v720
        %1650 = vmatprep.subr.mxu0 0.0
        %1651 = vmatpush1.msra.mxu0 %v721
        %1652 = vmatprep.subr.mxu0 0.0
        %1653 = vmatpush1.msra.mxu0 %v722
        %1654 = vmatprep.subr.mxu0 0.0
        %1655 = vmatpush1.msra.mxu0 %v723
        %1656 = vmatprep.subr.mxu0 0.0
        %1657 = vmatpush1.msra.mxu0 %v724
        %1658 = vmatprep.subr.mxu0 0.0
        %1659 = vmatpush1.msra.mxu0 %v725
        %1660 = vmatprep.subr.mxu0 0.0
        %1661 = vmatpush1.msra.mxu0 %v726
        %1662 = vmatprep.subr.mxu0 0.0
        %1663 = vmatpush1.msra.mxu0 %v727
        %1664 = vmatprep.subr.mxu0 0.0
        %1665 = vmatpush1.msra.mxu0 %v728
        %1666 = vmatprep.subr.mxu0 0.0
        %1667 = vmatpush1.msra.mxu0 %v729
        %1668 = vmatprep.subr.mxu0 0.0
        %1669 = vmatpush1.msra.mxu0 %v730
        %1670 = vmatprep.subr.mxu0 0.0
        %1671 = vmatpush1.msra.mxu0 0.0
        %1672 = vmatprep.subr.mxu0 0.0
        %1673 = vmatpush1.msra.mxu0 0.0
        %1674 = vmatprep.subr.mxu0 0.0
        %1675 = vmatpush1.msra.mxu0 0.0
        %1676 = vmatprep.subr.mxu0 0.0
        %1677 = vmatpush1.msra.mxu0 0.0
        %1678 = vmatprep.subr.mxu0 0.0
        %1679 = vmatpush1.msra.mxu0 0.0
        %1680 = vmatprep.subr.mxu0 0.0
        %1681 = vmatpush1.msra.mxu0 0.0
        %1682 = vmatprep.subr.mxu0 0.0
        %1683 = vmatpush1.msra.mxu0 0.0
        %1684 = vmatprep.subr.mxu0 0.0
        %1685 = vmatpush1.msra.mxu0 0.0
        %1686 = vmatprep.subr.mxu0 0.0
        %1687 = vmatpush1.msra.mxu0 0.0
        %1688 = vmatprep.subr.mxu0 0.0
        %1689 = vmatpush1.msra.mxu0 0.0
        %1690 = vmatprep.subr.mxu0 0.0
        %1691 = vmatpush1.msra.mxu0 0.0
        %1692 = vmatprep.subr.mxu0 0.0
        %1693 = vmatpush1.msra.mxu0 0.0
        %1694 = vmatprep.subr.mxu0 0.0
        %1695 = vmatpush1.msra.mxu0 0.0
        %1696 = vmatprep.subr.mxu0 0.0
        %1697 = vmatpush1.msra.mxu0 0.0
        %1698 = vmatprep.subr.mxu0 0.0
        %1699 = vmatpush1.msra.mxu0 0.0
        %1700 = vmatprep.subr.mxu0 0.0
        %1701 = vmatpush1.msra.mxu0 0.0
        %1702 = vmatprep.mubr.f32.mxu0 0.0
        %1703 = vmatmul.mubr.f32.gmra.mrb[0].mxu0 %v555
        %v1704 = vpop.f32.mrb[0].mxu0
        %v1705 = vadd.f32 %v1480, %v1704
        %v1706 = vpop.f32.mrb[0].mxu0
        %1707 = vmatprep.mubr.f32.mxu0 0.0
        %1708 = vmatmul.mubr.f32.gmra.mrb[0].mxu0 %v556
        %v1709 = vpop.f32.mrb[0].mxu0
        %v1710 = vadd.f32 %v1485, %v1709
        %v1711 = vpop.f32.mrb[0].mxu0
        %1712 = vmatprep.mubr.f32.mxu0 0.0
        %1713 = vmatmul.mubr.f32.gmra.mrb[0].mxu0 %v557
        %v1714 = vpop.f32.mrb[0].mxu0
        %v1715 = vadd.f32 %v1490, %v1714
        %v1716 = vpop.f32.mrb[0].mxu0
        %1717 = vmatprep.mubr.f32.mxu0 0.0
        %1718 = vmatmul.mubr.f32.gmra.mrb[0].mxu0 %v558
        %v1719 = vpop.f32.mrb[0].mxu0
        %v1720 = vadd.f32 %v1495, %v1719
        %v1721 = vpop.f32.mrb[0].mxu0
        %1722 = vmatprep.mubr.f32.mxu0 0.0
        %1723 = vmatmul.mubr.f32.gmra.mrb[0].mxu0 %v559
        %v1724 = vpop.f32.mrb[0].mxu0
        %v1725 = vadd.f32 %v1500, %v1724
        %v1726 = vpop.f32.mrb[0].mxu0
        %1727 = vmatprep.mubr.f32.mxu0 0.0
        %1728 = vmatmul.mubr.f32.gmra.mrb[0].mxu0 %v560
        %v1729 = vpop.f32.mrb[0].mxu0
        %v1730 = vadd.f32 %v1505, %v1729
        %v1731 = vpop.f32.mrb[0].mxu0
        %1732 = vmatprep.mubr.f32.mxu0 0.0
        %1733 = vmatmul.mubr.f32.gmra.mrb[0].mxu0 %v561
        %v1734 = vpop.f32.mrb[0].mxu0
        %v1735 = vadd.f32 %v1510, %v1734
        %v1736 = vpop.f32.mrb[0].mxu0
        %1737 = vmatprep.mubr.f32.mxu0 0.0
        %1738 = vmatmul.mubr.f32.gmra.mrb[0].mxu0 %v562
        %v1739 = vpop.f32.mrb[0].mxu0
        %v1740 = vadd.f32 %v1515, %v1739
        %v1741 = vpop.f32.mrb[0].mxu0
        %1742 = vmatprep.mubr.f32.mxu0 0.0
        %1743 = vmatmul.mubr.f32.gmra.mrb[0].mxu0 %v563
        %v1744 = vpop.f32.mrb[0].mxu0
        %v1745 = vadd.f32 %v1520, %v1744
        %v1746 = vpop.f32.mrb[0].mxu0
        %1747 = vmatprep.mubr.f32.mxu0 0.0
        %1748 = vmatmul.mubr.f32.gmra.mrb[0].mxu0 %v564
        %v1749 = vpop.f32.mrb[0].mxu0
        %v1750 = vadd.f32 %v1525, %v1749
        %v1751 = vpop.f32.mrb[0].mxu0
        %1752 = vmatprep.mubr.f32.mxu0 0.0
        %1753 = vmatmul.mubr.f32.gmra.mrb[0].mxu0 %v565
        %v1754 = vpop.f32.mrb[0].mxu0
        %v1755 = vadd.f32 %v1530, %v1754
        %v1756 = vpop.f32.mrb[0].mxu0
        %1757 = vmatprep.mubr.f32.mxu0 0.0
        %1758 = vmatmul.mubr.f32.gmra.mrb[0].mxu0 %v566
        %v1759 = vpop.f32.mrb[0].mxu0
        %v1760 = vadd.f32 %v1535, %v1759
        %v1761 = vpop.f32.mrb[0].mxu0
        %1762 = vmatprep.mubr.f32.mxu0 0.0
        %1763 = vmatmul.mubr.f32.gmra.mrb[0].mxu0 %v567
        %v1764 = vpop.f32.mrb[0].mxu0
        %v1765 = vadd.f32 %v1540, %v1764
        %v1766 = vpop.f32.mrb[0].mxu0
        %1767 = vmatprep.mubr.f32.mxu0 0.0
        %1768 = vmatmul.mubr.f32.gmra.mrb[0].mxu0 %v568
        %v1769 = vpop.f32.mrb[0].mxu0
        %v1770 = vadd.f32 %v1545, %v1769
        %v1771 = vpop.f32.mrb[0].mxu0
        %1772 = vmatprep.mubr.f32.mxu0 0.0
        %1773 = vmatmul.mubr.f32.gmra.mrb[0].mxu0 %v569
        %v1774 = vpop.f32.mrb[0].mxu0
        %v1775 = vadd.f32 %v1550, %v1774
        %v1776 = vpop.f32.mrb[0].mxu0
        %1777 = vmatprep.mubr.f32.mxu0 0.0
        %1778 = vmatmul.mubr.f32.gmra.mrb[0].mxu0 %v570
        %v1779 = vpop.f32.mrb[0].mxu0
        %v1780 = vadd.f32 %v1555, %v1779
        %v1781 = vpop.f32.mrb[0].mxu0
        %1782 = vmatprep.mubr.f32.mxu0 0.0
        %1783 = vmatmul.mubr.f32.gmra.mrb[0].mxu0 %v571
        %v1784 = vpop.f32.mrb[0].mxu0
        %v1785 = vadd.f32 %v1560, %v1784
        %v1786 = vpop.f32.mrb[0].mxu0
        %1787 = vmatprep.mubr.f32.mxu0 0.0
        %1788 = vmatmul.mubr.f32.gmra.mrb[0].mxu0 %v572
        %v1789 = vpop.f32.mrb[0].mxu0
        %v1790 = vadd.f32 %v1565, %v1789
        %v1791 = vpop.f32.mrb[0].mxu0
        %1792 = vmatprep.mubr.f32.mxu0 0.0
        %1793 = vmatmul.mubr.f32.gmra.mrb[0].mxu0 %v573
        %v1794 = vpop.f32.mrb[0].mxu0
        %v1795 = vadd.f32 %v1570, %v1794
        %v1796 = vpop.f32.mrb[0].mxu0
        %1797 = vmatprep.mubr.f32.mxu0 0.0
        %1798 = vmatmul.mubr.f32.gmra.mrb[0].mxu0 %v574
        %v1799 = vpop.f32.mrb[0].mxu0
        %v1800 = vadd.f32 %v1575, %v1799
        %v1801 = vpop.f32.mrb[0].mxu0
        %1802 = vmatprep.mubr.f32.mxu0 0.0
        %1803 = vmatmul.mubr.f32.gmra.mrb[0].mxu0 %v575
        %v1804 = vpop.f32.mrb[0].mxu0
        %v1805 = vadd.f32 %v1580, %v1804
        %v1806 = vpop.f32.mrb[0].mxu0
        %1807 = vmatprep.mubr.f32.mxu0 0.0
        %1808 = vmatmul.mubr.f32.gmra.mrb[0].mxu0 %v576
        %v1809 = vpop.f32.mrb[0].mxu0
        %v1810 = vadd.f32 %v1585, %v1809
        %v1811 = vpop.f32.mrb[0].mxu0
        %1812 = vmatprep.mubr.f32.mxu0 0.0
        %1813 = vmatmul.mubr.f32.gmra.mrb[0].mxu0 %v577
        %v1814 = vpop.f32.mrb[0].mxu0
        %v1815 = vadd.f32 %v1590, %v1814
        %v1816 = vpop.f32.mrb[0].mxu0
        %1817 = vmatprep.mubr.f32.mxu0 0.0
        %1818 = vmatmul.mubr.f32.gmra.mrb[0].mxu0 %v578
        %v1819 = vpop.f32.mrb[0].mxu0
        %v1820 = vadd.f32 %v1595, %v1819
        %v1821 = vpop.f32.mrb[0].mxu0
        %1822 = vmatprep.mubr.f32.mxu0 0.0
        %1823 = vmatmul.mubr.f32.gmra.mrb[0].mxu0 %v579
        %v1824 = vpop.f32.mrb[0].mxu0
        %v1825 = vadd.f32 %v1600, %v1824
        %v1826 = vpop.f32.mrb[0].mxu0
        %1827 = vmatprep.mubr.f32.mxu0 0.0
        %1828 = vmatmul.mubr.f32.gmra.mrb[0].mxu0 %v580
        %v1829 = vpop.f32.mrb[0].mxu0
        %v1830 = vadd.f32 %v1605, %v1829
        %v1831 = vpop.f32.mrb[0].mxu0
        %1832 = vmatprep.mubr.f32.mxu0 0.0
        %1833 = vmatmul.mubr.f32.gmra.mrb[0].mxu0 %v581
        %v1834 = vpop.f32.mrb[0].mxu0
        %v1835 = vadd.f32 %v1610, %v1834
        %v1836 = vpop.f32.mrb[0].mxu0
        %1837 = vmatprep.mubr.f32.mxu0 0.0
        %1838 = vmatmul.mubr.f32.gmra.mrb[0].mxu0 %v582
        %v1839 = vpop.f32.mrb[0].mxu0
        %v1840 = vadd.f32 %v1615, %v1839
        %v1841 = vpop.f32.mrb[0].mxu0
        %1842 = vmatprep.mubr.f32.mxu0 0.0
        %1843 = vmatmul.mubr.f32.gmra.mrb[0].mxu0 %v583
        %v1844 = vpop.f32.mrb[0].mxu0
        %v1845 = vadd.f32 %v1620, %v1844
        %v1846 = vpop.f32.mrb[0].mxu0
        %1847 = vmatprep.mubr.f32.mxu0 0.0
        %1848 = vmatmul.mubr.f32.gmra.mrb[0].mxu0 %v584
        %v1849 = vpop.f32.mrb[0].mxu0
        %v1850 = vadd.f32 %v1625, %v1849
        %v1851 = vpop.f32.mrb[0].mxu0
        %1852 = vmatprep.mubr.f32.mxu0 0.0
        %1853 = vmatmul.mubr.f32.gmra.mrb[0].mxu0 %v585
        %v1854 = vpop.f32.mrb[0].mxu0
        %v1855 = vadd.f32 %v1630, %v1854
        %v1856 = vpop.f32.mrb[0].mxu0
        %1857 = vmatprep.mubr.f32.mxu0 0.0
        %1858 = vmatmul.mubr.f32.gmra.mrb[0].mxu0 %v586
        %v1859 = vpop.f32.mrb[0].mxu0
        %v1860 = vadd.f32 %v1635, %v1859
        %v1861 = vpop.f32.mrb[0].mxu0
        %1862 = vdwg.mxu0
        %v1863 = vmax.f32 %v1705, 0.0
        %v1864 = vmax.f32 %v1710, 0.0
        %v1865 = vmax.f32 %v1715, 0.0
        %v1866 = vmax.f32 %v1720, 0.0
        %v1867 = vmax.f32 %v1725, 0.0
        %v1868 = vmax.f32 %v1730, 0.0
        %v1869 = vmax.f32 %v1735, 0.0
        %v1870 = vmax.f32 %v1740, 0.0
        %v1871 = vmax.f32 %v1745, 0.0
        %v1872 = vmax.f32 %v1750, 0.0
        %v1873 = vmax.f32 %v1755, 0.0
        %v1874 = vmax.f32 %v1760, 0.0
        %v1875 = vmax.f32 %v1765, 0.0
        %v1876 = vmax.f32 %v1770, 0.0
        %v1877 = vmax.f32 %v1775, 0.0
        %v1878 = vmax.f32 %v1780, 0.0
        %v1879 = vmax.f32 %v1785, 0.0
        %v1880 = vmax.f32 %v1790, 0.0
        %v1881 = vmax.f32 %v1795, 0.0
        %v1882 = vmax.f32 %v1800, 0.0
        %v1883 = vmax.f32 %v1805, 0.0
        %v1884 = vmax.f32 %v1810, 0.0
        %v1885 = vmax.f32 %v1815, 0.0
        %v1886 = vmax.f32 %v1820, 0.0
        %v1887 = vmax.f32 %v1825, 0.0
        %v1888 = vmax.f32 %v1830, 0.0
        %v1889 = vmax.f32 %v1835, 0.0
        %v1890 = vmax.f32 %v1840, 0.0
        %v1891 = vmax.f32 %v1845, 0.0
        %v1892 = vmax.f32 %v1850, 0.0
        %v1893 = vmax.f32 %v1855, 0.0
        %v1894 = vmax.f32 %v1860, 0.0
        %1895 = vst [vmem:[#allocation2] sm:$0xff] 0.0
        %1896 = vst [vmem:[#allocation2 + $0x8] sm:$0xff] 0.0
        %1897 = vst [vmem:[#allocation2 + $0x10] sm:$0x3] 0.0
        %s1898 = scalar_lea.vmem [#allocation2], 408
        %1899 = vst [vmem:[%s1898] sm:$0xff] 0.0
        %1900 = vst [vmem:[%s1898 + $0x8] sm:$0xff] 0.0
        %1901 = vst [vmem:[%s1898 + $0x10] sm:$0x3] 0.0
        %s1902 = scalar_lea.vmem [#allocation2], 24
        %1903 = vst [vmem:[%s1902] sm:$0x1] 0.0
        %1904 = vst [vmem:[%s1902 + $0x18] sm:$0x1] 0.0
        %1905 = vst [vmem:[%s1902 + $0x30] sm:$0x1] 0.0
        %1906 = vst [vmem:[%s1902 + $0x48] sm:$0x1] 0.0
        %1907 = vst [vmem:[%s1902 + $0x60] sm:$0x1] 0.0
        %1908 = vst [vmem:[%s1902 + $0x78] sm:$0x1] 0.0
        %1909 = vst [vmem:[%s1902 + $0x90] sm:$0x1] 0.0
        %1910 = vst [vmem:[%s1902 + $0xa8] sm:$0x1] 0.0
        %1911 = vst [vmem:[%s1902 + $0xc0] sm:$0x1] 0.0
        %1912 = vst [vmem:[%s1902 + $0xd8] sm:$0x1] 0.0
        %1913 = vst [vmem:[%s1902 + $0xf0] sm:$0x1] 0.0
        %1914 = vst [vmem:[%s1902 + $0x108] sm:$0x1] 0.0
        %1915 = vst [vmem:[%s1902 + $0x120] sm:$0x1] 0.0
        %1916 = vst [vmem:[%s1902 + $0x138] sm:$0x1] 0.0
        %1917 = vst [vmem:[%s1902 + $0x150] sm:$0x1] 0.0
        %1918 = vst [vmem:[%s1902 + $0x168] sm:$0x1] 0.0
        %1919 = vst [vmem:[%s1902 + $0x11] sm:$0x1] 0.0
        %1920 = vst [vmem:[%s1902 + $0x29] sm:$0x1] 0.0
        %1921 = vst [vmem:[%s1902 + $0x41] sm:$0x1] 0.0
        %1922 = vst [vmem:[%s1902 + $0x59] sm:$0x1] 0.0
        %1923 = vst [vmem:[%s1902 + $0x71] sm:$0x1] 0.0
        %1924 = vst [vmem:[%s1902 + $0x89] sm:$0x1] 0.0
        %1925 = vst [vmem:[%s1902 + $0xa1] sm:$0x1] 0.0
        %1926 = vst [vmem:[%s1902 + $0xb9] sm:$0x1] 0.0
        %1927 = vst [vmem:[%s1902 + $0xd1] sm:$0x1] 0.0
        %1928 = vst [vmem:[%s1902 + $0xe9] sm:$0x1] 0.0
        %1929 = vst [vmem:[%s1902 + $0x101] sm:$0x1] 0.0
        %1930 = vst [vmem:[%s1902 + $0x119] sm:$0x1] 0.0
        %1931 = vst [vmem:[%s1902 + $0x131] sm:$0x1] 0.0
        %1932 = vst [vmem:[%s1902 + $0x149] sm:$0x1] 0.0
        %1933 = vst [vmem:[%s1902 + $0x161] sm:$0x1] 0.0
        %1934 = vst [vmem:[%s1902 + $0x179] sm:$0x1] 0.0
        %1935 = vst [vmem:[%s1902 + $0x1] sm:$0xff] %v1863
        %1936 = vst [vmem:[%s1902 + $0x9] sm:$0xff] %v1864
        %1937 = vst [vmem:[%s1902 + $0x19] sm:$0xff] %v1865
        %1938 = vst [vmem:[%s1902 + $0x21] sm:$0xff] %v1866
        %1939 = vst [vmem:[%s1902 + $0x31] sm:$0xff] %v1867
        %1940 = vst [vmem:[%s1902 + $0x39] sm:$0xff] %v1868
        %1941 = vst [vmem:[%s1902 + $0x49] sm:$0xff] %v1869
        %1942 = vst [vmem:[%s1902 + $0x51] sm:$0xff] %v1870
        %1943 = vst [vmem:[%s1902 + $0x61] sm:$0xff] %v1871
        %1944 = vst [vmem:[%s1902 + $0x69] sm:$0xff] %v1872
        %1945 = vst [vmem:[%s1902 + $0x79] sm:$0xff] %v1873
        %1946 = vst [vmem:[%s1902 + $0x81] sm:$0xff] %v1874
        %1947 = vst [vmem:[%s1902 + $0x91] sm:$0xff] %v1875
        %1948 = vst [vmem:[%s1902 + $0x99] sm:$0xff] %v1876
        %1949 = vst [vmem:[%s1902 + $0xa9] sm:$0xff] %v1877
        %1950 = vst [vmem:[%s1902 + $0xb1] sm:$0xff] %v1878
        %1951 = vst [vmem:[%s1902 + $0xc1] sm:$0xff] %v1879
        %1952 = vst [vmem:[%s1902 + $0xc9] sm:$0xff] %v1880
        %1953 = vst [vmem:[%s1902 + $0xd9] sm:$0xff] %v1881
        %1954 = vst [vmem:[%s1902 + $0xe1] sm:$0xff] %v1882
        %1955 = vst [vmem:[%s1902 + $0xf1] sm:$0xff] %v1883
        %1956 = vst [vmem:[%s1902 + $0xf9] sm:$0xff] %v1884
        %1957 = vst [vmem:[%s1902 + $0x109] sm:$0xff] %v1885
        %1958 = vst [vmem:[%s1902 + $0x111] sm:$0xff] %v1886
        %1959 = vst [vmem:[%s1902 + $0x121] sm:$0xff] %v1887
        %1960 = vst [vmem:[%s1902 + $0x129] sm:$0xff] %v1888
        %1961 = vst [vmem:[%s1902 + $0x139] sm:$0xff] %v1889
        %1962 = vst [vmem:[%s1902 + $0x141] sm:$0xff] %v1890
        %1963 = vst [vmem:[%s1902 + $0x151] sm:$0xff] %v1891
        %1964 = vst [vmem:[%s1902 + $0x159] sm:$0xff] %v1892
        %1965 = vst [vmem:[%s1902 + $0x169] sm:$0xff] %v1893
        %1966 = vst [vmem:[%s1902 + $0x171] sm:$0xff] %v1894
        %v1967 = vld [vmem:[#allocation2] sm:$0xff]
        %v1968 = vld [vmem:[#allocation2 + $0x8] sm:$0xff]
        %v1969 = vld [vmem:[#allocation2 + $0x18] sm:$0xff]
        %v1970 = vld [vmem:[#allocation2 + $0x20] sm:$0xff]
        %v1971 = vld [vmem:[#allocation2 + $0x30] sm:$0xff]
        %v1972 = vld [vmem:[#allocation2 + $0x38] sm:$0xff]
        %v1973 = vld [vmem:[#allocation2 + $0x48] sm:$0xff]
        %v1974 = vld [vmem:[#allocation2 + $0x50] sm:$0xff]
        %v1975 = vld [vmem:[#allocation2 + $0x60] sm:$0xff]
        %v1976 = vld [vmem:[#allocation2 + $0x68] sm:$0xff]
        %v1977 = vld [vmem:[#allocation2 + $0x78] sm:$0xff]
        %v1978 = vld [vmem:[#allocation2 + $0x80] sm:$0xff]
        %v1979 = vld [vmem:[#allocation2 + $0x90] sm:$0xff]
        %v1980 = vld [vmem:[#allocation2 + $0x98] sm:$0xff]
        %v1981 = vld [vmem:[#allocation2 + $0xa8] sm:$0xff]
        %v1982 = vld [vmem:[#allocation2 + $0xb0] sm:$0xff]
        %v1983 = vld [vmem:[#allocation2 + $0xc0] sm:$0xff]
        %v1984 = vld [vmem:[#allocation2 + $0xc8] sm:$0xff]
        %v1985 = vld [vmem:[#allocation2 + $0xd8] sm:$0xff]
        %v1986 = vld [vmem:[#allocation2 + $0xe0] sm:$0xff]
        %v1987 = vld [vmem:[#allocation2 + $0xf0] sm:$0xff]
        %v1988 = vld [vmem:[#allocation2 + $0xf8] sm:$0xff]
        %v1989 = vld [vmem:[#allocation2 + $0x108] sm:$0xff]
        %v1990 = vld [vmem:[#allocation2 + $0x110] sm:$0xff]
        %v1991 = vld [vmem:[#allocation2 + $0x120] sm:$0xff]
        %v1992 = vld [vmem:[#allocation2 + $0x128] sm:$0xff]
        %v1993 = vld [vmem:[#allocation2 + $0x138] sm:$0xff]
        %v1994 = vld [vmem:[#allocation2 + $0x140] sm:$0xff]
        %v1995 = vld [vmem:[#allocation2 + $0x150] sm:$0xff]
        %v1996 = vld [vmem:[#allocation2 + $0x158] sm:$0xff]
        %v1997 = vld [vmem:[#allocation2 + $0x168] sm:$0xff]
        %v1998 = vld [vmem:[#allocation2 + $0x170] sm:$0xff]
        %v1999 = vld [vmem:[#allocation2 + $0x1] sm:$0xff]
        %v2000 = vld [vmem:[#allocation2 + $0x9] sm:$0xff]
        %v2001 = vld [vmem:[#allocation2 + $0x19] sm:$0xff]
        %v2002 = vld [vmem:[#allocation2 + $0x21] sm:$0xff]
        %v2003 = vld [vmem:[#allocation2 + $0x31] sm:$0xff]
        %v2004 = vld [vmem:[#allocation2 + $0x39] sm:$0xff]
        %v2005 = vld [vmem:[#allocation2 + $0x49] sm:$0xff]
        %v2006 = vld [vmem:[#allocation2 + $0x51] sm:$0xff]
        %v2007 = vld [vmem:[#allocation2 + $0x61] sm:$0xff]
        %v2008 = vld [vmem:[#allocation2 + $0x69] sm:$0xff]
        %v2009 = vld [vmem:[#allocation2 + $0x79] sm:$0xff]
        %v2010 = vld [vmem:[#allocation2 + $0x81] sm:$0xff]
        %v2011 = vld [vmem:[#allocation2 + $0x91] sm:$0xff]
        %v2012 = vld [vmem:[#allocation2 + $0x99] sm:$0xff]
        %v2013 = vld [vmem:[#allocation2 + $0xa9] sm:$0xff]
        %v2014 = vld [vmem:[#allocation2 + $0xb1] sm:$0xff]
        %v2015 = vld [vmem:[#allocation2 + $0xc1] sm:$0xff]
        %v2016 = vld [vmem:[#allocation2 + $0xc9] sm:$0xff]
        %v2017 = vld [vmem:[#allocation2 + $0xd9] sm:$0xff]
        %v2018 = vld [vmem:[#allocation2 + $0xe1] sm:$0xff]
        %v2019 = vld [vmem:[#allocation2 + $0xf1] sm:$0xff]
        %v2020 = vld [vmem:[#allocation2 + $0xf9] sm:$0xff]
        %v2021 = vld [vmem:[#allocation2 + $0x109] sm:$0xff]
        %v2022 = vld [vmem:[#allocation2 + $0x111] sm:$0xff]
        %v2023 = vld [vmem:[#allocation2 + $0x121] sm:$0xff]
        %v2024 = vld [vmem:[#allocation2 + $0x129] sm:$0xff]
        %v2025 = vld [vmem:[#allocation2 + $0x139] sm:$0xff]
        %v2026 = vld [vmem:[#allocation2 + $0x141] sm:$0xff]
        %v2027 = vld [vmem:[#allocation2 + $0x151] sm:$0xff]
        %v2028 = vld [vmem:[#allocation2 + $0x159] sm:$0xff]
        %v2029 = vld [vmem:[#allocation2 + $0x169] sm:$0xff]
        %v2030 = vld [vmem:[#allocation2 + $0x171] sm:$0xff]
        %v2031 = vld [vmem:[#allocation2 + $0x2] sm:$0xff]
        %v2032 = vld [vmem:[#allocation2 + $0xa] sm:$0xff]
        %v2033 = vld [vmem:[#allocation2 + $0x1a] sm:$0xff]
        %v2034 = vld [vmem:[#allocation2 + $0x22] sm:$0xff]
        %v2035 = vld [vmem:[#allocation2 + $0x32] sm:$0xff]
        %v2036 = vld [vmem:[#allocation2 + $0x3a] sm:$0xff]
        %v2037 = vld [vmem:[#allocation2 + $0x4a] sm:$0xff]
        %v2038 = vld [vmem:[#allocation2 + $0x52] sm:$0xff]
        %v2039 = vld [vmem:[#allocation2 + $0x62] sm:$0xff]
        %v2040 = vld [vmem:[#allocation2 + $0x6a] sm:$0xff]
        %v2041 = vld [vmem:[#allocation2 + $0x7a] sm:$0xff]
        %v2042 = vld [vmem:[#allocation2 + $0x82] sm:$0xff]
        %v2043 = vld [vmem:[#allocation2 + $0x92] sm:$0xff]
        %v2044 = vld [vmem:[#allocation2 + $0x9a] sm:$0xff]
        %v2045 = vld [vmem:[#allocation2 + $0xaa] sm:$0xff]
        %v2046 = vld [vmem:[#allocation2 + $0xb2] sm:$0xff]
        %v2047 = vld [vmem:[#allocation2 + $0xc2] sm:$0xff]
        %v2048 = vld [vmem:[#allocation2 + $0xca] sm:$0xff]
        %v2049 = vld [vmem:[#allocation2 + $0xda] sm:$0xff]
        %v2050 = vld [vmem:[#allocation2 + $0xe2] sm:$0xff]
        %v2051 = vld [vmem:[#allocation2 + $0xf2] sm:$0xff]
        %v2052 = vld [vmem:[#allocation2 + $0xfa] sm:$0xff]
        %v2053 = vld [vmem:[#allocation2 + $0x10a] sm:$0xff]
        %v2054 = vld [vmem:[#allocation2 + $0x112] sm:$0xff]
        %v2055 = vld [vmem:[#allocation2 + $0x122] sm:$0xff]
        %v2056 = vld [vmem:[#allocation2 + $0x12a] sm:$0xff]
        %v2057 = vld [vmem:[#allocation2 + $0x13a] sm:$0xff]
        %v2058 = vld [vmem:[#allocation2 + $0x142] sm:$0xff]
        %v2059 = vld [vmem:[#allocation2 + $0x152] sm:$0xff]
        %v2060 = vld [vmem:[#allocation2 + $0x15a] sm:$0xff]
        %v2061 = vld [vmem:[#allocation2 + $0x16a] sm:$0xff]
        %v2062 = vld [vmem:[#allocation2 + $0x172] sm:$0xff]
        %v2063 = vld [vmem:[%s1902] sm:$0xff]
        %v2064 = vld [vmem:[%s1902 + $0x8] sm:$0xff]
        %v2065 = vld [vmem:[%s1902 + $0x18] sm:$0xff]
        %v2066 = vld [vmem:[%s1902 + $0x20] sm:$0xff]
        %v2067 = vld [vmem:[%s1902 + $0x30] sm:$0xff]
        %v2068 = vld [vmem:[%s1902 + $0x38] sm:$0xff]
        %v2069 = vld [vmem:[%s1902 + $0x48] sm:$0xff]
        %v2070 = vld [vmem:[%s1902 + $0x50] sm:$0xff]
        %v2071 = vld [vmem:[%s1902 + $0x60] sm:$0xff]
        %v2072 = vld [vmem:[%s1902 + $0x68] sm:$0xff]
        %v2073 = vld [vmem:[%s1902 + $0x78] sm:$0xff]
        %v2074 = vld [vmem:[%s1902 + $0x80] sm:$0xff]
        %v2075 = vld [vmem:[%s1902 + $0x90] sm:$0xff]
        %v2076 = vld [vmem:[%s1902 + $0x98] sm:$0xff]
        %v2077 = vld [vmem:[%s1902 + $0xa8] sm:$0xff]
        %v2078 = vld [vmem:[%s1902 + $0xb0] sm:$0xff]
        %v2079 = vld [vmem:[%s1902 + $0xc0] sm:$0xff]
        %v2080 = vld [vmem:[%s1902 + $0xc8] sm:$0xff]
        %v2081 = vld [vmem:[%s1902 + $0xd8] sm:$0xff]
        %v2082 = vld [vmem:[%s1902 + $0xe0] sm:$0xff]
        %v2083 = vld [vmem:[%s1902 + $0xf0] sm:$0xff]
        %v2084 = vld [vmem:[%s1902 + $0xf8] sm:$0xff]
        %v2085 = vld [vmem:[%s1902 + $0x108] sm:$0xff]
        %v2086 = vld [vmem:[%s1902 + $0x110] sm:$0xff]
        %v2087 = vld [vmem:[%s1902 + $0x120] sm:$0xff]
        %v2088 = vld [vmem:[%s1902 + $0x128] sm:$0xff]
        %v2089 = vld [vmem:[%s1902 + $0x138] sm:$0xff]
        %v2090 = vld [vmem:[%s1902 + $0x140] sm:$0xff]
        %v2091 = vld [vmem:[%s1902 + $0x150] sm:$0xff]
        %v2092 = vld [vmem:[%s1902 + $0x158] sm:$0xff]
        %v2093 = vld [vmem:[%s1902 + $0x168] sm:$0xff]
        %v2094 = vld [vmem:[%s1902 + $0x170] sm:$0xff]
        %v2095 = vld [vmem:[%s1902 + $0x1] sm:$0xff]
        %v2096 = vld [vmem:[%s1902 + $0x9] sm:$0xff]
        %v2097 = vld [vmem:[%s1902 + $0x19] sm:$0xff]
        %v2098 = vld [vmem:[%s1902 + $0x21] sm:$0xff]
        %v2099 = vld [vmem:[%s1902 + $0x31] sm:$0xff]
        %v2100 = vld [vmem:[%s1902 + $0x39] sm:$0xff]
        %v2101 = vld [vmem:[%s1902 + $0x49] sm:$0xff]
        %v2102 = vld [vmem:[%s1902 + $0x51] sm:$0xff]
        %v2103 = vld [vmem:[%s1902 + $0x61] sm:$0xff]
        %v2104 = vld [vmem:[%s1902 + $0x69] sm:$0xff]
        %v2105 = vld [vmem:[%s1902 + $0x79] sm:$0xff]
        %v2106 = vld [vmem:[%s1902 + $0x81] sm:$0xff]
        %v2107 = vld [vmem:[%s1902 + $0x91] sm:$0xff]
        %v2108 = vld [vmem:[%s1902 + $0x99] sm:$0xff]
        %v2109 = vld [vmem:[%s1902 + $0xa9] sm:$0xff]
        %v2110 = vld [vmem:[%s1902 + $0xb1] sm:$0xff]
        %v2111 = vld [vmem:[%s1902 + $0xc1] sm:$0xff]
        %v2112 = vld [vmem:[%s1902 + $0xc9] sm:$0xff]
        %v2113 = vld [vmem:[%s1902 + $0xd9] sm:$0xff]
        %v2114 = vld [vmem:[%s1902 + $0xe1] sm:$0xff]
        %v2115 = vld [vmem:[%s1902 + $0xf1] sm:$0xff]
        %v2116 = vld [vmem:[%s1902 + $0xf9] sm:$0xff]
        %v2117 = vld [vmem:[%s1902 + $0x109] sm:$0xff]
        %v2118 = vld [vmem:[%s1902 + $0x111] sm:$0xff]
        %v2119 = vld [vmem:[%s1902 + $0x121] sm:$0xff]
        %v2120 = vld [vmem:[%s1902 + $0x129] sm:$0xff]
        %v2121 = vld [vmem:[%s1902 + $0x139] sm:$0xff]
        %v2122 = vld [vmem:[%s1902 + $0x141] sm:$0xff]
        %v2123 = vld [vmem:[%s1902 + $0x151] sm:$0xff]
        %v2124 = vld [vmem:[%s1902 + $0x159] sm:$0xff]
        %v2125 = vld [vmem:[%s1902 + $0x169] sm:$0xff]
        %v2126 = vld [vmem:[%s1902 + $0x171] sm:$0xff]
        %v2127 = vld [vmem:[%s1902 + $0x2] sm:$0xff]
        %v2128 = vld [vmem:[%s1902 + $0xa] sm:$0xff]
        %v2129 = vld [vmem:[%s1902 + $0x1a] sm:$0xff]
        %v2130 = vld [vmem:[%s1902 + $0x22] sm:$0xff]
        %v2131 = vld [vmem:[%s1902 + $0x32] sm:$0xff]
        %v2132 = vld [vmem:[%s1902 + $0x3a] sm:$0xff]
        %v2133 = vld [vmem:[%s1902 + $0x4a] sm:$0xff]
        %v2134 = vld [vmem:[%s1902 + $0x52] sm:$0xff]
        %v2135 = vld [vmem:[%s1902 + $0x62] sm:$0xff]
        %v2136 = vld [vmem:[%s1902 + $0x6a] sm:$0xff]
        %v2137 = vld [vmem:[%s1902 + $0x7a] sm:$0xff]
        %v2138 = vld [vmem:[%s1902 + $0x82] sm:$0xff]
        %v2139 = vld [vmem:[%s1902 + $0x92] sm:$0xff]
        %v2140 = vld [vmem:[%s1902 + $0x9a] sm:$0xff]
        %v2141 = vld [vmem:[%s1902 + $0xaa] sm:$0xff]
        %v2142 = vld [vmem:[%s1902 + $0xb2] sm:$0xff]
        %v2143 = vld [vmem:[%s1902 + $0xc2] sm:$0xff]
        %v2144 = vld [vmem:[%s1902 + $0xca] sm:$0xff]
        %v2145 = vld [vmem:[%s1902 + $0xda] sm:$0xff]
        %v2146 = vld [vmem:[%s1902 + $0xe2] sm:$0xff]
        %v2147 = vld [vmem:[%s1902 + $0xf2] sm:$0xff]
        %v2148 = vld [vmem:[%s1902 + $0xfa] sm:$0xff]
        %v2149 = vld [vmem:[%s1902 + $0x10a] sm:$0xff]
        %v2150 = vld [vmem:[%s1902 + $0x112] sm:$0xff]
        %v2151 = vld [vmem:[%s1902 + $0x122] sm:$0xff]
        %v2152 = vld [vmem:[%s1902 + $0x12a] sm:$0xff]
        %v2153 = vld [vmem:[%s1902 + $0x13a] sm:$0xff]
        %v2154 = vld [vmem:[%s1902 + $0x142] sm:$0xff]
        %v2155 = vld [vmem:[%s1902 + $0x152] sm:$0xff]
        %v2156 = vld [vmem:[%s1902 + $0x15a] sm:$0xff]
        %v2157 = vld [vmem:[%s1902 + $0x16a] sm:$0xff]
        %v2158 = vld [vmem:[%s1902 + $0x172] sm:$0xff]
        %s2159 = scalar_lea.vmem [#allocation2], 48
        %v2160 = vld [vmem:[%s2159] sm:$0xff]
        %v2161 = vld [vmem:[%s2159 + $0x8] sm:$0xff]
        %v2162 = vld [vmem:[%s2159 + $0x18] sm:$0xff]
        %v2163 = vld [vmem:[%s2159 + $0x20] sm:$0xff]
        %v2164 = vld [vmem:[%s2159 + $0x30] sm:$0xff]
        %v2165 = vld [vmem:[%s2159 + $0x38] sm:$0xff]
        %v2166 = vld [vmem:[%s2159 + $0x48] sm:$0xff]
        %v2167 = vld [vmem:[%s2159 + $0x50] sm:$0xff]
        %v2168 = vld [vmem:[%s2159 + $0x60] sm:$0xff]
        %v2169 = vld [vmem:[%s2159 + $0x68] sm:$0xff]
        %v2170 = vld [vmem:[%s2159 + $0x78] sm:$0xff]
        %v2171 = vld [vmem:[%s2159 + $0x80] sm:$0xff]
        %v2172 = vld [vmem:[%s2159 + $0x90] sm:$0xff]
        %v2173 = vld [vmem:[%s2159 + $0x98] sm:$0xff]
        %v2174 = vld [vmem:[%s2159 + $0xa8] sm:$0xff]
        %v2175 = vld [vmem:[%s2159 + $0xb0] sm:$0xff]
        %v2176 = vld [vmem:[%s2159 + $0xc0] sm:$0xff]
        %v2177 = vld [vmem:[%s2159 + $0xc8] sm:$0xff]
        %v2178 = vld [vmem:[%s2159 + $0xd8] sm:$0xff]
        %v2179 = vld [vmem:[%s2159 + $0xe0] sm:$0xff]
        %v2180 = vld [vmem:[%s2159 + $0xf0] sm:$0xff]
        %v2181 = vld [vmem:[%s2159 + $0xf8] sm:$0xff]
        %v2182 = vld [vmem:[%s2159 + $0x108] sm:$0xff]
        %v2183 = vld [vmem:[%s2159 + $0x110] sm:$0xff]
        %v2184 = vld [vmem:[%s2159 + $0x120] sm:$0xff]
        %v2185 = vld [vmem:[%s2159 + $0x128] sm:$0xff]
        %v2186 = vld [vmem:[%s2159 + $0x138] sm:$0xff]
        %v2187 = vld [vmem:[%s2159 + $0x140] sm:$0xff]
        %v2188 = vld [vmem:[%s2159 + $0x150] sm:$0xff]
        %v2189 = vld [vmem:[%s2159 + $0x158] sm:$0xff]
        %v2190 = vld [vmem:[%s2159 + $0x168] sm:$0xff]
        %v2191 = vld [vmem:[%s2159 + $0x170] sm:$0xff]
        %v2192 = vld [vmem:[%s2159 + $0x1] sm:$0xff]
        %v2193 = vld [vmem:[%s2159 + $0x9] sm:$0xff]
        %v2194 = vld [vmem:[%s2159 + $0x19] sm:$0xff]
        %v2195 = vld [vmem:[%s2159 + $0x21] sm:$0xff]
        %v2196 = vld [vmem:[%s2159 + $0x31] sm:$0xff]
        %v2197 = vld [vmem:[%s2159 + $0x39] sm:$0xff]
        %v2198 = vld [vmem:[%s2159 + $0x49] sm:$0xff]
        %v2199 = vld [vmem:[%s2159 + $0x51] sm:$0xff]
        %v2200 = vld [vmem:[%s2159 + $0x61] sm:$0xff]
        %v2201 = vld [vmem:[%s2159 + $0x69] sm:$0xff]
        %v2202 = vld [vmem:[%s2159 + $0x79] sm:$0xff]
        %v2203 = vld [vmem:[%s2159 + $0x81] sm:$0xff]
        %v2204 = vld [vmem:[%s2159 + $0x91] sm:$0xff]
        %v2205 = vld [vmem:[%s2159 + $0x99] sm:$0xff]
        %v2206 = vld [vmem:[%s2159 + $0xa9] sm:$0xff]
        %v2207 = vld [vmem:[%s2159 + $0xb1] sm:$0xff]
        %v2208 = vld [vmem:[%s2159 + $0xc1] sm:$0xff]
        %v2209 = vld [vmem:[%s2159 + $0xc9] sm:$0xff]
        %v2210 = vld [vmem:[%s2159 + $0xd9] sm:$0xff]
        %v2211 = vld [vmem:[%s2159 + $0xe1] sm:$0xff]
        %v2212 = vld [vmem:[%s2159 + $0xf1] sm:$0xff]
        %v2213 = vld [vmem:[%s2159 + $0xf9] sm:$0xff]
        %v2214 = vld [vmem:[%s2159 + $0x109] sm:$0xff]
        %v2215 = vld [vmem:[%s2159 + $0x111] sm:$0xff]
        %v2216 = vld [vmem:[%s2159 + $0x121] sm:$0xff]
        %v2217 = vld [vmem:[%s2159 + $0x129] sm:$0xff]
        %v2218 = vld [vmem:[%s2159 + $0x139] sm:$0xff]
        %v2219 = vld [vmem:[%s2159 + $0x141] sm:$0xff]
        %v2220 = vld [vmem:[%s2159 + $0x151] sm:$0xff]
        %v2221 = vld [vmem:[%s2159 + $0x159] sm:$0xff]
        %v2222 = vld [vmem:[%s2159 + $0x169] sm:$0xff]
        %v2223 = vld [vmem:[%s2159 + $0x171] sm:$0xff]
        %v2224 = vld [vmem:[%s2159 + $0x2] sm:$0xff]
        %v2225 = vld [vmem:[%s2159 + $0xa] sm:$0xff]
        %v2226 = vld [vmem:[%s2159 + $0x1a] sm:$0xff]
        %v2227 = vld [vmem:[%s2159 + $0x22] sm:$0xff]
        %v2228 = vld [vmem:[%s2159 + $0x32] sm:$0xff]
        %v2229 = vld [vmem:[%s2159 + $0x3a] sm:$0xff]
        %v2230 = vld [vmem:[%s2159 + $0x4a] sm:$0xff]
        %v2231 = vld [vmem:[%s2159 + $0x52] sm:$0xff]
        %v2232 = vld [vmem:[%s2159 + $0x62] sm:$0xff]
        %v2233 = vld [vmem:[%s2159 + $0x6a] sm:$0xff]
        %v2234 = vld [vmem:[%s2159 + $0x7a] sm:$0xff]
        %v2235 = vld [vmem:[%s2159 + $0x82] sm:$0xff]
        %v2236 = vld [vmem:[%s2159 + $0x92] sm:$0xff]
        %v2237 = vld [vmem:[%s2159 + $0x9a] sm:$0xff]
        %v2238 = vld [vmem:[%s2159 + $0xaa] sm:$0xff]
        %v2239 = vld [vmem:[%s2159 + $0xb2] sm:$0xff]
        %v2240 = vld [vmem:[%s2159 + $0xc2] sm:$0xff]
        %v2241 = vld [vmem:[%s2159 + $0xca] sm:$0xff]
        %v2242 = vld [vmem:[%s2159 + $0xda] sm:$0xff]
        %v2243 = vld [vmem:[%s2159 + $0xe2] sm:$0xff]
        %v2244 = vld [vmem:[%s2159 + $0xf2] sm:$0xff]
        %v2245 = vld [vmem:[%s2159 + $0xfa] sm:$0xff]
        %v2246 = vld [vmem:[%s2159 + $0x10a] sm:$0xff]
        %v2247 = vld [vmem:[%s2159 + $0x112] sm:$0xff]
        %v2248 = vld [vmem:[%s2159 + $0x122] sm:$0xff]
        %v2249 = vld [vmem:[%s2159 + $0x12a] sm:$0xff]
        %v2250 = vld [vmem:[%s2159 + $0x13a] sm:$0xff]
        %v2251 = vld [vmem:[%s2159 + $0x142] sm:$0xff]
        %v2252 = vld [vmem:[%s2159 + $0x152] sm:$0xff]
        %v2253 = vld [vmem:[%s2159 + $0x15a] sm:$0xff]
        %v2254 = vld [vmem:[%s2159 + $0x16a] sm:$0xff]
        %v2255 = vld [vmem:[%s2159 + $0x172] sm:$0xff]
        %v2256 = vld [vmem:[#allocation9] sm:$0xff]
        %v2257 = vld [vmem:[#allocation9 + $0x8] sm:$0xff]
        %v2258 = vld [vmem:[#allocation9 + $0x10] sm:$0xff]
        %v2259 = vld [vmem:[#allocation9 + $0x18] sm:$0xff]
        %v2260 = vld [vmem:[#allocation9 + $0x20] sm:$0xff]
        %v2261 = vld [vmem:[#allocation9 + $0x28] sm:$0xff]
        %v2262 = vld [vmem:[#allocation9 + $0x30] sm:$0xff]
        %v2263 = vld [vmem:[#allocation9 + $0x38] sm:$0xff]
        %v2264 = vld [vmem:[#allocation9 + $0x40] sm:$0xff]
        %v2265 = vld [vmem:[#allocation9 + $0x48] sm:$0xff]
        %v2266 = vld [vmem:[#allocation9 + $0x50] sm:$0xff]
        %v2267 = vld [vmem:[#allocation9 + $0x58] sm:$0xff]
        %v2268 = vld [vmem:[#allocation9 + $0x60] sm:$0xff]
        %v2269 = vld [vmem:[#allocation9 + $0x68] sm:$0xff]
        %v2270 = vld [vmem:[#allocation9 + $0x70] sm:$0xff]
        %v2271 = vld [vmem:[#allocation9 + $0x78] sm:$0xff]
        %v2272 = vld [vmem:[#allocation9 + $0x80] sm:$0xff]
        %v2273 = vld [vmem:[#allocation9 + $0x88] sm:$0xff]
        %v2274 = vld [vmem:[#allocation9 + $0x90] sm:$0xff]
        %v2275 = vld [vmem:[#allocation9 + $0x98] sm:$0xff]
        %v2276 = vld [vmem:[#allocation9 + $0xa0] sm:$0xff]
        %v2277 = vld [vmem:[#allocation9 + $0xa8] sm:$0xff]
        %v2278 = vld [vmem:[#allocation9 + $0xb0] sm:$0xff]
        %v2279 = vld [vmem:[#allocation9 + $0xb8] sm:$0xff]
        %v2280 = vld [vmem:[#allocation9 + $0xc0] sm:$0xff]
        %v2281 = vld [vmem:[#allocation9 + $0xc8] sm:$0xff]
        %v2282 = vld [vmem:[#allocation9 + $0xd0] sm:$0xff]
        %v2283 = vld [vmem:[#allocation9 + $0xd8] sm:$0xff]
        %v2284 = vld [vmem:[#allocation9 + $0xe0] sm:$0xff]
        %v2285 = vld [vmem:[#allocation9 + $0xe8] sm:$0xff]
        %v2286 = vld [vmem:[#allocation9 + $0xf0] sm:$0xff]
        %v2287 = vld [vmem:[#allocation9 + $0xf8] sm:$0xff]
        %v2288 = vld [vmem:[#allocation9 + $0x100] sm:$0xff]
        %v2289 = vld [vmem:[#allocation9 + $0x108] sm:$0xff]
        %v2290 = vld [vmem:[#allocation9 + $0x110] sm:$0xff]
        %v2291 = vld [vmem:[#allocation9 + $0x118] sm:$0xff]
        %v2292 = vld [vmem:[#allocation9 + $0x120] sm:$0xff]
        %v2293 = vld [vmem:[#allocation9 + $0x128] sm:$0xff]
        %v2294 = vld [vmem:[#allocation9 + $0x130] sm:$0xff]
        %v2295 = vld [vmem:[#allocation9 + $0x138] sm:$0xff]
        %v2296 = vld [vmem:[#allocation9 + $0x140] sm:$0xff]
        %v2297 = vld [vmem:[#allocation9 + $0x148] sm:$0xff]
        %v2298 = vld [vmem:[#allocation9 + $0x150] sm:$0xff]
        %v2299 = vld [vmem:[#allocation9 + $0x158] sm:$0xff]
        %v2300 = vld [vmem:[#allocation9 + $0x160] sm:$0xff]
        %v2301 = vld [vmem:[#allocation9 + $0x168] sm:$0xff]
        %v2302 = vld [vmem:[#allocation9 + $0x170] sm:$0xff]
        %v2303 = vld [vmem:[#allocation9 + $0x178] sm:$0xff]
        %v2304 = vld [vmem:[#allocation9 + $0x180] sm:$0xff]
        %v2305 = vld [vmem:[#allocation9 + $0x188] sm:$0xff]
        %v2306 = vld [vmem:[#allocation9 + $0x190] sm:$0xff]
        %v2307 = vld [vmem:[#allocation9 + $0x198] sm:$0xff]
        %v2308 = vld [vmem:[#allocation9 + $0x1a0] sm:$0xff]
        %v2309 = vld [vmem:[#allocation9 + $0x1a8] sm:$0xff]
        %v2310 = vld [vmem:[#allocation9 + $0x1b0] sm:$0xff]
        %v2311 = vld [vmem:[#allocation9 + $0x1b8] sm:$0xff]
        %v2312 = vld [vmem:[#allocation9 + $0x1c0] sm:$0xff]
        %v2313 = vld [vmem:[#allocation9 + $0x1c8] sm:$0xff]
        %v2314 = vld [vmem:[#allocation9 + $0x1d0] sm:$0xff]
        %v2315 = vld [vmem:[#allocation9 + $0x1d8] sm:$0xff]
        %v2316 = vld [vmem:[#allocation9 + $0x1e0] sm:$0xff]
        %v2317 = vld [vmem:[#allocation9 + $0x1e8] sm:$0xff]
        %v2318 = vld [vmem:[#allocation9 + $0x1f0] sm:$0xff]
        %v2319 = vld [vmem:[#allocation9 + $0x1f8] sm:$0xff]
        %v2320 = vld [vmem:[#allocation9 + $0x200] sm:$0xff]
        %v2321 = vld [vmem:[#allocation9 + $0x208] sm:$0xff]
        %v2322 = vld [vmem:[#allocation9 + $0x210] sm:$0xff]
        %v2323 = vld [vmem:[#allocation9 + $0x218] sm:$0xff]
        %v2324 = vld [vmem:[#allocation9 + $0x220] sm:$0xff]
        %v2325 = vld [vmem:[#allocation9 + $0x228] sm:$0xff]
        %v2326 = vld [vmem:[#allocation9 + $0x230] sm:$0xff]
        %v2327 = vld [vmem:[#allocation9 + $0x238] sm:$0xff]
        %v2328 = vld [vmem:[#allocation9 + $0x240] sm:$0xff]
        %v2329 = vld [vmem:[#allocation9 + $0x248] sm:$0xff]
        %v2330 = vld [vmem:[#allocation9 + $0x250] sm:$0xff]
        %v2331 = vld [vmem:[#allocation9 + $0x258] sm:$0xff]
        %v2332 = vld [vmem:[#allocation9 + $0x260] sm:$0xff]
        %v2333 = vld [vmem:[#allocation9 + $0x268] sm:$0xff]
        %v2334 = vld [vmem:[#allocation9 + $0x270] sm:$0xff]
        %v2335 = vld [vmem:[#allocation9 + $0x278] sm:$0xff]
        %v2336 = vld [vmem:[#allocation9 + $0x280] sm:$0xff]
        %v2337 = vld [vmem:[#allocation9 + $0x288] sm:$0xff]
        %v2338 = vld [vmem:[#allocation9 + $0x290] sm:$0xff]
        %v2339 = vld [vmem:[#allocation9 + $0x298] sm:$0xff]
        %v2340 = vld [vmem:[#allocation9 + $0x2a0] sm:$0xff]
        %v2341 = vld [vmem:[#allocation9 + $0x2a8] sm:$0xff]
        %v2342 = vld [vmem:[#allocation9 + $0x2b0] sm:$0xff]
        %v2343 = vld [vmem:[#allocation9 + $0x2b8] sm:$0xff]
        %v2344 = vld [vmem:[#allocation9 + $0x2c0] sm:$0xff]
        %v2345 = vld [vmem:[#allocation9 + $0x2c8] sm:$0xff]
        %v2346 = vld [vmem:[#allocation9 + $0x2d0] sm:$0xff]
        %v2347 = vld [vmem:[#allocation9 + $0x2d8] sm:$0xff]
        %v2348 = vld [vmem:[#allocation9 + $0x2e0] sm:$0xff]
        %v2349 = vld [vmem:[#allocation9 + $0x2e8] sm:$0xff]
        %v2350 = vld [vmem:[#allocation9 + $0x2f0] sm:$0xff]
        %v2351 = vld [vmem:[#allocation9 + $0x2f8] sm:$0xff]
        %v2352 = vld [vmem:[#allocation9 + $0x300] sm:$0xff]
        %v2353 = vld [vmem:[#allocation9 + $0x308] sm:$0xff]
        %v2354 = vld [vmem:[#allocation9 + $0x310] sm:$0xff]
        %v2355 = vld [vmem:[#allocation9 + $0x318] sm:$0xff]
        %v2356 = vld [vmem:[#allocation9 + $0x320] sm:$0xff]
        %v2357 = vld [vmem:[#allocation9 + $0x328] sm:$0xff]
        %v2358 = vld [vmem:[#allocation9 + $0x330] sm:$0xff]
        %v2359 = vld [vmem:[#allocation9 + $0x338] sm:$0xff]
        %v2360 = vld [vmem:[#allocation9 + $0x340] sm:$0xff]
        %v2361 = vld [vmem:[#allocation9 + $0x348] sm:$0xff]
        %v2362 = vld [vmem:[#allocation9 + $0x350] sm:$0xff]
        %v2363 = vld [vmem:[#allocation9 + $0x358] sm:$0xff]
        %v2364 = vld [vmem:[#allocation9 + $0x360] sm:$0xff]
        %v2365 = vld [vmem:[#allocation9 + $0x368] sm:$0xff]
        %v2366 = vld [vmem:[#allocation9 + $0x370] sm:$0xff]
        %v2367 = vld [vmem:[#allocation9 + $0x378] sm:$0xff]
        %v2368 = vld [vmem:[#allocation9 + $0x380] sm:$0xff]
        %v2369 = vld [vmem:[#allocation9 + $0x388] sm:$0xff]
        %v2370 = vld [vmem:[#allocation9 + $0x390] sm:$0xff]
        %v2371 = vld [vmem:[#allocation9 + $0x398] sm:$0xff]
        %v2372 = vld [vmem:[#allocation9 + $0x3a0] sm:$0xff]
        %v2373 = vld [vmem:[#allocation9 + $0x3a8] sm:$0xff]
        %v2374 = vld [vmem:[#allocation9 + $0x3b0] sm:$0xff]
        %v2375 = vld [vmem:[#allocation9 + $0x3b8] sm:$0xff]
        %v2376 = vld [vmem:[#allocation9 + $0x3c0] sm:$0xff]
        %v2377 = vld [vmem:[#allocation9 + $0x3c8] sm:$0xff]
        %v2378 = vld [vmem:[#allocation9 + $0x3d0] sm:$0xff]
        %v2379 = vld [vmem:[#allocation9 + $0x3d8] sm:$0xff]
        %v2380 = vld [vmem:[#allocation9 + $0x3e0] sm:$0xff]
        %v2381 = vld [vmem:[#allocation9 + $0x3e8] sm:$0xff]
        %v2382 = vld [vmem:[#allocation9 + $0x3f0] sm:$0xff]
        %v2383 = vld [vmem:[#allocation9 + $0x3f8] sm:$0xff]
        %v2384 = vld [vmem:[#allocation9 + $0x400] sm:$0xff]
        %v2385 = vld [vmem:[#allocation9 + $0x408] sm:$0xff]
        %v2386 = vld [vmem:[#allocation9 + $0x410] sm:$0xff]
        %v2387 = vld [vmem:[#allocation9 + $0x418] sm:$0xff]
        %v2388 = vld [vmem:[#allocation9 + $0x420] sm:$0xff]
        %v2389 = vld [vmem:[#allocation9 + $0x428] sm:$0xff]
        %v2390 = vld [vmem:[#allocation9 + $0x430] sm:$0xff]
        %v2391 = vld [vmem:[#allocation9 + $0x438] sm:$0xff]
        %v2392 = vld [vmem:[#allocation9 + $0x440] sm:$0xff]
        %v2393 = vld [vmem:[#allocation9 + $0x448] sm:$0xff]
        %v2394 = vld [vmem:[#allocation9 + $0x450] sm:$0xff]
        %v2395 = vld [vmem:[#allocation9 + $0x458] sm:$0xff]
        %v2396 = vld [vmem:[#allocation9 + $0x460] sm:$0xff]
        %v2397 = vld [vmem:[#allocation9 + $0x468] sm:$0xff]
        %v2398 = vld [vmem:[#allocation9 + $0x470] sm:$0xff]
        %v2399 = vld [vmem:[#allocation9 + $0x478] sm:$0xff]
        %v2400 = vld [vmem:[#allocation11] sm:$0x1]
        %v2402 = vlaneseq
        %v2403 = vshrl.u32 %v2402, 7
        %v2404 = vsub.s32 0, %v2403
        %v2405 = vrot.slane %v2400, %v2404
        %2407 = vmatprep.subr.mxu0 0.0
        %2408 = vmatpush1.msra.mxu0 %v2256
        %2409 = vmatprep.subr.mxu0 0.0
        %2410 = vmatpush1.msra.mxu0 %v2257
        %2411 = vmatprep.subr.mxu0 0.0
        %2412 = vmatpush1.msra.mxu0 %v2258
        %2413 = vmatprep.subr.mxu0 0.0
        %2414 = vmatpush1.msra.mxu0 %v2259
        %2415 = vmatprep.subr.mxu0 0.0
        %2416 = vmatpush1.msra.mxu0 %v2260
        %2417 = vmatprep.subr.mxu0 0.0
        %2418 = vmatpush1.msra.mxu0 %v2261
        %2419 = vmatprep.subr.mxu0 0.0
        %2420 = vmatpush1.msra.mxu0 %v2262
        %2421 = vmatprep.subr.mxu0 0.0
        %2422 = vmatpush1.msra.mxu0 %v2263
        %2423 = vmatprep.subr.mxu0 0.0
        %2424 = vmatpush1.msra.mxu0 %v2264
        %2425 = vmatprep.subr.mxu0 0.0
        %2426 = vmatpush1.msra.mxu0 %v2265
        %2427 = vmatprep.subr.mxu0 0.0
        %2428 = vmatpush1.msra.mxu0 %v2266
        %2429 = vmatprep.subr.mxu0 0.0
        %2430 = vmatpush1.msra.mxu0 %v2267
        %2431 = vmatprep.subr.mxu0 0.0
        %2432 = vmatpush1.msra.mxu0 %v2268
        %2433 = vmatprep.subr.mxu0 0.0
        %2434 = vmatpush1.msra.mxu0 %v2269
        %2435 = vmatprep.subr.mxu0 0.0
        %2436 = vmatpush1.msra.mxu0 %v2270
        %2437 = vmatprep.subr.mxu0 0.0
        %2438 = vmatpush1.msra.mxu0 %v2271
        %2439 = vmatprep.subr.mxu0 0.0
        %2440 = vmatpush1.msra.mxu0 %v2272
        %2441 = vmatprep.subr.mxu0 0.0
        %2442 = vmatpush1.msra.mxu0 %v2273
        %2443 = vmatprep.subr.mxu0 0.0
        %2444 = vmatpush1.msra.mxu0 %v2274
        %2445 = vmatprep.subr.mxu0 0.0
        %2446 = vmatpush1.msra.mxu0 %v2275
        %2447 = vmatprep.subr.mxu0 0.0
        %2448 = vmatpush1.msra.mxu0 %v2276
        %2449 = vmatprep.subr.mxu0 0.0
        %2450 = vmatpush1.msra.mxu0 %v2277
        %2451 = vmatprep.subr.mxu0 0.0
        %2452 = vmatpush1.msra.mxu0 %v2278
        %2453 = vmatprep.subr.mxu0 0.0
        %2454 = vmatpush1.msra.mxu0 %v2279
        %2455 = vmatprep.subr.mxu0 0.0
        %2456 = vmatpush1.msra.mxu0 %v2280
        %2457 = vmatprep.subr.mxu0 0.0
        %2458 = vmatpush1.msra.mxu0 %v2281
        %2459 = vmatprep.subr.mxu0 0.0
        %2460 = vmatpush1.msra.mxu0 %v2282
        %2461 = vmatprep.subr.mxu0 0.0
        %2462 = vmatpush1.msra.mxu0 %v2283
        %2463 = vmatprep.subr.mxu0 0.0
        %2464 = vmatpush1.msra.mxu0 %v2284
        %2465 = vmatprep.subr.mxu0 0.0
        %2466 = vmatpush1.msra.mxu0 %v2285
        %2467 = vmatprep.subr.mxu0 0.0
        %2468 = vmatpush1.msra.mxu0 %v2286
        %2469 = vmatprep.subr.mxu0 0.0
        %2470 = vmatpush1.msra.mxu0 %v2287
        %2471 = vmatprep.mubr.f32.mxu0 %v1999
        %2472 = vmatmul.mubr.f32.gmra.mrb[0].mxu0 %v1967
        %v2473 = vpop.f32.mrb[0].mxu0
        %v2474 = vadd.f32 %v2405, %v2473
        %v2475 = vpop.f32.mrb[0].mxu0
        %2476 = vmatprep.mubr.f32.mxu0 %v2000
        %2477 = vmatmul.mubr.f32.gmra.mrb[0].mxu0 %v1968
        %v2478 = vpop.f32.mrb[0].mxu0
        %v2479 = vadd.f32 %v2405, %v2478
        %v2480 = vpop.f32.mrb[0].mxu0
        %2481 = vmatprep.mubr.f32.mxu0 %v2001
        %2482 = vmatmul.mubr.f32.gmra.mrb[0].mxu0 %v1969
        %v2483 = vpop.f32.mrb[0].mxu0
        %v2484 = vadd.f32 %v2405, %v2483
        %v2485 = vpop.f32.mrb[0].mxu0
        %2486 = vmatprep.mubr.f32.mxu0 %v2002
        %2487 = vmatmul.mubr.f32.gmra.mrb[0].mxu0 %v1970
        %v2488 = vpop.f32.mrb[0].mxu0
        %v2489 = vadd.f32 %v2405, %v2488
        %v2490 = vpop.f32.mrb[0].mxu0
        %2491 = vmatprep.mubr.f32.mxu0 %v2003
        %2492 = vmatmul.mubr.f32.gmra.mrb[0].mxu0 %v1971
        %v2493 = vpop.f32.mrb[0].mxu0
        %v2494 = vadd.f32 %v2405, %v2493
        %v2495 = vpop.f32.mrb[0].mxu0
        %2496 = vmatprep.mubr.f32.mxu0 %v2004
        %2497 = vmatmul.mubr.f32.gmra.mrb[0].mxu0 %v1972
        %v2498 = vpop.f32.mrb[0].mxu0
        %v2499 = vadd.f32 %v2405, %v2498
        %v2500 = vpop.f32.mrb[0].mxu0
        %2501 = vmatprep.mubr.f32.mxu0 %v2005
        %2502 = vmatmul.mubr.f32.gmra.mrb[0].mxu0 %v1973
        %v2503 = vpop.f32.mrb[0].mxu0
        %v2504 = vadd.f32 %v2405, %v2503
        %v2505 = vpop.f32.mrb[0].mxu0
        %2506 = vmatprep.mubr.f32.mxu0 %v2006
        %2507 = vmatmul.mubr.f32.gmra.mrb[0].mxu0 %v1974
        %v2508 = vpop.f32.mrb[0].mxu0
        %v2509 = vadd.f32 %v2405, %v2508
        %v2510 = vpop.f32.mrb[0].mxu0
        %2511 = vmatprep.mubr.f32.mxu0 %v2007
        %2512 = vmatmul.mubr.f32.gmra.mrb[0].mxu0 %v1975
        %v2513 = vpop.f32.mrb[0].mxu0
        %v2514 = vadd.f32 %v2405, %v2513
        %v2515 = vpop.f32.mrb[0].mxu0
        %2516 = vmatprep.mubr.f32.mxu0 %v2008
        %2517 = vmatmul.mubr.f32.gmra.mrb[0].mxu0 %v1976
        %v2518 = vpop.f32.mrb[0].mxu0
        %v2519 = vadd.f32 %v2405, %v2518
        %v2520 = vpop.f32.mrb[0].mxu0
        %2521 = vmatprep.mubr.f32.mxu0 %v2009
        %2522 = vmatmul.mubr.f32.gmra.mrb[0].mxu0 %v1977
        %v2523 = vpop.f32.mrb[0].mxu0
        %v2524 = vadd.f32 %v2405, %v2523
        %v2525 = vpop.f32.mrb[0].mxu0
        %2526 = vmatprep.mubr.f32.mxu0 %v2010
        %2527 = vmatmul.mubr.f32.gmra.mrb[0].mxu0 %v1978
        %v2528 = vpop.f32.mrb[0].mxu0
        %v2529 = vadd.f32 %v2405, %v2528
        %v2530 = vpop.f32.mrb[0].mxu0
        %2531 = vmatprep.mubr.f32.mxu0 %v2011
        %2532 = vmatmul.mubr.f32.gmra.mrb[0].mxu0 %v1979
        %v2533 = vpop.f32.mrb[0].mxu0
        %v2534 = vadd.f32 %v2405, %v2533
        %v2535 = vpop.f32.mrb[0].mxu0
        %2536 = vmatprep.mubr.f32.mxu0 %v2012
        %2537 = vmatmul.mubr.f32.gmra.mrb[0].mxu0 %v1980
        %v2538 = vpop.f32.mrb[0].mxu0
        %v2539 = vadd.f32 %v2405, %v2538
        %v2540 = vpop.f32.mrb[0].mxu0
        %2541 = vmatprep.mubr.f32.mxu0 %v2013
        %2542 = vmatmul.mubr.f32.gmra.mrb[0].mxu0 %v1981
        %v2543 = vpop.f32.mrb[0].mxu0
        %v2544 = vadd.f32 %v2405, %v2543
        %v2545 = vpop.f32.mrb[0].mxu0
        %2546 = vmatprep.mubr.f32.mxu0 %v2014
        %2547 = vmatmul.mubr.f32.gmra.mrb[0].mxu0 %v1982
        %v2548 = vpop.f32.mrb[0].mxu0
        %v2549 = vadd.f32 %v2405, %v2548
        %v2550 = vpop.f32.mrb[0].mxu0
        %2551 = vmatprep.mubr.f32.mxu0 %v2015
        %2552 = vmatmul.mubr.f32.gmra.mrb[0].mxu0 %v1983
        %v2553 = vpop.f32.mrb[0].mxu0
        %v2554 = vadd.f32 %v2405, %v2553
        %v2555 = vpop.f32.mrb[0].mxu0
        %2556 = vmatprep.mubr.f32.mxu0 %v2016
        %2557 = vmatmul.mubr.f32.gmra.mrb[0].mxu0 %v1984
        %v2558 = vpop.f32.mrb[0].mxu0
        %v2559 = vadd.f32 %v2405, %v2558
        %v2560 = vpop.f32.mrb[0].mxu0
        %2561 = vmatprep.mubr.f32.mxu0 %v2017
        %2562 = vmatmul.mubr.f32.gmra.mrb[0].mxu0 %v1985
        %v2563 = vpop.f32.mrb[0].mxu0
        %v2564 = vadd.f32 %v2405, %v2563
        %v2565 = vpop.f32.mrb[0].mxu0
        %2566 = vmatprep.mubr.f32.mxu0 %v2018
        %2567 = vmatmul.mubr.f32.gmra.mrb[0].mxu0 %v1986
        %v2568 = vpop.f32.mrb[0].mxu0
        %v2569 = vadd.f32 %v2405, %v2568
        %v2570 = vpop.f32.mrb[0].mxu0
        %2571 = vmatprep.mubr.f32.mxu0 %v2019
        %2572 = vmatmul.mubr.f32.gmra.mrb[0].mxu0 %v1987
        %v2573 = vpop.f32.mrb[0].mxu0
        %v2574 = vadd.f32 %v2405, %v2573
        %v2575 = vpop.f32.mrb[0].mxu0
        %2576 = vmatprep.mubr.f32.mxu0 %v2020
        %2577 = vmatmul.mubr.f32.gmra.mrb[0].mxu0 %v1988
        %v2578 = vpop.f32.mrb[0].mxu0
        %v2579 = vadd.f32 %v2405, %v2578
        %v2580 = vpop.f32.mrb[0].mxu0
        %2581 = vmatprep.mubr.f32.mxu0 %v2021
        %2582 = vmatmul.mubr.f32.gmra.mrb[0].mxu0 %v1989
        %v2583 = vpop.f32.mrb[0].mxu0
        %v2584 = vadd.f32 %v2405, %v2583
        %v2585 = vpop.f32.mrb[0].mxu0
        %2586 = vmatprep.mubr.f32.mxu0 %v2022
        %2587 = vmatmul.mubr.f32.gmra.mrb[0].mxu0 %v1990
        %v2588 = vpop.f32.mrb[0].mxu0
        %v2589 = vadd.f32 %v2405, %v2588
        %v2590 = vpop.f32.mrb[0].mxu0
        %2591 = vmatprep.mubr.f32.mxu0 %v2023
        %2592 = vmatmul.mubr.f32.gmra.mrb[0].mxu0 %v1991
        %v2593 = vpop.f32.mrb[0].mxu0
        %v2594 = vadd.f32 %v2405, %v2593
        %v2595 = vpop.f32.mrb[0].mxu0
        %2596 = vmatprep.mubr.f32.mxu0 %v2024
        %2597 = vmatmul.mubr.f32.gmra.mrb[0].mxu0 %v1992
        %v2598 = vpop.f32.mrb[0].mxu0
        %v2599 = vadd.f32 %v2405, %v2598
        %v2600 = vpop.f32.mrb[0].mxu0
        %2601 = vmatprep.mubr.f32.mxu0 %v2025
        %2602 = vmatmul.mubr.f32.gmra.mrb[0].mxu0 %v1993
        %v2603 = vpop.f32.mrb[0].mxu0
        %v2604 = vadd.f32 %v2405, %v2603
        %v2605 = vpop.f32.mrb[0].mxu0
        %2606 = vmatprep.mubr.f32.mxu0 %v2026
        %2607 = vmatmul.mubr.f32.gmra.mrb[0].mxu0 %v1994
        %v2608 = vpop.f32.mrb[0].mxu0
        %v2609 = vadd.f32 %v2405, %v2608
        %v2610 = vpop.f32.mrb[0].mxu0
        %2611 = vmatprep.mubr.f32.mxu0 %v2027
        %2612 = vmatmul.mubr.f32.gmra.mrb[0].mxu0 %v1995
        %v2613 = vpop.f32.mrb[0].mxu0
        %v2614 = vadd.f32 %v2405, %v2613
        %v2615 = vpop.f32.mrb[0].mxu0
        %2616 = vmatprep.mubr.f32.mxu0 %v2028
        %2617 = vmatmul.mubr.f32.gmra.mrb[0].mxu0 %v1996
        %v2618 = vpop.f32.mrb[0].mxu0
        %v2619 = vadd.f32 %v2405, %v2618
        %v2620 = vpop.f32.mrb[0].mxu0
        %2621 = vmatprep.mubr.f32.mxu0 %v2029
        %2622 = vmatmul.mubr.f32.gmra.mrb[0].mxu0 %v1997
        %v2623 = vpop.f32.mrb[0].mxu0
        %v2624 = vadd.f32 %v2405, %v2623
        %v2625 = vpop.f32.mrb[0].mxu0
        %2626 = vmatprep.mubr.f32.mxu0 %v2030
        %2627 = vmatmul.mubr.f32.gmra.mrb[0].mxu0 %v1998
        %v2628 = vpop.f32.mrb[0].mxu0
        %v2629 = vadd.f32 %v2405, %v2628
        %v2630 = vpop.f32.mrb[0].mxu0
        %2631 = vdwg.mxu0
        %2632 = vmatprep.subr.mxu0 0.0
        %2633 = vmatpush1.msra.mxu0 %v2288
        %2634 = vmatprep.subr.mxu0 0.0
        %2635 = vmatpush1.msra.mxu0 %v2289
        %2636 = vmatprep.subr.mxu0 0.0
        %2637 = vmatpush1.msra.mxu0 %v2290
        %2638 = vmatprep.subr.mxu0 0.0
        %2639 = vmatpush1.msra.mxu0 %v2291
        %2640 = vmatprep.subr.mxu0 0.0
        %2641 = vmatpush1.msra.mxu0 %v2292
        %2642 = vmatprep.subr.mxu0 0.0
        %2643 = vmatpush1.msra.mxu0 %v2293
        %2644 = vmatprep.subr.mxu0 0.0
        %2645 = vmatpush1.msra.mxu0 %v2294
        %2646 = vmatprep.subr.mxu0 0.0
        %2647 = vmatpush1.msra.mxu0 %v2295
        %2648 = vmatprep.subr.mxu0 0.0
        %2649 = vmatpush1.msra.mxu0 %v2296
        %2650 = vmatprep.subr.mxu0 0.0
        %2651 = vmatpush1.msra.mxu0 %v2297
        %2652 = vmatprep.subr.mxu0 0.0
        %2653 = vmatpush1.msra.mxu0 %v2298
        %2654 = vmatprep.subr.mxu0 0.0
        %2655 = vmatpush1.msra.mxu0 %v2299
        %2656 = vmatprep.subr.mxu0 0.0
        %2657 = vmatpush1.msra.mxu0 %v2300
        %2658 = vmatprep.subr.mxu0 0.0
        %2659 = vmatpush1.msra.mxu0 %v2301
        %2660 = vmatprep.subr.mxu0 0.0
        %2661 = vmatpush1.msra.mxu0 %v2302
        %2662 = vmatprep.subr.mxu0 0.0
        %2663 = vmatpush1.msra.mxu0 %v2303
        %2664 = vmatprep.subr.mxu0 0.0
        %2665 = vmatpush1.msra.mxu0 %v2304
        %2666 = vmatprep.subr.mxu0 0.0
        %2667 = vmatpush1.msra.mxu0 %v2305
        %2668 = vmatprep.subr.mxu0 0.0
        %2669 = vmatpush1.msra.mxu0 %v2306
        %2670 = vmatprep.subr.mxu0 0.0
        %2671 = vmatpush1.msra.mxu0 %v2307
        %2672 = vmatprep.subr.mxu0 0.0
        %2673 = vmatpush1.msra.mxu0 %v2308
        %2674 = vmatprep.subr.mxu0 0.0
        %2675 = vmatpush1.msra.mxu0 %v2309
        %2676 = vmatprep.subr.mxu0 0.0
        %2677 = vmatpush1.msra.mxu0 %v2310
        %2678 = vmatprep.subr.mxu0 0.0
        %2679 = vmatpush1.msra.mxu0 %v2311
        %2680 = vmatprep.subr.mxu0 0.0
        %2681 = vmatpush1.msra.mxu0 %v2312
        %2682 = vmatprep.subr.mxu0 0.0
        %2683 = vmatpush1.msra.mxu0 %v2313
        %2684 = vmatprep.subr.mxu0 0.0
        %2685 = vmatpush1.msra.mxu0 %v2314
        %2686 = vmatprep.subr.mxu0 0.0
        %2687 = vmatpush1.msra.mxu0 %v2315
        %2688 = vmatprep.subr.mxu0 0.0
        %2689 = vmatpush1.msra.mxu0 %v2316
        %2690 = vmatprep.subr.mxu0 0.0
        %2691 = vmatpush1.msra.mxu0 %v2317
        %2692 = vmatprep.subr.mxu0 0.0
        %2693 = vmatpush1.msra.mxu0 %v2318
        %2694 = vmatprep.subr.mxu0 0.0
        %2695 = vmatpush1.msra.mxu0 %v2319
        %2696 = vmatprep.mubr.f32.mxu0 %v2063
        %2697 = vmatmul.mubr.f32.gmra.mrb[0].mxu0 %v2031
        %v2698 = vpop.f32.mrb[0].mxu0
        %v2699 = vadd.f32 %v2474, %v2698
        %v2700 = vpop.f32.mrb[0].mxu0
        %2701 = vmatprep.mubr.f32.mxu0 %v2064
        %2702 = vmatmul.mubr.f32.gmra.mrb[0].mxu0 %v2032
        %v2703 = vpop.f32.mrb[0].mxu0
        %v2704 = vadd.f32 %v2479, %v2703
        %v2705 = vpop.f32.mrb[0].mxu0
        %2706 = vmatprep.mubr.f32.mxu0 %v2065
        %2707 = vmatmul.mubr.f32.gmra.mrb[0].mxu0 %v2033
        %v2708 = vpop.f32.mrb[0].mxu0
        %v2709 = vadd.f32 %v2484, %v2708
        %v2710 = vpop.f32.mrb[0].mxu0
        %2711 = vmatprep.mubr.f32.mxu0 %v2066
        %2712 = vmatmul.mubr.f32.gmra.mrb[0].mxu0 %v2034
        %v2713 = vpop.f32.mrb[0].mxu0
        %v2714 = vadd.f32 %v2489, %v2713
        %v2715 = vpop.f32.mrb[0].mxu0
        %2716 = vmatprep.mubr.f32.mxu0 %v2067
        %2717 = vmatmul.mubr.f32.gmra.mrb[0].mxu0 %v2035
        %v2718 = vpop.f32.mrb[0].mxu0
        %v2719 = vadd.f32 %v2494, %v2718
        %v2720 = vpop.f32.mrb[0].mxu0
        %2721 = vmatprep.mubr.f32.mxu0 %v2068
        %2722 = vmatmul.mubr.f32.gmra.mrb[0].mxu0 %v2036
        %v2723 = vpop.f32.mrb[0].mxu0
        %v2724 = vadd.f32 %v2499, %v2723
        %v2725 = vpop.f32.mrb[0].mxu0
        %2726 = vmatprep.mubr.f32.mxu0 %v2069
        %2727 = vmatmul.mubr.f32.gmra.mrb[0].mxu0 %v2037
        %v2728 = vpop.f32.mrb[0].mxu0
        %v2729 = vadd.f32 %v2504, %v2728
        %v2730 = vpop.f32.mrb[0].mxu0
        %2731 = vmatprep.mubr.f32.mxu0 %v2070
        %2732 = vmatmul.mubr.f32.gmra.mrb[0].mxu0 %v2038
        %v2733 = vpop.f32.mrb[0].mxu0
        %v2734 = vadd.f32 %v2509, %v2733
        %v2735 = vpop.f32.mrb[0].mxu0
        %2736 = vmatprep.mubr.f32.mxu0 %v2071
        %2737 = vmatmul.mubr.f32.gmra.mrb[0].mxu0 %v2039
        %v2738 = vpop.f32.mrb[0].mxu0
        %v2739 = vadd.f32 %v2514, %v2738
        %v2740 = vpop.f32.mrb[0].mxu0
        %2741 = vmatprep.mubr.f32.mxu0 %v2072
        %2742 = vmatmul.mubr.f32.gmra.mrb[0].mxu0 %v2040
        %v2743 = vpop.f32.mrb[0].mxu0
        %v2744 = vadd.f32 %v2519, %v2743
        %v2745 = vpop.f32.mrb[0].mxu0
        %2746 = vmatprep.mubr.f32.mxu0 %v2073
        %2747 = vmatmul.mubr.f32.gmra.mrb[0].mxu0 %v2041
        %v2748 = vpop.f32.mrb[0].mxu0
        %v2749 = vadd.f32 %v2524, %v2748
        %v2750 = vpop.f32.mrb[0].mxu0
        %2751 = vmatprep.mubr.f32.mxu0 %v2074
        %2752 = vmatmul.mubr.f32.gmra.mrb[0].mxu0 %v2042
        %v2753 = vpop.f32.mrb[0].mxu0
        %v2754 = vadd.f32 %v2529, %v2753
        %v2755 = vpop.f32.mrb[0].mxu0
        %2756 = vmatprep.mubr.f32.mxu0 %v2075
        %2757 = vmatmul.mubr.f32.gmra.mrb[0].mxu0 %v2043
        %v2758 = vpop.f32.mrb[0].mxu0
        %v2759 = vadd.f32 %v2534, %v2758
        %v2760 = vpop.f32.mrb[0].mxu0
        %2761 = vmatprep.mubr.f32.mxu0 %v2076
        %2762 = vmatmul.mubr.f32.gmra.mrb[0].mxu0 %v2044
        %v2763 = vpop.f32.mrb[0].mxu0
        %v2764 = vadd.f32 %v2539, %v2763
        %v2765 = vpop.f32.mrb[0].mxu0
        %2766 = vmatprep.mubr.f32.mxu0 %v2077
        %2767 = vmatmul.mubr.f32.gmra.mrb[0].mxu0 %v2045
        %v2768 = vpop.f32.mrb[0].mxu0
        %v2769 = vadd.f32 %v2544, %v2768
        %v2770 = vpop.f32.mrb[0].mxu0
        %2771 = vmatprep.mubr.f32.mxu0 %v2078
        %2772 = vmatmul.mubr.f32.gmra.mrb[0].mxu0 %v2046
        %v2773 = vpop.f32.mrb[0].mxu0
        %v2774 = vadd.f32 %v2549, %v2773
        %v2775 = vpop.f32.mrb[0].mxu0
        %2776 = vmatprep.mubr.f32.mxu0 %v2079
        %2777 = vmatmul.mubr.f32.gmra.mrb[0].mxu0 %v2047
        %v2778 = vpop.f32.mrb[0].mxu0
        %v2779 = vadd.f32 %v2554, %v2778
        %v2780 = vpop.f32.mrb[0].mxu0
        %2781 = vmatprep.mubr.f32.mxu0 %v2080
        %2782 = vmatmul.mubr.f32.gmra.mrb[0].mxu0 %v2048
        %v2783 = vpop.f32.mrb[0].mxu0
        %v2784 = vadd.f32 %v2559, %v2783
        %v2785 = vpop.f32.mrb[0].mxu0
        %2786 = vmatprep.mubr.f32.mxu0 %v2081
        %2787 = vmatmul.mubr.f32.gmra.mrb[0].mxu0 %v2049
        %v2788 = vpop.f32.mrb[0].mxu0
        %v2789 = vadd.f32 %v2564, %v2788
        %v2790 = vpop.f32.mrb[0].mxu0
        %2791 = vmatprep.mubr.f32.mxu0 %v2082
        %2792 = vmatmul.mubr.f32.gmra.mrb[0].mxu0 %v2050
        %v2793 = vpop.f32.mrb[0].mxu0
        %v2794 = vadd.f32 %v2569, %v2793
        %v2795 = vpop.f32.mrb[0].mxu0
        %2796 = vmatprep.mubr.f32.mxu0 %v2083
        %2797 = vmatmul.mubr.f32.gmra.mrb[0].mxu0 %v2051
        %v2798 = vpop.f32.mrb[0].mxu0
        %v2799 = vadd.f32 %v2574, %v2798
        %v2800 = vpop.f32.mrb[0].mxu0
        %2801 = vmatprep.mubr.f32.mxu0 %v2084
        %2802 = vmatmul.mubr.f32.gmra.mrb[0].mxu0 %v2052
        %v2803 = vpop.f32.mrb[0].mxu0
        %v2804 = vadd.f32 %v2579, %v2803
        %v2805 = vpop.f32.mrb[0].mxu0
        %2806 = vmatprep.mubr.f32.mxu0 %v2085
        %2807 = vmatmul.mubr.f32.gmra.mrb[0].mxu0 %v2053
        %v2808 = vpop.f32.mrb[0].mxu0
        %v2809 = vadd.f32 %v2584, %v2808
        %v2810 = vpop.f32.mrb[0].mxu0
        %2811 = vmatprep.mubr.f32.mxu0 %v2086
        %2812 = vmatmul.mubr.f32.gmra.mrb[0].mxu0 %v2054
        %v2813 = vpop.f32.mrb[0].mxu0
        %v2814 = vadd.f32 %v2589, %v2813
        %v2815 = vpop.f32.mrb[0].mxu0
        %2816 = vmatprep.mubr.f32.mxu0 %v2087
        %2817 = vmatmul.mubr.f32.gmra.mrb[0].mxu0 %v2055
        %v2818 = vpop.f32.mrb[0].mxu0
        %v2819 = vadd.f32 %v2594, %v2818
        %v2820 = vpop.f32.mrb[0].mxu0
        %2821 = vmatprep.mubr.f32.mxu0 %v2088
        %2822 = vmatmul.mubr.f32.gmra.mrb[0].mxu0 %v2056
        %v2823 = vpop.f32.mrb[0].mxu0
        %v2824 = vadd.f32 %v2599, %v2823
        %v2825 = vpop.f32.mrb[0].mxu0
        %2826 = vmatprep.mubr.f32.mxu0 %v2089
        %2827 = vmatmul.mubr.f32.gmra.mrb[0].mxu0 %v2057
        %v2828 = vpop.f32.mrb[0].mxu0
        %v2829 = vadd.f32 %v2604, %v2828
        %v2830 = vpop.f32.mrb[0].mxu0
        %2831 = vmatprep.mubr.f32.mxu0 %v2090
        %2832 = vmatmul.mubr.f32.gmra.mrb[0].mxu0 %v2058
        %v2833 = vpop.f32.mrb[0].mxu0
        %v2834 = vadd.f32 %v2609, %v2833
        %v2835 = vpop.f32.mrb[0].mxu0
        %2836 = vmatprep.mubr.f32.mxu0 %v2091
        %2837 = vmatmul.mubr.f32.gmra.mrb[0].mxu0 %v2059
        %v2838 = vpop.f32.mrb[0].mxu0
        %v2839 = vadd.f32 %v2614, %v2838
        %v2840 = vpop.f32.mrb[0].mxu0
        %2841 = vmatprep.mubr.f32.mxu0 %v2092
        %2842 = vmatmul.mubr.f32.gmra.mrb[0].mxu0 %v2060
        %v2843 = vpop.f32.mrb[0].mxu0
        %v2844 = vadd.f32 %v2619, %v2843
        %v2845 = vpop.f32.mrb[0].mxu0
        %2846 = vmatprep.mubr.f32.mxu0 %v2093
        %2847 = vmatmul.mubr.f32.gmra.mrb[0].mxu0 %v2061
        %v2848 = vpop.f32.mrb[0].mxu0
        %v2849 = vadd.f32 %v2624, %v2848
        %v2850 = vpop.f32.mrb[0].mxu0
        %2851 = vmatprep.mubr.f32.mxu0 %v2094
        %2852 = vmatmul.mubr.f32.gmra.mrb[0].mxu0 %v2062
        %v2853 = vpop.f32.mrb[0].mxu0
        %v2854 = vadd.f32 %v2629, %v2853
        %v2855 = vpop.f32.mrb[0].mxu0
        %2856 = vdwg.mxu0
        %2857 = vmatprep.subr.mxu0 0.0
        %2858 = vmatpush1.msra.mxu0 %v2320
        %2859 = vmatprep.subr.mxu0 0.0
        %2860 = vmatpush1.msra.mxu0 %v2321
        %2861 = vmatprep.subr.mxu0 0.0
        %2862 = vmatpush1.msra.mxu0 %v2322
        %2863 = vmatprep.subr.mxu0 0.0
        %2864 = vmatpush1.msra.mxu0 %v2323
        %2865 = vmatprep.subr.mxu0 0.0
        %2866 = vmatpush1.msra.mxu0 %v2324
        %2867 = vmatprep.subr.mxu0 0.0
        %2868 = vmatpush1.msra.mxu0 %v2325
        %2869 = vmatprep.subr.mxu0 0.0
        %2870 = vmatpush1.msra.mxu0 %v2326
        %2871 = vmatprep.subr.mxu0 0.0
        %2872 = vmatpush1.msra.mxu0 %v2327
        %2873 = vmatprep.subr.mxu0 0.0
        %2874 = vmatpush1.msra.mxu0 %v2328
        %2875 = vmatprep.subr.mxu0 0.0
        %2876 = vmatpush1.msra.mxu0 %v2329
        %2877 = vmatprep.subr.mxu0 0.0
        %2878 = vmatpush1.msra.mxu0 %v2330
        %2879 = vmatprep.subr.mxu0 0.0
        %2880 = vmatpush1.msra.mxu0 %v2331
        %2881 = vmatprep.subr.mxu0 0.0
        %2882 = vmatpush1.msra.mxu0 %v2332
        %2883 = vmatprep.subr.mxu0 0.0
        %2884 = vmatpush1.msra.mxu0 %v2333
        %2885 = vmatprep.subr.mxu0 0.0
        %2886 = vmatpush1.msra.mxu0 %v2334
        %2887 = vmatprep.subr.mxu0 0.0
        %2888 = vmatpush1.msra.mxu0 %v2335
        %2889 = vmatprep.subr.mxu0 0.0
        %2890 = vmatpush1.msra.mxu0 %v2336
        %2891 = vmatprep.subr.mxu0 0.0
        %2892 = vmatpush1.msra.mxu0 %v2337
        %2893 = vmatprep.subr.mxu0 0.0
        %2894 = vmatpush1.msra.mxu0 %v2338
        %2895 = vmatprep.subr.mxu0 0.0
        %2896 = vmatpush1.msra.mxu0 %v2339
        %2897 = vmatprep.subr.mxu0 0.0
        %2898 = vmatpush1.msra.mxu0 %v2340
        %2899 = vmatprep.subr.mxu0 0.0
        %2900 = vmatpush1.msra.mxu0 %v2341
        %2901 = vmatprep.subr.mxu0 0.0
        %2902 = vmatpush1.msra.mxu0 %v2342
        %2903 = vmatprep.subr.mxu0 0.0
        %2904 = vmatpush1.msra.mxu0 %v2343
        %2905 = vmatprep.subr.mxu0 0.0
        %2906 = vmatpush1.msra.mxu0 %v2344
        %2907 = vmatprep.subr.mxu0 0.0
        %2908 = vmatpush1.msra.mxu0 %v2345
        %2909 = vmatprep.subr.mxu0 0.0
        %2910 = vmatpush1.msra.mxu0 %v2346
        %2911 = vmatprep.subr.mxu0 0.0
        %2912 = vmatpush1.msra.mxu0 %v2347
        %2913 = vmatprep.subr.mxu0 0.0
        %2914 = vmatpush1.msra.mxu0 %v2348
        %2915 = vmatprep.subr.mxu0 0.0
        %2916 = vmatpush1.msra.mxu0 %v2349
        %2917 = vmatprep.subr.mxu0 0.0
        %2918 = vmatpush1.msra.mxu0 %v2350
        %2919 = vmatprep.subr.mxu0 0.0
        %2920 = vmatpush1.msra.mxu0 %v2351
        %2921 = vmatprep.mubr.f32.mxu0 %v2127
        %2922 = vmatmul.mubr.f32.gmra.mrb[0].mxu0 %v2095
        %v2923 = vpop.f32.mrb[0].mxu0
        %v2924 = vadd.f32 %v2699, %v2923
        %v2925 = vpop.f32.mrb[0].mxu0
        %2926 = vmatprep.mubr.f32.mxu0 %v2128
        %2927 = vmatmul.mubr.f32.gmra.mrb[0].mxu0 %v2096
        %v2928 = vpop.f32.mrb[0].mxu0
        %v2929 = vadd.f32 %v2704, %v2928
        %v2930 = vpop.f32.mrb[0].mxu0
        %2931 = vmatprep.mubr.f32.mxu0 %v2129
        %2932 = vmatmul.mubr.f32.gmra.mrb[0].mxu0 %v2097
        %v2933 = vpop.f32.mrb[0].mxu0
        %v2934 = vadd.f32 %v2709, %v2933
        %v2935 = vpop.f32.mrb[0].mxu0
        %2936 = vmatprep.mubr.f32.mxu0 %v2130
        %2937 = vmatmul.mubr.f32.gmra.mrb[0].mxu0 %v2098
        %v2938 = vpop.f32.mrb[0].mxu0
        %v2939 = vadd.f32 %v2714, %v2938
        %v2940 = vpop.f32.mrb[0].mxu0
        %2941 = vmatprep.mubr.f32.mxu0 %v2131
        %2942 = vmatmul.mubr.f32.gmra.mrb[0].mxu0 %v2099
        %v2943 = vpop.f32.mrb[0].mxu0
        %v2944 = vadd.f32 %v2719, %v2943
        %v2945 = vpop.f32.mrb[0].mxu0
        %2946 = vmatprep.mubr.f32.mxu0 %v2132
        %2947 = vmatmul.mubr.f32.gmra.mrb[0].mxu0 %v2100
        %v2948 = vpop.f32.mrb[0].mxu0
        %v2949 = vadd.f32 %v2724, %v2948
        %v2950 = vpop.f32.mrb[0].mxu0
        %2951 = vmatprep.mubr.f32.mxu0 %v2133
        %2952 = vmatmul.mubr.f32.gmra.mrb[0].mxu0 %v2101
        %v2953 = vpop.f32.mrb[0].mxu0
        %v2954 = vadd.f32 %v2729, %v2953
        %v2955 = vpop.f32.mrb[0].mxu0
        %2956 = vmatprep.mubr.f32.mxu0 %v2134
        %2957 = vmatmul.mubr.f32.gmra.mrb[0].mxu0 %v2102
        %v2958 = vpop.f32.mrb[0].mxu0
        %v2959 = vadd.f32 %v2734, %v2958
        %v2960 = vpop.f32.mrb[0].mxu0
        %2961 = vmatprep.mubr.f32.mxu0 %v2135
        %2962 = vmatmul.mubr.f32.gmra.mrb[0].mxu0 %v2103
        %v2963 = vpop.f32.mrb[0].mxu0
        %v2964 = vadd.f32 %v2739, %v2963
        %v2965 = vpop.f32.mrb[0].mxu0
        %2966 = vmatprep.mubr.f32.mxu0 %v2136
        %2967 = vmatmul.mubr.f32.gmra.mrb[0].mxu0 %v2104
        %v2968 = vpop.f32.mrb[0].mxu0
        %v2969 = vadd.f32 %v2744, %v2968
        %v2970 = vpop.f32.mrb[0].mxu0
        %2971 = vmatprep.mubr.f32.mxu0 %v2137
        %2972 = vmatmul.mubr.f32.gmra.mrb[0].mxu0 %v2105
        %v2973 = vpop.f32.mrb[0].mxu0
        %v2974 = vadd.f32 %v2749, %v2973
        %v2975 = vpop.f32.mrb[0].mxu0
        %2976 = vmatprep.mubr.f32.mxu0 %v2138
        %2977 = vmatmul.mubr.f32.gmra.mrb[0].mxu0 %v2106
        %v2978 = vpop.f32.mrb[0].mxu0
        %v2979 = vadd.f32 %v2754, %v2978
        %v2980 = vpop.f32.mrb[0].mxu0
        %2981 = vmatprep.mubr.f32.mxu0 %v2139
        %2982 = vmatmul.mubr.f32.gmra.mrb[0].mxu0 %v2107
        %v2983 = vpop.f32.mrb[0].mxu0
        %v2984 = vadd.f32 %v2759, %v2983
        %v2985 = vpop.f32.mrb[0].mxu0
        %2986 = vmatprep.mubr.f32.mxu0 %v2140
        %2987 = vmatmul.mubr.f32.gmra.mrb[0].mxu0 %v2108
        %v2988 = vpop.f32.mrb[0].mxu0
        %v2989 = vadd.f32 %v2764, %v2988
        %v2990 = vpop.f32.mrb[0].mxu0
        %2991 = vmatprep.mubr.f32.mxu0 %v2141
        %2992 = vmatmul.mubr.f32.gmra.mrb[0].mxu0 %v2109
        %v2993 = vpop.f32.mrb[0].mxu0
        %v2994 = vadd.f32 %v2769, %v2993
        %v2995 = vpop.f32.mrb[0].mxu0
        %2996 = vmatprep.mubr.f32.mxu0 %v2142
        %2997 = vmatmul.mubr.f32.gmra.mrb[0].mxu0 %v2110
        %v2998 = vpop.f32.mrb[0].mxu0
        %v2999 = vadd.f32 %v2774, %v2998
        %v3000 = vpop.f32.mrb[0].mxu0
        %3001 = vmatprep.mubr.f32.mxu0 %v2143
        %3002 = vmatmul.mubr.f32.gmra.mrb[0].mxu0 %v2111
        %v3003 = vpop.f32.mrb[0].mxu0
        %v3004 = vadd.f32 %v2779, %v3003
        %v3005 = vpop.f32.mrb[0].mxu0
        %3006 = vmatprep.mubr.f32.mxu0 %v2144
        %3007 = vmatmul.mubr.f32.gmra.mrb[0].mxu0 %v2112
        %v3008 = vpop.f32.mrb[0].mxu0
        %v3009 = vadd.f32 %v2784, %v3008
        %v3010 = vpop.f32.mrb[0].mxu0
        %3011 = vmatprep.mubr.f32.mxu0 %v2145
        %3012 = vmatmul.mubr.f32.gmra.mrb[0].mxu0 %v2113
        %v3013 = vpop.f32.mrb[0].mxu0
        %v3014 = vadd.f32 %v2789, %v3013
        %v3015 = vpop.f32.mrb[0].mxu0
        %3016 = vmatprep.mubr.f32.mxu0 %v2146
        %3017 = vmatmul.mubr.f32.gmra.mrb[0].mxu0 %v2114
        %v3018 = vpop.f32.mrb[0].mxu0
        %v3019 = vadd.f32 %v2794, %v3018
        %v3020 = vpop.f32.mrb[0].mxu0
        %3021 = vmatprep.mubr.f32.mxu0 %v2147
        %3022 = vmatmul.mubr.f32.gmra.mrb[0].mxu0 %v2115
        %v3023 = vpop.f32.mrb[0].mxu0
        %v3024 = vadd.f32 %v2799, %v3023
        %v3025 = vpop.f32.mrb[0].mxu0
        %3026 = vmatprep.mubr.f32.mxu0 %v2148
        %3027 = vmatmul.mubr.f32.gmra.mrb[0].mxu0 %v2116
        %v3028 = vpop.f32.mrb[0].mxu0
        %v3029 = vadd.f32 %v2804, %v3028
        %v3030 = vpop.f32.mrb[0].mxu0
        %3031 = vmatprep.mubr.f32.mxu0 %v2149
        %3032 = vmatmul.mubr.f32.gmra.mrb[0].mxu0 %v2117
        %v3033 = vpop.f32.mrb[0].mxu0
        %v3034 = vadd.f32 %v2809, %v3033
        %v3035 = vpop.f32.mrb[0].mxu0
        %3036 = vmatprep.mubr.f32.mxu0 %v2150
        %3037 = vmatmul.mubr.f32.gmra.mrb[0].mxu0 %v2118
        %v3038 = vpop.f32.mrb[0].mxu0
        %v3039 = vadd.f32 %v2814, %v3038
        %v3040 = vpop.f32.mrb[0].mxu0
        %3041 = vmatprep.mubr.f32.mxu0 %v2151
        %3042 = vmatmul.mubr.f32.gmra.mrb[0].mxu0 %v2119
        %v3043 = vpop.f32.mrb[0].mxu0
        %v3044 = vadd.f32 %v2819, %v3043
        %v3045 = vpop.f32.mrb[0].mxu0
        %3046 = vmatprep.mubr.f32.mxu0 %v2152
        %3047 = vmatmul.mubr.f32.gmra.mrb[0].mxu0 %v2120
        %v3048 = vpop.f32.mrb[0].mxu0
        %v3049 = vadd.f32 %v2824, %v3048
        %v3050 = vpop.f32.mrb[0].mxu0
        %3051 = vmatprep.mubr.f32.mxu0 %v2153
        %3052 = vmatmul.mubr.f32.gmra.mrb[0].mxu0 %v2121
        %v3053 = vpop.f32.mrb[0].mxu0
        %v3054 = vadd.f32 %v2829, %v3053
        %v3055 = vpop.f32.mrb[0].mxu0
        %3056 = vmatprep.mubr.f32.mxu0 %v2154
        %3057 = vmatmul.mubr.f32.gmra.mrb[0].mxu0 %v2122
        %v3058 = vpop.f32.mrb[0].mxu0
        %v3059 = vadd.f32 %v2834, %v3058
        %v3060 = vpop.f32.mrb[0].mxu0
        %3061 = vmatprep.mubr.f32.mxu0 %v2155
        %3062 = vmatmul.mubr.f32.gmra.mrb[0].mxu0 %v2123
        %v3063 = vpop.f32.mrb[0].mxu0
        %v3064 = vadd.f32 %v2839, %v3063
        %v3065 = vpop.f32.mrb[0].mxu0
        %3066 = vmatprep.mubr.f32.mxu0 %v2156
        %3067 = vmatmul.mubr.f32.gmra.mrb[0].mxu0 %v2124
        %v3068 = vpop.f32.mrb[0].mxu0
        %v3069 = vadd.f32 %v2844, %v3068
        %v3070 = vpop.f32.mrb[0].mxu0
        %3071 = vmatprep.mubr.f32.mxu0 %v2157
        %3072 = vmatmul.mubr.f32.gmra.mrb[0].mxu0 %v2125
        %v3073 = vpop.f32.mrb[0].mxu0
        %v3074 = vadd.f32 %v2849, %v3073
        %v3075 = vpop.f32.mrb[0].mxu0
        %3076 = vmatprep.mubr.f32.mxu0 %v2158
        %3077 = vmatmul.mubr.f32.gmra.mrb[0].mxu0 %v2126
        %v3078 = vpop.f32.mrb[0].mxu0
        %v3079 = vadd.f32 %v2854, %v3078
        %v3080 = vpop.f32.mrb[0].mxu0
        %3081 = vdwg.mxu0
        %3082 = vmatprep.subr.mxu0 0.0
        %3083 = vmatpush1.msra.mxu0 %v2352
        %3084 = vmatprep.subr.mxu0 0.0
        %3085 = vmatpush1.msra.mxu0 %v2353
        %3086 = vmatprep.subr.mxu0 0.0
        %3087 = vmatpush1.msra.mxu0 %v2354
        %3088 = vmatprep.subr.mxu0 0.0
        %3089 = vmatpush1.msra.mxu0 %v2355
        %3090 = vmatprep.subr.mxu0 0.0
        %3091 = vmatpush1.msra.mxu0 %v2356
        %3092 = vmatprep.subr.mxu0 0.0
        %3093 = vmatpush1.msra.mxu0 %v2357
        %3094 = vmatprep.subr.mxu0 0.0
        %3095 = vmatpush1.msra.mxu0 %v2358
        %3096 = vmatprep.subr.mxu0 0.0
        %3097 = vmatpush1.msra.mxu0 %v2359
        %3098 = vmatprep.subr.mxu0 0.0
        %3099 = vmatpush1.msra.mxu0 %v2360
        %3100 = vmatprep.subr.mxu0 0.0
        %3101 = vmatpush1.msra.mxu0 %v2361
        %3102 = vmatprep.subr.mxu0 0.0
        %3103 = vmatpush1.msra.mxu0 %v2362
        %3104 = vmatprep.subr.mxu0 0.0
        %3105 = vmatpush1.msra.mxu0 %v2363
        %3106 = vmatprep.subr.mxu0 0.0
        %3107 = vmatpush1.msra.mxu0 %v2364
        %3108 = vmatprep.subr.mxu0 0.0
        %3109 = vmatpush1.msra.mxu0 %v2365
        %3110 = vmatprep.subr.mxu0 0.0
        %3111 = vmatpush1.msra.mxu0 %v2366
        %3112 = vmatprep.subr.mxu0 0.0
        %3113 = vmatpush1.msra.mxu0 %v2367
        %3114 = vmatprep.subr.mxu0 0.0
        %3115 = vmatpush1.msra.mxu0 %v2368
        %3116 = vmatprep.subr.mxu0 0.0
        %3117 = vmatpush1.msra.mxu0 %v2369
        %3118 = vmatprep.subr.mxu0 0.0
        %3119 = vmatpush1.msra.mxu0 %v2370
        %3120 = vmatprep.subr.mxu0 0.0
        %3121 = vmatpush1.msra.mxu0 %v2371
        %3122 = vmatprep.subr.mxu0 0.0
        %3123 = vmatpush1.msra.mxu0 %v2372
        %3124 = vmatprep.subr.mxu0 0.0
        %3125 = vmatpush1.msra.mxu0 %v2373
        %3126 = vmatprep.subr.mxu0 0.0
        %3127 = vmatpush1.msra.mxu0 %v2374
        %3128 = vmatprep.subr.mxu0 0.0
        %3129 = vmatpush1.msra.mxu0 %v2375
        %3130 = vmatprep.subr.mxu0 0.0
        %3131 = vmatpush1.msra.mxu0 %v2376
        %3132 = vmatprep.subr.mxu0 0.0
        %3133 = vmatpush1.msra.mxu0 %v2377
        %3134 = vmatprep.subr.mxu0 0.0
        %3135 = vmatpush1.msra.mxu0 %v2378
        %3136 = vmatprep.subr.mxu0 0.0
        %3137 = vmatpush1.msra.mxu0 %v2379
        %3138 = vmatprep.subr.mxu0 0.0
        %3139 = vmatpush1.msra.mxu0 %v2380
        %3140 = vmatprep.subr.mxu0 0.0
        %3141 = vmatpush1.msra.mxu0 %v2381
        %3142 = vmatprep.subr.mxu0 0.0
        %3143 = vmatpush1.msra.mxu0 %v2382
        %3144 = vmatprep.subr.mxu0 0.0
        %3145 = vmatpush1.msra.mxu0 %v2383
        %3146 = vmatprep.mubr.f32.mxu0 %v2192
        %3147 = vmatmul.mubr.f32.gmra.mrb[0].mxu0 %v2160
        %v3148 = vpop.f32.mrb[0].mxu0
        %v3149 = vadd.f32 %v2924, %v3148
        %v3150 = vpop.f32.mrb[0].mxu0
        %3151 = vmatprep.mubr.f32.mxu0 %v2193
        %3152 = vmatmul.mubr.f32.gmra.mrb[0].mxu0 %v2161
        %v3153 = vpop.f32.mrb[0].mxu0
        %v3154 = vadd.f32 %v2929, %v3153
        %v3155 = vpop.f32.mrb[0].mxu0
        %3156 = vmatprep.mubr.f32.mxu0 %v2194
        %3157 = vmatmul.mubr.f32.gmra.mrb[0].mxu0 %v2162
        %v3158 = vpop.f32.mrb[0].mxu0
        %v3159 = vadd.f32 %v2934, %v3158
        %v3160 = vpop.f32.mrb[0].mxu0
        %3161 = vmatprep.mubr.f32.mxu0 %v2195
        %3162 = vmatmul.mubr.f32.gmra.mrb[0].mxu0 %v2163
        %v3163 = vpop.f32.mrb[0].mxu0
        %v3164 = vadd.f32 %v2939, %v3163
        %v3165 = vpop.f32.mrb[0].mxu0
        %3166 = vmatprep.mubr.f32.mxu0 %v2196
        %3167 = vmatmul.mubr.f32.gmra.mrb[0].mxu0 %v2164
        %v3168 = vpop.f32.mrb[0].mxu0
        %v3169 = vadd.f32 %v2944, %v3168
        %v3170 = vpop.f32.mrb[0].mxu0
        %3171 = vmatprep.mubr.f32.mxu0 %v2197
        %3172 = vmatmul.mubr.f32.gmra.mrb[0].mxu0 %v2165
        %v3173 = vpop.f32.mrb[0].mxu0
        %v3174 = vadd.f32 %v2949, %v3173
        %v3175 = vpop.f32.mrb[0].mxu0
        %3176 = vmatprep.mubr.f32.mxu0 %v2198
        %3177 = vmatmul.mubr.f32.gmra.mrb[0].mxu0 %v2166
        %v3178 = vpop.f32.mrb[0].mxu0
        %v3179 = vadd.f32 %v2954, %v3178
        %v3180 = vpop.f32.mrb[0].mxu0
        %3181 = vmatprep.mubr.f32.mxu0 %v2199
        %3182 = vmatmul.mubr.f32.gmra.mrb[0].mxu0 %v2167
        %v3183 = vpop.f32.mrb[0].mxu0
        %v3184 = vadd.f32 %v2959, %v3183
        %v3185 = vpop.f32.mrb[0].mxu0
        %3186 = vmatprep.mubr.f32.mxu0 %v2200
        %3187 = vmatmul.mubr.f32.gmra.mrb[0].mxu0 %v2168
        %v3188 = vpop.f32.mrb[0].mxu0
        %v3189 = vadd.f32 %v2964, %v3188
        %v3190 = vpop.f32.mrb[0].mxu0
        %3191 = vmatprep.mubr.f32.mxu0 %v2201
        %3192 = vmatmul.mubr.f32.gmra.mrb[0].mxu0 %v2169
        %v3193 = vpop.f32.mrb[0].mxu0
        %v3194 = vadd.f32 %v2969, %v3193
        %v3195 = vpop.f32.mrb[0].mxu0
        %3196 = vmatprep.mubr.f32.mxu0 %v2202
        %3197 = vmatmul.mubr.f32.gmra.mrb[0].mxu0 %v2170
        %v3198 = vpop.f32.mrb[0].mxu0
        %v3199 = vadd.f32 %v2974, %v3198
        %v3200 = vpop.f32.mrb[0].mxu0
        %3201 = vmatprep.mubr.f32.mxu0 %v2203
        %3202 = vmatmul.mubr.f32.gmra.mrb[0].mxu0 %v2171
        %v3203 = vpop.f32.mrb[0].mxu0
        %v3204 = vadd.f32 %v2979, %v3203
        %v3205 = vpop.f32.mrb[0].mxu0
        %3206 = vmatprep.mubr.f32.mxu0 %v2204
        %3207 = vmatmul.mubr.f32.gmra.mrb[0].mxu0 %v2172
        %v3208 = vpop.f32.mrb[0].mxu0
        %v3209 = vadd.f32 %v2984, %v3208
        %v3210 = vpop.f32.mrb[0].mxu0
        %3211 = vmatprep.mubr.f32.mxu0 %v2205
        %3212 = vmatmul.mubr.f32.gmra.mrb[0].mxu0 %v2173
        %v3213 = vpop.f32.mrb[0].mxu0
        %v3214 = vadd.f32 %v2989, %v3213
        %v3215 = vpop.f32.mrb[0].mxu0
        %3216 = vmatprep.mubr.f32.mxu0 %v2206
        %3217 = vmatmul.mubr.f32.gmra.mrb[0].mxu0 %v2174
        %v3218 = vpop.f32.mrb[0].mxu0
        %v3219 = vadd.f32 %v2994, %v3218
        %v3220 = vpop.f32.mrb[0].mxu0
        %3221 = vmatprep.mubr.f32.mxu0 %v2207
        %3222 = vmatmul.mubr.f32.gmra.mrb[0].mxu0 %v2175
        %v3223 = vpop.f32.mrb[0].mxu0
        %v3224 = vadd.f32 %v2999, %v3223
        %v3225 = vpop.f32.mrb[0].mxu0
        %3226 = vmatprep.mubr.f32.mxu0 %v2208
        %3227 = vmatmul.mubr.f32.gmra.mrb[0].mxu0 %v2176
        %v3228 = vpop.f32.mrb[0].mxu0
        %v3229 = vadd.f32 %v3004, %v3228
        %v3230 = vpop.f32.mrb[0].mxu0
        %3231 = vmatprep.mubr.f32.mxu0 %v2209
        %3232 = vmatmul.mubr.f32.gmra.mrb[0].mxu0 %v2177
        %v3233 = vpop.f32.mrb[0].mxu0
        %v3234 = vadd.f32 %v3009, %v3233
        %v3235 = vpop.f32.mrb[0].mxu0
        %3236 = vmatprep.mubr.f32.mxu0 %v2210
        %3237 = vmatmul.mubr.f32.gmra.mrb[0].mxu0 %v2178
        %v3238 = vpop.f32.mrb[0].mxu0
        %v3239 = vadd.f32 %v3014, %v3238
        %v3240 = vpop.f32.mrb[0].mxu0
        %3241 = vmatprep.mubr.f32.mxu0 %v2211
        %3242 = vmatmul.mubr.f32.gmra.mrb[0].mxu0 %v2179
        %v3243 = vpop.f32.mrb[0].mxu0
        %v3244 = vadd.f32 %v3019, %v3243
        %v3245 = vpop.f32.mrb[0].mxu0
        %3246 = vmatprep.mubr.f32.mxu0 %v2212
        %3247 = vmatmul.mubr.f32.gmra.mrb[0].mxu0 %v2180
        %v3248 = vpop.f32.mrb[0].mxu0
        %v3249 = vadd.f32 %v3024, %v3248
        %v3250 = vpop.f32.mrb[0].mxu0
        %3251 = vmatprep.mubr.f32.mxu0 %v2213
        %3252 = vmatmul.mubr.f32.gmra.mrb[0].mxu0 %v2181
        %v3253 = vpop.f32.mrb[0].mxu0
        %v3254 = vadd.f32 %v3029, %v3253
        %v3255 = vpop.f32.mrb[0].mxu0
        %3256 = vmatprep.mubr.f32.mxu0 %v2214
        %3257 = vmatmul.mubr.f32.gmra.mrb[0].mxu0 %v2182
        %v3258 = vpop.f32.mrb[0].mxu0
        %v3259 = vadd.f32 %v3034, %v3258
        %v3260 = vpop.f32.mrb[0].mxu0
        %3261 = vmatprep.mubr.f32.mxu0 %v2215
        %3262 = vmatmul.mubr.f32.gmra.mrb[0].mxu0 %v2183
        %v3263 = vpop.f32.mrb[0].mxu0
        %v3264 = vadd.f32 %v3039, %v3263
        %v3265 = vpop.f32.mrb[0].mxu0
        %3266 = vmatprep.mubr.f32.mxu0 %v2216
        %3267 = vmatmul.mubr.f32.gmra.mrb[0].mxu0 %v2184
        %v3268 = vpop.f32.mrb[0].mxu0
        %v3269 = vadd.f32 %v3044, %v3268
        %v3270 = vpop.f32.mrb[0].mxu0
        %3271 = vmatprep.mubr.f32.mxu0 %v2217
        %3272 = vmatmul.mubr.f32.gmra.mrb[0].mxu0 %v2185
        %v3273 = vpop.f32.mrb[0].mxu0
        %v3274 = vadd.f32 %v3049, %v3273
        %v3275 = vpop.f32.mrb[0].mxu0
        %3276 = vmatprep.mubr.f32.mxu0 %v2218
        %3277 = vmatmul.mubr.f32.gmra.mrb[0].mxu0 %v2186
        %v3278 = vpop.f32.mrb[0].mxu0
        %v3279 = vadd.f32 %v3054, %v3278
        %v3280 = vpop.f32.mrb[0].mxu0
        %3281 = vmatprep.mubr.f32.mxu0 %v2219
        %3282 = vmatmul.mubr.f32.gmra.mrb[0].mxu0 %v2187
        %v3283 = vpop.f32.mrb[0].mxu0
        %v3284 = vadd.f32 %v3059, %v3283
        %v3285 = vpop.f32.mrb[0].mxu0
        %3286 = vmatprep.mubr.f32.mxu0 %v2220
        %3287 = vmatmul.mubr.f32.gmra.mrb[0].mxu0 %v2188
        %v3288 = vpop.f32.mrb[0].mxu0
        %v3289 = vadd.f32 %v3064, %v3288
        %v3290 = vpop.f32.mrb[0].mxu0
        %3291 = vmatprep.mubr.f32.mxu0 %v2221
        %3292 = vmatmul.mubr.f32.gmra.mrb[0].mxu0 %v2189
        %v3293 = vpop.f32.mrb[0].mxu0
        %v3294 = vadd.f32 %v3069, %v3293
        %v3295 = vpop.f32.mrb[0].mxu0
        %3296 = vmatprep.mubr.f32.mxu0 %v2222
        %3297 = vmatmul.mubr.f32.gmra.mrb[0].mxu0 %v2190
        %v3298 = vpop.f32.mrb[0].mxu0
        %v3299 = vadd.f32 %v3074, %v3298
        %v3300 = vpop.f32.mrb[0].mxu0
        %3301 = vmatprep.mubr.f32.mxu0 %v2223
        %3302 = vmatmul.mubr.f32.gmra.mrb[0].mxu0 %v2191
        %v3303 = vpop.f32.mrb[0].mxu0
        %v3304 = vadd.f32 %v3079, %v3303
        %v3305 = vpop.f32.mrb[0].mxu0
        %3306 = vdwg.mxu0
        %3307 = vmatprep.subr.mxu0 0.0
        %3308 = vmatpush1.msra.mxu0 %v2384
        %3309 = vmatprep.subr.mxu0 0.0
        %3310 = vmatpush1.msra.mxu0 %v2385
        %3311 = vmatprep.subr.mxu0 0.0
        %3312 = vmatpush1.msra.mxu0 %v2386
        %3313 = vmatprep.subr.mxu0 0.0
        %3314 = vmatpush1.msra.mxu0 %v2387
        %3315 = vmatprep.subr.mxu0 0.0
        %3316 = vmatpush1.msra.mxu0 %v2388
        %3317 = vmatprep.subr.mxu0 0.0
        %3318 = vmatpush1.msra.mxu0 %v2389
        %3319 = vmatprep.subr.mxu0 0.0
        %3320 = vmatpush1.msra.mxu0 %v2390
        %3321 = vmatprep.subr.mxu0 0.0
        %3322 = vmatpush1.msra.mxu0 %v2391
        %3323 = vmatprep.subr.mxu0 0.0
        %3324 = vmatpush1.msra.mxu0 %v2392
        %3325 = vmatprep.subr.mxu0 0.0
        %3326 = vmatpush1.msra.mxu0 %v2393
        %3327 = vmatprep.subr.mxu0 0.0
        %3328 = vmatpush1.msra.mxu0 %v2394
        %3329 = vmatprep.subr.mxu0 0.0
        %3330 = vmatpush1.msra.mxu0 %v2395
        %3331 = vmatprep.subr.mxu0 0.0
        %3332 = vmatpush1.msra.mxu0 %v2396
        %3333 = vmatprep.subr.mxu0 0.0
        %3334 = vmatpush1.msra.mxu0 %v2397
        %3335 = vmatprep.subr.mxu0 0.0
        %3336 = vmatpush1.msra.mxu0 %v2398
        %3337 = vmatprep.subr.mxu0 0.0
        %3338 = vmatpush1.msra.mxu0 %v2399
        %3339 = vmatprep.subr.mxu0 0.0
        %3340 = vmatpush1.msra.mxu0 0.0
        %3341 = vmatprep.subr.mxu0 0.0
        %3342 = vmatpush1.msra.mxu0 0.0
        %3343 = vmatprep.subr.mxu0 0.0
        %3344 = vmatpush1.msra.mxu0 0.0
        %3345 = vmatprep.subr.mxu0 0.0
        %3346 = vmatpush1.msra.mxu0 0.0
        %3347 = vmatprep.subr.mxu0 0.0
        %3348 = vmatpush1.msra.mxu0 0.0
        %3349 = vmatprep.subr.mxu0 0.0
        %3350 = vmatpush1.msra.mxu0 0.0
        %3351 = vmatprep.subr.mxu0 0.0
        %3352 = vmatpush1.msra.mxu0 0.0
        %3353 = vmatprep.subr.mxu0 0.0
        %3354 = vmatpush1.msra.mxu0 0.0
        %3355 = vmatprep.subr.mxu0 0.0
        %3356 = vmatpush1.msra.mxu0 0.0
        %3357 = vmatprep.subr.mxu0 0.0
        %3358 = vmatpush1.msra.mxu0 0.0
        %3359 = vmatprep.subr.mxu0 0.0
        %3360 = vmatpush1.msra.mxu0 0.0
        %3361 = vmatprep.subr.mxu0 0.0
        %3362 = vmatpush1.msra.mxu0 0.0
        %3363 = vmatprep.subr.mxu0 0.0
        %3364 = vmatpush1.msra.mxu0 0.0
        %3365 = vmatprep.subr.mxu0 0.0
        %3366 = vmatpush1.msra.mxu0 0.0
        %3367 = vmatprep.subr.mxu0 0.0
        %3368 = vmatpush1.msra.mxu0 0.0
        %3369 = vmatprep.subr.mxu0 0.0
        %3370 = vmatpush1.msra.mxu0 0.0
        %3371 = vmatprep.mubr.f32.mxu0 0.0
        %3372 = vmatmul.mubr.f32.gmra.mrb[0].mxu0 %v2224
        %v3373 = vpop.f32.mrb[0].mxu0
        %v3374 = vadd.f32 %v3149, %v3373
        %v3375 = vpop.f32.mrb[0].mxu0
        %3376 = vmatprep.mubr.f32.mxu0 0.0
        %3377 = vmatmul.mubr.f32.gmra.mrb[0].mxu0 %v2225
        %v3378 = vpop.f32.mrb[0].mxu0
        %v3379 = vadd.f32 %v3154, %v3378
        %v3380 = vpop.f32.mrb[0].mxu0
        %3381 = vmatprep.mubr.f32.mxu0 0.0
        %3382 = vmatmul.mubr.f32.gmra.mrb[0].mxu0 %v2226
        %v3383 = vpop.f32.mrb[0].mxu0
        %v3384 = vadd.f32 %v3159, %v3383
        %v3385 = vpop.f32.mrb[0].mxu0
        %3386 = vmatprep.mubr.f32.mxu0 0.0
        %3387 = vmatmul.mubr.f32.gmra.mrb[0].mxu0 %v2227
        %v3388 = vpop.f32.mrb[0].mxu0
        %v3389 = vadd.f32 %v3164, %v3388
        %v3390 = vpop.f32.mrb[0].mxu0
        %3391 = vmatprep.mubr.f32.mxu0 0.0
        %3392 = vmatmul.mubr.f32.gmra.mrb[0].mxu0 %v2228
        %v3393 = vpop.f32.mrb[0].mxu0
        %v3394 = vadd.f32 %v3169, %v3393
        %v3395 = vpop.f32.mrb[0].mxu0
        %3396 = vmatprep.mubr.f32.mxu0 0.0
        %3397 = vmatmul.mubr.f32.gmra.mrb[0].mxu0 %v2229
        %v3398 = vpop.f32.mrb[0].mxu0
        %v3399 = vadd.f32 %v3174, %v3398
        %v3400 = vpop.f32.mrb[0].mxu0
        %3401 = vmatprep.mubr.f32.mxu0 0.0
        %3402 = vmatmul.mubr.f32.gmra.mrb[0].mxu0 %v2230
        %v3403 = vpop.f32.mrb[0].mxu0
        %v3404 = vadd.f32 %v3179, %v3403
        %v3405 = vpop.f32.mrb[0].mxu0
        %3406 = vmatprep.mubr.f32.mxu0 0.0
        %3407 = vmatmul.mubr.f32.gmra.mrb[0].mxu0 %v2231
        %v3408 = vpop.f32.mrb[0].mxu0
        %v3409 = vadd.f32 %v3184, %v3408
        %v3410 = vpop.f32.mrb[0].mxu0
        %3411 = vmatprep.mubr.f32.mxu0 0.0
        %3412 = vmatmul.mubr.f32.gmra.mrb[0].mxu0 %v2232
        %v3413 = vpop.f32.mrb[0].mxu0
        %v3414 = vadd.f32 %v3189, %v3413
        %v3415 = vpop.f32.mrb[0].mxu0
        %3416 = vmatprep.mubr.f32.mxu0 0.0
        %3417 = vmatmul.mubr.f32.gmra.mrb[0].mxu0 %v2233
        %v3418 = vpop.f32.mrb[0].mxu0
        %v3419 = vadd.f32 %v3194, %v3418
        %v3420 = vpop.f32.mrb[0].mxu0
        %3421 = vmatprep.mubr.f32.mxu0 0.0
        %3422 = vmatmul.mubr.f32.gmra.mrb[0].mxu0 %v2234
        %v3423 = vpop.f32.mrb[0].mxu0
        %v3424 = vadd.f32 %v3199, %v3423
        %v3425 = vpop.f32.mrb[0].mxu0
        %3426 = vmatprep.mubr.f32.mxu0 0.0
        %3427 = vmatmul.mubr.f32.gmra.mrb[0].mxu0 %v2235
        %v3428 = vpop.f32.mrb[0].mxu0
        %v3429 = vadd.f32 %v3204, %v3428
        %v3430 = vpop.f32.mrb[0].mxu0
        %3431 = vmatprep.mubr.f32.mxu0 0.0
        %3432 = vmatmul.mubr.f32.gmra.mrb[0].mxu0 %v2236
        %v3433 = vpop.f32.mrb[0].mxu0
        %v3434 = vadd.f32 %v3209, %v3433
        %v3435 = vpop.f32.mrb[0].mxu0
        %3436 = vmatprep.mubr.f32.mxu0 0.0
        %3437 = vmatmul.mubr.f32.gmra.mrb[0].mxu0 %v2237
        %v3438 = vpop.f32.mrb[0].mxu0
        %v3439 = vadd.f32 %v3214, %v3438
        %v3440 = vpop.f32.mrb[0].mxu0
        %3441 = vmatprep.mubr.f32.mxu0 0.0
        %3442 = vmatmul.mubr.f32.gmra.mrb[0].mxu0 %v2238
        %v3443 = vpop.f32.mrb[0].mxu0
        %v3444 = vadd.f32 %v3219, %v3443
        %v3445 = vpop.f32.mrb[0].mxu0
        %3446 = vmatprep.mubr.f32.mxu0 0.0
        %3447 = vmatmul.mubr.f32.gmra.mrb[0].mxu0 %v2239
        %v3448 = vpop.f32.mrb[0].mxu0
        %v3449 = vadd.f32 %v3224, %v3448
        %v3450 = vpop.f32.mrb[0].mxu0
        %3451 = vmatprep.mubr.f32.mxu0 0.0
        %3452 = vmatmul.mubr.f32.gmra.mrb[0].mxu0 %v2240
        %v3453 = vpop.f32.mrb[0].mxu0
        %v3454 = vadd.f32 %v3229, %v3453
        %v3455 = vpop.f32.mrb[0].mxu0
        %3456 = vmatprep.mubr.f32.mxu0 0.0
        %3457 = vmatmul.mubr.f32.gmra.mrb[0].mxu0 %v2241
        %v3458 = vpop.f32.mrb[0].mxu0
        %v3459 = vadd.f32 %v3234, %v3458
        %v3460 = vpop.f32.mrb[0].mxu0
        %3461 = vmatprep.mubr.f32.mxu0 0.0
        %3462 = vmatmul.mubr.f32.gmra.mrb[0].mxu0 %v2242
        %v3463 = vpop.f32.mrb[0].mxu0
        %v3464 = vadd.f32 %v3239, %v3463
        %v3465 = vpop.f32.mrb[0].mxu0
        %3466 = vmatprep.mubr.f32.mxu0 0.0
        %3467 = vmatmul.mubr.f32.gmra.mrb[0].mxu0 %v2243
        %v3468 = vpop.f32.mrb[0].mxu0
        %v3469 = vadd.f32 %v3244, %v3468
        %v3470 = vpop.f32.mrb[0].mxu0
        %3471 = vmatprep.mubr.f32.mxu0 0.0
        %3472 = vmatmul.mubr.f32.gmra.mrb[0].mxu0 %v2244
        %v3473 = vpop.f32.mrb[0].mxu0
        %v3474 = vadd.f32 %v3249, %v3473
        %v3475 = vpop.f32.mrb[0].mxu0
        %3476 = vmatprep.mubr.f32.mxu0 0.0
        %3477 = vmatmul.mubr.f32.gmra.mrb[0].mxu0 %v2245
        %v3478 = vpop.f32.mrb[0].mxu0
        %v3479 = vadd.f32 %v3254, %v3478
        %v3480 = vpop.f32.mrb[0].mxu0
        %3481 = vmatprep.mubr.f32.mxu0 0.0
        %3482 = vmatmul.mubr.f32.gmra.mrb[0].mxu0 %v2246
        %v3483 = vpop.f32.mrb[0].mxu0
        %v3484 = vadd.f32 %v3259, %v3483
        %v3485 = vpop.f32.mrb[0].mxu0
        %3486 = vmatprep.mubr.f32.mxu0 0.0
        %3487 = vmatmul.mubr.f32.gmra.mrb[0].mxu0 %v2247
        %v3488 = vpop.f32.mrb[0].mxu0
        %v3489 = vadd.f32 %v3264, %v3488
        %v3490 = vpop.f32.mrb[0].mxu0
        %3491 = vmatprep.mubr.f32.mxu0 0.0
        %3492 = vmatmul.mubr.f32.gmra.mrb[0].mxu0 %v2248
        %v3493 = vpop.f32.mrb[0].mxu0
        %v3494 = vadd.f32 %v3269, %v3493
        %v3495 = vpop.f32.mrb[0].mxu0
        %3496 = vmatprep.mubr.f32.mxu0 0.0
        %3497 = vmatmul.mubr.f32.gmra.mrb[0].mxu0 %v2249
        %v3498 = vpop.f32.mrb[0].mxu0
        %v3499 = vadd.f32 %v3274, %v3498
        %v3500 = vpop.f32.mrb[0].mxu0
        %3501 = vmatprep.mubr.f32.mxu0 0.0
        %3502 = vmatmul.mubr.f32.gmra.mrb[0].mxu0 %v2250
        %v3503 = vpop.f32.mrb[0].mxu0
        %v3504 = vadd.f32 %v3279, %v3503
        %v3505 = vpop.f32.mrb[0].mxu0
        %3506 = vmatprep.mubr.f32.mxu0 0.0
        %3507 = vmatmul.mubr.f32.gmra.mrb[0].mxu0 %v2251
        %v3508 = vpop.f32.mrb[0].mxu0
        %v3509 = vadd.f32 %v3284, %v3508
        %v3510 = vpop.f32.mrb[0].mxu0
        %3511 = vmatprep.mubr.f32.mxu0 0.0
        %3512 = vmatmul.mubr.f32.gmra.mrb[0].mxu0 %v2252
        %v3513 = vpop.f32.mrb[0].mxu0
        %v3514 = vadd.f32 %v3289, %v3513
        %v3515 = vpop.f32.mrb[0].mxu0
        %3516 = vmatprep.mubr.f32.mxu0 0.0
        %3517 = vmatmul.mubr.f32.gmra.mrb[0].mxu0 %v2253
        %v3518 = vpop.f32.mrb[0].mxu0
        %v3519 = vadd.f32 %v3294, %v3518
        %v3520 = vpop.f32.mrb[0].mxu0
        %3521 = vmatprep.mubr.f32.mxu0 0.0
        %3522 = vmatmul.mubr.f32.gmra.mrb[0].mxu0 %v2254
        %v3523 = vpop.f32.mrb[0].mxu0
        %v3524 = vadd.f32 %v3299, %v3523
        %v3525 = vpop.f32.mrb[0].mxu0
        %3526 = vmatprep.mubr.f32.mxu0 0.0
        %3527 = vmatmul.mubr.f32.gmra.mrb[0].mxu0 %v2255
        %v3528 = vpop.f32.mrb[0].mxu0
        %v3529 = vadd.f32 %v3304, %v3528
        %v3530 = vpop.f32.mrb[0].mxu0
        %3531 = vdwg.mxu0
        %v3532 = vld [vmem:[%s393 + $0x1] sm:$0xff]
        %v3533 = vld [vmem:[%s393 + $0x9] sm:$0xff]
        %v3534 = vld [vmem:[%s393 + $0x19] sm:$0xff]
        %v3535 = vld [vmem:[%s393 + $0x21] sm:$0xff]
        %v3536 = vld [vmem:[%s393 + $0x31] sm:$0xff]
        %v3537 = vld [vmem:[%s393 + $0x39] sm:$0xff]
        %v3538 = vld [vmem:[%s393 + $0x49] sm:$0xff]
        %v3539 = vld [vmem:[%s393 + $0x51] sm:$0xff]
        %v3540 = vld [vmem:[%s393 + $0x61] sm:$0xff]
        %v3541 = vld [vmem:[%s393 + $0x69] sm:$0xff]
        %v3542 = vld [vmem:[%s393 + $0x79] sm:$0xff]
        %v3543 = vld [vmem:[%s393 + $0x81] sm:$0xff]
        %v3544 = vld [vmem:[%s393 + $0x91] sm:$0xff]
        %v3545 = vld [vmem:[%s393 + $0x99] sm:$0xff]
        %v3546 = vld [vmem:[%s393 + $0xa9] sm:$0xff]
        %v3547 = vld [vmem:[%s393 + $0xb1] sm:$0xff]
        %v3548 = vld [vmem:[%s393 + $0xc1] sm:$0xff]
        %v3549 = vld [vmem:[%s393 + $0xc9] sm:$0xff]
        %v3550 = vld [vmem:[%s393 + $0xd9] sm:$0xff]
        %v3551 = vld [vmem:[%s393 + $0xe1] sm:$0xff]
        %v3552 = vld [vmem:[%s393 + $0xf1] sm:$0xff]
        %v3553 = vld [vmem:[%s393 + $0xf9] sm:$0xff]
        %v3554 = vld [vmem:[%s393 + $0x109] sm:$0xff]
        %v3555 = vld [vmem:[%s393 + $0x111] sm:$0xff]
        %v3556 = vld [vmem:[%s393 + $0x121] sm:$0xff]
        %v3557 = vld [vmem:[%s393 + $0x129] sm:$0xff]
        %v3558 = vld [vmem:[%s393 + $0x139] sm:$0xff]
        %v3559 = vld [vmem:[%s393 + $0x141] sm:$0xff]
        %v3560 = vld [vmem:[%s393 + $0x151] sm:$0xff]
        %v3561 = vld [vmem:[%s393 + $0x159] sm:$0xff]
        %v3562 = vld [vmem:[%s393 + $0x169] sm:$0xff]
        %v3563 = vld [vmem:[%s393 + $0x171] sm:$0xff]
        %v3564 = vadd.f32 %v3532, %v3374
        %v3565 = vadd.f32 %v3533, %v3379
        %v3566 = vadd.f32 %v3534, %v3384
        %v3567 = vadd.f32 %v3535, %v3389
        %v3568 = vadd.f32 %v3536, %v3394
        %v3569 = vadd.f32 %v3537, %v3399
        %v3570 = vadd.f32 %v3538, %v3404
        %v3571 = vadd.f32 %v3539, %v3409
        %v3572 = vadd.f32 %v3540, %v3414
        %v3573 = vadd.f32 %v3541, %v3419
        %v3574 = vadd.f32 %v3542, %v3424
        %v3575 = vadd.f32 %v3543, %v3429
        %v3576 = vadd.f32 %v3544, %v3434
        %v3577 = vadd.f32 %v3545, %v3439
        %v3578 = vadd.f32 %v3546, %v3444
        %v3579 = vadd.f32 %v3547, %v3449
        %v3580 = vadd.f32 %v3548, %v3454
        %v3581 = vadd.f32 %v3549, %v3459
        %v3582 = vadd.f32 %v3550, %v3464
        %v3583 = vadd.f32 %v3551, %v3469
        %v3584 = vadd.f32 %v3552, %v3474
        %v3585 = vadd.f32 %v3553, %v3479
        %v3586 = vadd.f32 %v3554, %v3484
        %v3587 = vadd.f32 %v3555, %v3489
        %v3588 = vadd.f32 %v3556, %v3494
        %v3589 = vadd.f32 %v3557, %v3499
        %v3590 = vadd.f32 %v3558, %v3504
        %v3591 = vadd.f32 %v3559, %v3509
        %v3592 = vadd.f32 %v3560, %v3514
        %v3593 = vadd.f32 %v3561, %v3519
        %v3594 = vadd.f32 %v3562, %v3524
        %v3595 = vadd.f32 %v3563, %v3529
        %v3596 = vmax.f32 %v3564, 0.0
        %v3597 = vmax.f32 %v3565, 0.0
        %v3598 = vmax.f32 %v3566, 0.0
        %v3599 = vmax.f32 %v3567, 0.0
        %v3600 = vmax.f32 %v3568, 0.0
        %v3601 = vmax.f32 %v3569, 0.0
        %v3602 = vmax.f32 %v3570, 0.0
        %v3603 = vmax.f32 %v3571, 0.0
        %v3604 = vmax.f32 %v3572, 0.0
        %v3605 = vmax.f32 %v3573, 0.0
        %v3606 = vmax.f32 %v3574, 0.0
        %v3607 = vmax.f32 %v3575, 0.0
        %v3608 = vmax.f32 %v3576, 0.0
        %v3609 = vmax.f32 %v3577, 0.0
        %v3610 = vmax.f32 %v3578, 0.0
        %v3611 = vmax.f32 %v3579, 0.0
        %v3612 = vmax.f32 %v3580, 0.0
        %v3613 = vmax.f32 %v3581, 0.0
        %v3614 = vmax.f32 %v3582, 0.0
        %v3615 = vmax.f32 %v3583, 0.0
        %v3616 = vmax.f32 %v3584, 0.0
        %v3617 = vmax.f32 %v3585, 0.0
        %v3618 = vmax.f32 %v3586, 0.0
        %v3619 = vmax.f32 %v3587, 0.0
        %v3620 = vmax.f32 %v3588, 0.0
        %v3621 = vmax.f32 %v3589, 0.0
        %v3622 = vmax.f32 %v3590, 0.0
        %v3623 = vmax.f32 %v3591, 0.0
        %v3624 = vmax.f32 %v3592, 0.0
        %v3625 = vmax.f32 %v3593, 0.0
        %v3626 = vmax.f32 %v3594, 0.0
        %v3627 = vmax.f32 %v3595, 0.0
        %3628 = vst [vmem:[%s296] sm:$0xff] %v3596
        %3629 = vst [vmem:[%s296 + $0x8] sm:$0xff] %v3597
        %3630 = vst [vmem:[%s296 + $0x10] sm:$0xff] %v3598
        %3631 = vst [vmem:[%s296 + $0x18] sm:$0xff] %v3599
        %3632 = vst [vmem:[%s296 + $0x20] sm:$0xff] %v3600
        %3633 = vst [vmem:[%s296 + $0x28] sm:$0xff] %v3601
        %3634 = vst [vmem:[%s296 + $0x30] sm:$0xff] %v3602
        %3635 = vst [vmem:[%s296 + $0x38] sm:$0xff] %v3603
        %3636 = vst [vmem:[%s296 + $0x40] sm:$0xff] %v3604
        %3637 = vst [vmem:[%s296 + $0x48] sm:$0xff] %v3605
        %3638 = vst [vmem:[%s296 + $0x50] sm:$0xff] %v3606
        %3639 = vst [vmem:[%s296 + $0x58] sm:$0xff] %v3607
        %3640 = vst [vmem:[%s296 + $0x60] sm:$0xff] %v3608
        %3641 = vst [vmem:[%s296 + $0x68] sm:$0xff] %v3609
        %3642 = vst [vmem:[%s296 + $0x70] sm:$0xff] %v3610
        %3643 = vst [vmem:[%s296 + $0x78] sm:$0xff] %v3611
        %3644 = vst [vmem:[%s296 + $0x80] sm:$0xff] %v3612
        %3645 = vst [vmem:[%s296 + $0x88] sm:$0xff] %v3613
        %3646 = vst [vmem:[%s296 + $0x90] sm:$0xff] %v3614
        %3647 = vst [vmem:[%s296 + $0x98] sm:$0xff] %v3615
        %3648 = vst [vmem:[%s296 + $0xa0] sm:$0xff] %v3616
        %3649 = vst [vmem:[%s296 + $0xa8] sm:$0xff] %v3617
        %3650 = vst [vmem:[%s296 + $0xb0] sm:$0xff] %v3618
        %3651 = vst [vmem:[%s296 + $0xb8] sm:$0xff] %v3619
        %3652 = vst [vmem:[%s296 + $0xc0] sm:$0xff] %v3620
        %3653 = vst [vmem:[%s296 + $0xc8] sm:$0xff] %v3621
        %3654 = vst [vmem:[%s296 + $0xd0] sm:$0xff] %v3622
        %3655 = vst [vmem:[%s296 + $0xd8] sm:$0xff] %v3623
        %3656 = vst [vmem:[%s296 + $0xe0] sm:$0xff] %v3624
        %3657 = vst [vmem:[%s296 + $0xe8] sm:$0xff] %v3625
        %3658 = vst [vmem:[%s296 + $0xf0] sm:$0xff] %v3626
        %3659 = vst [vmem:[%s296 + $0xf8] sm:$0xff] %v3627
        %s3660 = sand.u32 %s142, 1
        %s3661 = scalar_lea.sflag [#allocation5], %s3660
        %s3662 = sand.u32 %s142, 1
        %s3663 = smul.addr %s3662, 256
        %s3664 = scalar_lea.vmem [#allocation12], %s3663
        // Predicated region
        $region61: #{tpu_custom_call.1} parent=39 // pred_check
          %p3665 = pneg %p152
        $region62: #{tpu_custom_call.1} parent=39 // pred_check_branch
          %3667 = sbr.rel (%p3665) target = $region64
        $region63: #{tpu_custom_call.1} parent=39 // pred_region
          %s3669 = ssub.s32 4096, 4096
          %3670 = vsyncadd %s3661, %s3669
          %s3671 = smul.addr %s24, 32
          %s3672 = smul.addr %s3671, 128
          %s3673 = scalar_lea.hbm %s5, %s3672
          %s3674 = sshll.u32 %s3664, 4
          %s3675 = int_to_ptr.vmem [resolvable:$true] %s3674
          %3680 = dma.vmem_to_hbm [thread:$0]  %s3675, 4096, %s3673, %s3661, 128, 128, 8
        $region64: #{tpu_custom_call.1} parent=39 // pred_fallthru
          _
      $region40: #{tpu_custom_call.1} parent=5 // pred_fallthru
        _
      %p3681 = scmp.le.s32.totalorder 2, %s19
      // Predicated region
      $region65: #{tpu_custom_call.1} parent=5 // pred_check
        %p3682 = pneg %p3681
      $region66: #{tpu_custom_call.1} parent=5 // pred_check_branch
        %3684 = sbr.rel (%p3682) target = $region68
      $region67: #{tpu_custom_call.1} parent=5 // pred_region
        %s3685 = ssub.s32 %s19, 2
        // Predicated region
        $region69: #{tpu_custom_call.1} parent=67 // pred_check
          %p3686 = pneg %p158
        $region70: #{tpu_custom_call.1} parent=67 // pred_check_branch
          %3688 = sbr.rel (%p3686) target = $region72
        $region71: #{tpu_custom_call.1} parent=67 // pred_region
          %s3689 = sand.u32 %s143, 1
          %s3690 = scalar_lea.sflag [#allocation5], %s3689
          %s3691 = sand.u32 %s143, 1
          %s3692 = smul.addr %s3691, 256
          %s3693 = scalar_lea.vmem [#allocation12], %s3692
          %3694 = dma.done %s3690, 4096
        $region72: #{tpu_custom_call.1} parent=67 // pred_fallthru
          _
      $region68: #{tpu_custom_call.1} parent=5 // pred_fallthru
        _
    $region6: #{tpu_custom_call.1} parent=1 // loop_footer
      %s23 = sadd.s32 1, %s19
    $region7: #{tpu_custom_call.1} parent=1 // loop_footer_branch
      %18 = sbr.rel target = $region3
    $region8: #{tpu_custom_call.1} parent=1 // loop_exit
      _
    %3695 = vsyncpa [#allocation4], 1
    %s3696 = scalar_lea.sflag [#allocation4], 1
    %3697 = vsyncpa %s3696, 1
    %3698 = vsyncpa [#allocation7], 1
    %3699 = vsyncpa [#allocation10], 1
    %3700 = vsyncpa [#allocation5], 1
    %s3701 = scalar_lea.sflag [#allocation5], 1
    %3702 = vsyncpa %s3701, 1

</llo_original>
